<compile_context>
chip_gen: v7x
topology: tpu7x:2x2x1
jax: 0.10.0
libtpu: 0.0.40
codegen_flags: <defaults>
</compile_context>

<pallas_src>
import functools
import math

import jax
import jax.numpy as jnp
from jax.experimental import pallas as pl
from jax.experimental.pallas import tpu as pltpu


# ------------------------------- helpers ----------------------------------- #

def _round_up(v, m):
    return ((v + m - 1) // m) * m


def _choose_tile(dim, target, align):
    """Return (tile, padded_dim): one full aligned block if it fits `target`,
    otherwise tile with `target` (target must be a multiple of align)."""
    padded = _round_up(dim, align)
    if padded <= target:
        return padded, padded
    return target, _round_up(dim, target)


def _pad2(a, rows, cols):
    r, c = a.shape
    if r == rows and c == cols:
        return a
    return jnp.pad(a, ((0, rows - r), (0, cols - c)))


def _gelu(y):
    # exact (erf) GELU in f32, matching torch.nn.GELU default
    return 0.5 * y * (1.0 + jax.lax.erf(y * jnp.float32(1.0 / math.sqrt(2.0))))


# ----------------------------- Pallas kernels ------------------------------ #

def _linear_kernel(x_ref, w_ref, b_ref, *rest, activation, has_residual):
    """Tiled matmul, f32 accumulator initialized with the bias, optional GELU
    and optional fused residual add in the finalize epilogue."""
    if has_residual:
        r_ref, o_ref, acc_ref = rest
    else:
        o_ref, acc_ref = rest

    @pl.when(pl.program_id(2) == 0)
    def _():
        acc_ref[...] = jnp.broadcast_to(
            b_ref[...].astype(jnp.float32), acc_ref.shape)

    acc_ref[...] += jnp.dot(x_ref[...], w_ref[...],
                            preferred_element_type=jnp.float32)

    @pl.when(pl.program_id(2) == pl.num_programs(2) - 1)
    def _():
        y = acc_ref[...]
        if activation == "gelu":
            y = _gelu(y)
        if has_residual:
            y = y + r_ref[...].astype(jnp.float32)
        o_ref[...] = y.astype(o_ref.dtype)


def pallas_linear(x, w, b, activation=None, residual=None, out_dtype=None, *,
                  tm=512, tn=512, tk=512):
    M, K = x.shape
    _, N = w.shape
    tm, Mp = _choose_tile(M, tm, 16)     # 16-row alignment for bf16 sublanes
    tn, Np = _choose_tile(N, tn, 128)
    tk, Kp = _choose_tile(K, tk, 128)

    xp = _pad2(x, Mp, Kp)
    wp = _pad2(w, Kp, Np)
    bp = _pad2(b.reshape(1, N).astype(jnp.float32), 1, Np)

    in_specs = [
        pl.BlockSpec((tm, tk), lambda i, j, k: (i, k)),
        pl.BlockSpec((tk, tn), lambda i, j, k: (k, j)),
        pl.BlockSpec((1, tn), lambda i, j, k: (0, j)),
    ]
    operands = [xp, wp, bp]
    has_residual = residual is not None
    if has_residual:
        in_specs.append(pl.BlockSpec((tm, tn), lambda i, j, k: (i, j)))
        operands.append(_pad2(residual, Mp, Np))

    out_dtype = x.dtype if out_dtype is None else out_dtype
    out = pl.pallas_call(
        functools.partial(_linear_kernel, activation=activation,
                          has_residual=has_residual),
        out_shape=jax.ShapeDtypeStruct((Mp, Np), out_dtype),
        grid=(Mp // tm, Np // tn, Kp // tk),
        in_specs=in_specs,
        out_specs=pl.BlockSpec((tm, tn), lambda i, j, k: (i, j)),
        scratch_shapes=[pltpu.VMEM((tm, tn), jnp.float32)],
        compiler_params=pltpu.CompilerParams(
            dimension_semantics=("parallel", "parallel", "arbitrary")),
    )(*operands)
    if Mp != M or Np != N:
        out = out[:M, :N]
    return out


def _ln_linear_kernel(x_ref, g_ref, bt_ref, w_ref, b_ref, o_ref, xn_ref, *,
                      activation, eps):
    """LayerNorm over the (full, unpadded) K axis fused with a matmul tile.
    The normalized activation is computed once (at j == 0, the innermost grid
    axis) into a VMEM scratch and reused for every N-tile of the same M-tile."""
    @pl.when(pl.program_id(1) == 0)
    def _():
        x = x_ref[...].astype(jnp.float32)
        mean = jnp.mean(x, axis=-1, keepdims=True)
        var = jnp.mean(jnp.square(x - mean), axis=-1, keepdims=True)
        xn = (x - mean) * jax.lax.rsqrt(var + eps)
        xn = xn * g_ref[...].astype(jnp.float32) + bt_ref[...].astype(jnp.float32)
        xn_ref[...] = xn.astype(xn_ref.dtype)

    y = jnp.dot(xn_ref[...], w_ref[...], preferred_element_type=jnp.float32)
    y = y + b_ref[...].astype(jnp.float32)
    if activation == "gelu":
        y = _gelu(y)
    o_ref[...] = y.astype(o_ref.dtype)


def pallas_ln_linear(x, gamma, beta, w, b, activation=None, out_dtype=None, *,
                     tm=512, tn=512, eps=1e-5):
    """Fused LayerNorm(x) @ w + b.  K (= model dim) is kept as a single,
    unpadded block so the LN statistics are exact; tiles over M and N."""
    M, K = x.shape
    _, N = w.shape
    tm, Mp = _choose_tile(M, tm, 16)
    tn, Np = _choose_tile(N, tn, 128)

    xp = _pad2(x, Mp, K)
    wp = _pad2(w, K, Np)
    bp = _pad2(b.reshape(1, N).astype(jnp.float32), 1, Np)
    g2 = gamma.reshape(1, K).astype(jnp.float32)
    bt2 = beta.reshape(1, K).astype(jnp.float32)

    out_dtype = x.dtype if out_dtype is None else out_dtype
    out = pl.pallas_call(
        functools.partial(_ln_linear_kernel, activation=activation, eps=eps),
        out_shape=jax.ShapeDtypeStruct((Mp, Np), out_dtype),
        grid=(Mp // tm, Np // tn),
        in_specs=[
            pl.BlockSpec((tm, K), lambda i, j: (i, 0)),   # j-invariant: resident
            pl.BlockSpec((1, K), lambda i, j: (0, 0)),
            pl.BlockSpec((1, K), lambda i, j: (0, 0)),
            pl.BlockSpec((K, tn), lambda i, j: (0, j)),
            pl.BlockSpec((1, tn), lambda i, j: (0, j)),
        ],
        out_specs=pl.BlockSpec((tm, tn), lambda i, j: (i, j)),
        scratch_shapes=[pltpu.VMEM((tm, K), x.dtype)],
        compiler_params=pltpu.CompilerParams(
            dimension_semantics=("parallel", "arbitrary")),
    )(xp, g2, bt2, wp, bp)
    if Mp != M or Np != N:
        out = out[:M, :N]
    return out


def _attention_kernel(qkv_ref, o_ref, *, num_heads, head_dim, seq_len):
    """All heads of one batch element per grid step.  Reads packed [S_pad, 3D]
    QKV (scale already folded into Q), writes each head's context directly into
    its column slice of the [S_pad, D] output (no register-level concat)."""
    qkv = qkv_ref[0]                                        # [S_pad, 3*D]
    s_pad = qkv.shape[0]
    d_model = num_heads * head_dim
    key_idx = jax.lax.broadcasted_iota(jnp.int32, (s_pad, s_pad), 1)
    key_mask = key_idx < seq_len
    neg = jnp.float32(-1e30)

    for h in range(num_heads):                              # static unroll
        q = qkv[:, h * head_dim:(h + 1) * head_dim]
        k = qkv[:, d_model + h * head_dim:d_model + (h + 1) * head_dim]
        v = qkv[:, 2 * d_model + h * head_dim:2 * d_model + (h + 1) * head_dim]
        s = jax.lax.dot_general(q, k, (((1,), (1,)), ((), ())),
                                preferred_element_type=jnp.float32)
        s = jnp.where(key_mask, s, neg)                     # mask padded keys
        s = s - jnp.max(s, axis=-1, keepdims=True)
        p = jnp.exp(s)
        p = p * pl.reciprocal(jnp.sum(p, axis=-1, keepdims=True), approx=True)
        ctx = jnp.dot(p.astype(v.dtype), v, preferred_element_type=jnp.float32)
        o_ref[0, :, h * head_dim:(h + 1) * head_dim] = ctx.astype(o_ref.dtype)


def pallas_attention(qkv, *, num_heads, head_dim, seq_len):
    # TODO(synk): for large models (e.g. ViT-L/384, S~577) restructure to a
    # (batch, head, q-tile) grid with lane-padded per-head QKV blocks (flash
    # style) to bound the score matrix and improve v7x megacore utilization.
    B, s_pad, three_d = qkv.shape
    d_model = num_heads * head_dim
    return pl.pallas_call(
        functools.partial(_attention_kernel, num_heads=num_heads,
                          head_dim=head_dim, seq_len=seq_len),
        out_shape=jax.ShapeDtypeStruct((B, s_pad, d_model), qkv.dtype),
        grid=(B,),
        in_specs=[pl.BlockSpec((1, s_pad, three_d), lambda bi: (bi, 0, 0))],
        out_specs=pl.BlockSpec((1, s_pad, d_model), lambda bi: (bi, 0, 0)),
        compiler_params=pltpu.CompilerParams(dimension_semantics=("parallel",)),
    )(qkv)


# ------------------------------ Model (glue) ------------------------------- #

def init_params(key, *, in_channels, embedding_dim, patch_size, num_classes,
                mlp_size, num_heads, num_layers, img_size,
                param_dtype=jnp.bfloat16):
    D = embedding_dim
    P = patch_size
    n_patches = (img_size // P) * (img_size // P)
    S = n_patches + 1
    head_dim = D // num_heads
    scale = 1.0 / math.sqrt(head_dim)

    def nrm(k, shape, std=0.02):
        return (std * jax.random.normal(k, shape)).astype(param_dtype)

    keys = jax.random.split(key, 8 + num_layers)
    params = {
        "patch_w": nrm(keys[0], (in_channels * P * P, D)),
        "patch_b": jnp.zeros((D,), jnp.float32),
        "cls_token": nrm(keys[1], (D,)),
        "label_embed": nrm(keys[2], (num_classes, D)),
        "pos_embed": nrm(keys[3], (1, S, D)),
        "cls_ln_g": jnp.ones((D,), jnp.float32),
        "cls_ln_b": jnp.zeros((D,), jnp.float32),
        "head_w": nrm(keys[4], (D, num_classes)),
        "head_b": jnp.zeros((num_classes,), jnp.float32),
        "layers": [],
    }
    for l in range(num_layers):
        lk = jax.random.split(keys[8 + l], 4)
        qkv_w = 0.02 * jax.random.normal(lk[0], (D, 3 * D))
        # Fold the 1/sqrt(head_dim) attention scale into the Q projection
        # (bias Q-part is zero, so no bias change is needed).
        qkv_w = qkv_w.at[:, :D].multiply(scale)
        params["layers"].append({
            "ln1_g": jnp.ones((D,), jnp.float32),
            "ln1_b": jnp.zeros((D,), jnp.float32),
            "qkv_w": qkv_w.astype(param_dtype),
            "qkv_b": jnp.zeros((3 * D,), jnp.float32),
            "out_w": nrm(lk[1], (D, D)),
            "out_b": jnp.zeros((D,), jnp.float32),
            "ln2_g": jnp.ones((D,), jnp.float32),
            "ln2_b": jnp.zeros((D,), jnp.float32),
            "mlp_w1": nrm(lk[2], (D, mlp_size)),
            "mlp_b1": jnp.zeros((mlp_size,), jnp.float32),
            "mlp_w2": nrm(lk[3], (mlp_size, D)),
            "mlp_b2": jnp.zeros((D,), jnp.float32),
        })
    return params


def vit_forward(params, x, label, *, patch_size, num_heads):
    B, C, H, W = x.shape
    P = patch_size
    nH, nW = H // P, W // P
    n_patches = nH * nW
    D = params["patch_w"].shape[1]
    Dh = D // num_heads
    S = n_patches + 1
    S_pad = _round_up(S, 16)
    M = B * S_pad
    act_dtype = params["patch_w"].dtype

    # --- Embeddings: Conv2d(P, stride=P) as patch-flatten + Pallas matmul ---
    # TODO(synk): the patch gather/transpose is still an XLA relayout pass; it
    # could be folded into the patch-embed pallas_call with a (b, ph, pw) grid.
    xb = x.astype(act_dtype)                                 # relayout in bf16
    patches = xb.reshape(B, C, nH, P, nW, P).transpose(0, 2, 4, 1, 3, 5)
    patches = patches.reshape(B * n_patches, C * P * P)
    pe = pallas_linear(patches, params["patch_w"], params["patch_b"])
    pe = pe.reshape(B, n_patches, D)

    cls = params["cls_token"][None, :] + params["label_embed"][label]   # [B, D]
    tokens = jnp.concatenate([cls[:, None, :].astype(act_dtype), pe], axis=1)
    tokens = tokens + params["pos_embed"].astype(act_dtype)
    # Pad sequence to a sublane multiple.  Padded rows are inert: attention masks
    # padded keys; all other ops are row-wise; cls token (row 0) is unaffected.
    h = jnp.pad(tokens, ((0, 0), (0, S_pad - S), (0, 0)))
    # dropout == identity at inference

    # --- Encoder: pre-LN transformer blocks ---
    for layer in params["layers"]:
        h2 = h.reshape(M, D)
        # MHA: LN1 fused into the QKV projection; attention consumes the packed
        # [B, S_pad, 3D] buffer directly; residual fused into the out-projection.
        qkv = pallas_ln_linear(h2, layer["ln1_g"], layer["ln1_b"],
                               layer["qkv_w"], layer["qkv_b"])          # [M, 3D]
        ctx = pallas_attention(qkv.reshape(B, S_pad, 3 * D),
                               num_heads=num_heads, head_dim=Dh, seq_len=S)
        h2 = pallas_linear(ctx.reshape(M, D), layer["out_w"], layer["out_b"],
                           residual=h2)

        # MLP: LN2 + first matmul + GELU fused; residual fused into MLP2.
        m = pallas_ln_linear(h2, layer["ln2_g"], layer["ln2_b"],
                             layer["mlp_w1"], layer["mlp_b1"], activation="gelu")
        h2 = pallas_linear(m, layer["mlp_w2"], layer["mlp_b2"], residual=h2)
        h = h2.reshape(B, S_pad, D)

    # --- Classifier on the cls token: LayerNorm fused into the head matmul ---
    cls_out = h[:, 0]                                                   # [B, D]
    logits = pallas_ln_linear(cls_out, params["cls_ln_g"], params["cls_ln_b"],
                              params["head_w"], params["head_b"],
                              out_dtype=jnp.float32)
    return logits


# --------------------------------- Driver ----------------------------------- #

if __name__ == "__main__":
    # small, shape-consistent config
    in_channels = 4
    embedding_dim = 32
    patch_size = 4
    num_classes = 10
    mlp_size = 64
    p_dropout = 0.1        # identity at inference
    num_heads = 4
    num_layers = 2
    img_size = 16
    batch = 2

    key = jax.random.PRNGKey(0)
    k_param, k_x = jax.random.split(key)

    params = init_params(
        k_param,
        in_channels=in_channels, embedding_dim=embedding_dim,
        patch_size=patch_size, num_classes=num_classes,
        mlp_size=mlp_size, num_heads=num_heads,
        num_layers=num_layers, img_size=img_size,
    )

    x = jax.random.normal(k_x, (batch, in_channels, img_size, img_size), jnp.float32)
    label = jnp.array([1, 7], dtype=jnp.int32)

    fwd = jax.jit(functools.partial(vit_forward, patch_size=patch_size,
                                    num_heads=num_heads))
    logits = fwd(params, x, label)
    jax.block_until_ready(logits)
    assert logits.shape == (batch, num_classes)
    assert bool(jnp.all(jnp.isfinite(logits)))
    print("KERNEL_OK")
</pallas_src>

<mosaic_0001>
module attributes {stable_mosaic.version = 11 : i64} {
  func.func @_linear_kernel(%arg0: i32, %arg1: i32, %arg2: i32, %arg3: memref<32x128xbf16, #tpu.memory_space<vmem>>, %arg4: memref<128x128xbf16, #tpu.memory_space<vmem>>, %arg5: memref<1x128xf32, #tpu.memory_space<vmem>>, %arg6: memref<32x128xbf16, #tpu.memory_space<vmem>>, %arg7: memref<32x128xf32, #tpu.memory_space<vmem>>) attributes {dimension_semantics = [#tpu.dimension_semantics<parallel>, #tpu.dimension_semantics<parallel>, #tpu.dimension_semantics<arbitrary>], iteration_bounds = array<i64: 1, 1, 1>, scalar_prefetch = 0 : i64, scratch_operands = 1 : i64, tpu.core_type = #tpu.core_type<tc>, window_params = [{transform_indices = @transform_0, window_bounds = array<i64: 32, 128>}, {transform_indices = @transform_1, window_bounds = array<i64: 128, 128>}, {transform_indices = @transform_2, window_bounds = array<i64: 1, 128>}, {transform_indices = @transform_3, window_bounds = array<i64: 32, 128>}]} {
    %c0_i32 = arith.constant 0 : i32
    %0 = arith.cmpi eq, %arg2, %c0_i32 : i32
    %1 = arith.extui %0 : i1 to i32
    %c0_i32_0 = arith.constant 0 : i32
    %2 = arith.cmpi ne, %1, %c0_i32_0 : i32
    scf.if %2 {
      %c0_10 = arith.constant 0 : index
      %c0_11 = arith.constant 0 : index
      %12 = vector.load %arg5[%c0_10, %c0_11] : memref<1x128xf32, #tpu.memory_space<vmem>>, vector<1x128xf32>
      %13 = vector.shape_cast %12 : vector<1x128xf32> to vector<1x128xf32>
      %14 = vector.broadcast %13 : vector<1x128xf32> to vector<32x128xf32>
      %c0_12 = arith.constant 0 : index
      %c0_13 = arith.constant 0 : index
      %15 = vector.load %arg7[%c0_12, %c0_13] : memref<32x128xf32, #tpu.memory_space<vmem>>, vector<32x128xf32>
      tpu.vector_store %arg7[%c0_12, %c0_13], %14 {strides = array<i32>} : memref<32x128xf32, #tpu.memory_space<vmem>>, vector<32x128xf32>,
    } else {
    }
    %c0 = arith.constant 0 : index
    %c0_1 = arith.constant 0 : index
    %3 = vector.load %arg7[%c0, %c0_1] : memref<32x128xf32, #tpu.memory_space<vmem>>, vector<32x128xf32>
    %c0_2 = arith.constant 0 : index
    %c0_3 = arith.constant 0 : index
    %4 = vector.load %arg3[%c0_2, %c0_3] : memref<32x128xbf16, #tpu.memory_space<vmem>>, vector<32x128xbf16>
    %c0_4 = arith.constant 0 : index
    %c0_5 = arith.constant 0 : index
    %5 = vector.load %arg4[%c0_4, %c0_5] : memref<128x128xbf16, #tpu.memory_space<vmem>>, vector<128x128xbf16>
    %cst = arith.constant dense<0.000000e+00> : vector<32x128xf32>
    %6 = tpu.matmul %4, %5, %cst {dimension_numbers = #tpu.dot_dimension_numbers<[1], [0], [0], [1], [0, 0, 1, 1], [], []>} : vector<32x128xbf16>, vector<128x128xbf16>, vector<32x128xf32> -> vector<32x128xf32>
    %7 = arith.addf %3, %6 : vector<32x128xf32>
    %c0_6 = arith.constant 0 : index
    %c0_7 = arith.constant 0 : index
    %8 = vector.load %arg7[%c0_6, %c0_7] : memref<32x128xf32, #tpu.memory_space<vmem>>, vector<32x128xf32>
    tpu.vector_store %arg7[%c0_6, %c0_7], %7 {strides = array<i32>} : memref<32x128xf32, #tpu.memory_space<vmem>>, vector<32x128xf32>,
    %c0_i32_8 = arith.constant 0 : i32
    %9 = arith.cmpi eq, %arg2, %c0_i32_8 : i32
    %10 = arith.extui %9 : i1 to i32
    %c0_i32_9 = arith.constant 0 : i32
    %11 = arith.cmpi ne, %10, %c0_i32_9 : i32
    scf.if %11 {
      %c0_10 = arith.constant 0 : index
      %c0_11 = arith.constant 0 : index
      %12 = vector.load %arg7[%c0_10, %c0_11] : memref<32x128xf32, #tpu.memory_space<vmem>>, vector<32x128xf32>
      %13 = arith.truncf %12 : vector<32x128xf32> to vector<32x128xbf16>
      %c0_12 = arith.constant 0 : index
      %c0_13 = arith.constant 0 : index
      %14 = vector.load %arg6[%c0_12, %c0_13] : memref<32x128xbf16, #tpu.memory_space<vmem>>, vector<32x128xbf16>
      tpu.vector_store %arg6[%c0_12, %c0_13], %13 {strides = array<i32>} : memref<32x128xbf16, #tpu.memory_space<vmem>>, vector<32x128xbf16>,
    } else {
    }
    return
  }
  func.func @transform_0(%arg0: i32, %arg1: i32, %arg2: i32) -> (i32, i32) {
    %c0_i32 = arith.constant 0 : i32
    return %arg0, %arg2 : i32, i32
  }
  func.func @transform_1(%arg0: i32, %arg1: i32, %arg2: i32) -> (i32, i32) {
    %c0_i32 = arith.constant 0 : i32
    return %arg2, %arg1 : i32, i32
  }
  func.func @transform_2(%arg0: i32, %arg1: i32, %arg2: i32) -> (i32, i32) {
    %c0_i32 = arith.constant 0 : i32
    %c0_i32_0 = arith.constant 0 : i32
    return %c0_i32, %arg1 : i32, i32
  }
  func.func @transform_3(%arg0: i32, %arg1: i32, %arg2: i32) -> (i32, i32) {
    %c0_i32 = arith.constant 0 : i32
    return %arg0, %arg1 : i32, i32
  }
}

module attributes {stable_mosaic.version = 11 : i64} {
  func.func @_ln_linear_kernel(%arg0: i32, %arg1: i32, %arg2: memref<64x32xbf16, #tpu.memory_space<vmem>>, %arg3: memref<1x32xf32, #tpu.memory_space<vmem>>, %arg4: memref<1x32xf32, #tpu.memory_space<vmem>>, %arg5: memref<32x128xbf16, #tpu.memory_space<vmem>>, %arg6: memref<1x128xf32, #tpu.memory_space<vmem>>, %arg7: memref<64x128xbf16, #tpu.memory_space<vmem>>, %arg8: memref<64x32xbf16, #tpu.memory_space<vmem>>) attributes {dimension_semantics = [#tpu.dimension_semantics<parallel>, #tpu.dimension_semantics<arbitrary>], iteration_bounds = array<i64: 1, 1>, scalar_prefetch = 0 : i64, scratch_operands = 1 : i64, tpu.core_type = #tpu.core_type<tc>, window_params = [{transform_indices = @transform_0, window_bounds = array<i64: 64, 32>}, {pipeline_mode = #tpu.pipeline_mode<synchronous>, transform_indices = @transform_1, window_bounds = array<i64: 1, 32>}, {pipeline_mode = #tpu.pipeline_mode<synchronous>, transform_indices = @transform_2, window_bounds = array<i64: 1, 32>}, {transform_indices = @transform_3, window_bounds = array<i64: 32, 128>}, {transform_indices = @transform_4, window_bounds = array<i64: 1, 128>}, {transform_indices = @transform_5, window_bounds = array<i64: 64, 128>}]} {
    %c0_i32 = arith.constant 0 : i32
    %0 = arith.cmpi eq, %arg1, %c0_i32 : i32
    %1 = arith.extui %0 : i1 to i32
    %c0_i32_0 = arith.constant 0 : i32
    %2 = arith.cmpi ne, %1, %c0_i32_0 : i32
    scf.if %2 {
      %c0_8 = arith.constant 0 : index
      %c0_9 = arith.constant 0 : index
      %11 = vector.load %arg2[%c0_8, %c0_9] : memref<64x32xbf16, #tpu.memory_space<vmem>>, vector<64x32xbf16>
      %12 = arith.extf %11 : vector<64x32xbf16> to vector<64x32xf32>
      %cst_10 = arith.constant dense<0.000000e+00> : vector<64xf32>
      %13 = vector.multi_reduction <add>, %12, %cst_10 [1] : vector<64x32xf32> to vector<64xf32>
      %14 = vector.shape_cast %13 : vector<64xf32> to vector<64x1xf32>
      %cst_11 = arith.constant 3.200000e+01 : f32
      %15 = vector.broadcast %cst_11 : f32 to vector<64x1xf32>
      %16 = arith.divf %14, %15 : vector<64x1xf32>
      %17 = vector.broadcast %16 : vector<64x1xf32> to vector<64x32xf32>
      %18 = arith.subf %12, %17 : vector<64x32xf32>
      %19 = arith.mulf %18, %18 : vector<64x32xf32>
      %cst_12 = arith.constant dense<0.000000e+00> : vector<64xf32>
      %20 = vector.multi_reduction <add>, %19, %cst_12 [1] : vector<64x32xf32> to vector<64xf32>
      %21 = vector.shape_cast %20 : vector<64xf32> to vector<64x1xf32>
      %cst_13 = arith.constant 3.200000e+01 : f32
      %22 = vector.broadcast %cst_13 : f32 to vector<64x1xf32>
      %23 = arith.divf %21, %22 : vector<64x1xf32>
      %24 = vector.broadcast %16 : vector<64x1xf32> to vector<64x32xf32>
      %25 = arith.subf %12, %24 : vector<64x32xf32>
      %cst_14 = arith.constant 9.99999974E-6 : f32
      %26 = vector.broadcast %cst_14 : f32 to vector<64x1xf32>
      %27 = arith.addf %23, %26 : vector<64x1xf32>
      %28 = math.rsqrt %27 : vector<64x1xf32>
      %29 = vector.broadcast %28 : vector<64x1xf32> to vector<64x32xf32>
      %30 = arith.mulf %25, %29 : vector<64x32xf32>
      %c0_15 = arith.constant 0 : index
      %c0_16 = arith.constant 0 : index
      %31 = vector.load %arg3[%c0_15, %c0_16] : memref<1x32xf32, #tpu.memory_space<vmem>>, vector<1x32xf32>
      %32 = vector.broadcast %31 : vector<1x32xf32> to vector<64x32xf32>
      %33 = arith.mulf %30, %32 : vector<64x32xf32>
      %c0_17 = arith.constant 0 : index
      %c0_18 = arith.constant 0 : index
      %34 = vector.load %arg4[%c0_17, %c0_18] : memref<1x32xf32, #tpu.memory_space<vmem>>, vector<1x32xf32>
      %35 = vector.broadcast %34 : vector<1x32xf32> to vector<64x32xf32>
      %36 = arith.addf %33, %35 : vector<64x32xf32>
      %37 = arith.truncf %36 : vector<64x32xf32> to vector<64x32xbf16>
      %c0_19 = arith.constant 0 : index
      %c0_20 = arith.constant 0 : index
      %38 = vector.load %arg8[%c0_19, %c0_20] : memref<64x32xbf16, #tpu.memory_space<vmem>>, vector<64x32xbf16>
      tpu.vector_store %arg8[%c0_19, %c0_20], %37 {strides = array<i32>} : memref<64x32xbf16, #tpu.memory_space<vmem>>, vector<64x32xbf16>,
    } else {
    }
    %c0 = arith.constant 0 : index
    %c0_1 = arith.constant 0 : index
    %3 = vector.load %arg8[%c0, %c0_1] : memref<64x32xbf16, #tpu.memory_space<vmem>>, vector<64x32xbf16>
    %c0_2 = arith.constant 0 : index
    %c0_3 = arith.constant 0 : index
    %4 = vector.load %arg5[%c0_2, %c0_3] : memref<32x128xbf16, #tpu.memory_space<vmem>>, vector<32x128xbf16>
    %cst = arith.constant dense<0.000000e+00> : vector<64x128xf32>
    %5 = tpu.matmul %3, %4, %cst {dimension_numbers = #tpu.dot_dimension_numbers<[1], [0], [0], [1], [0, 0, 1, 1], [], []>} : vector<64x32xbf16>, vector<32x128xbf16>, vector<64x128xf32> -> vector<64x128xf32>
    %c0_4 = arith.constant 0 : index
    %c0_5 = arith.constant 0 : index
    %6 = vector.load %arg6[%c0_4, %c0_5] : memref<1x128xf32, #tpu.memory_space<vmem>>, vector<1x128xf32>
    %7 = vector.broadcast %6 : vector<1x128xf32> to vector<64x128xf32>
    %8 = arith.addf %5, %7 : vector<64x128xf32>
    %9 = arith.truncf %8 : vector<64x128xf32> to vector<64x128xbf16>
    %c0_6 = arith.constant 0 : index
    %c0_7 = arith.constant 0 : index
    %10 = vector.load %arg7[%c0_6, %c0_7] : memref<64x128xbf16, #tpu.memory_space<vmem>>, vector<64x128xbf16>
    tpu.vector_store %arg7[%c0_6, %c0_7], %9 {strides = array<i32>} : memref<64x128xbf16, #tpu.memory_space<vmem>>, vector<64x128xbf16>,
    return
  }
  func.func @transform_0(%arg0: i32, %arg1: i32) -> (i32, i32) {
    %c0_i32 = arith.constant 0 : i32
    %c0_i32_0 = arith.constant 0 : i32
    return %arg0, %c0_i32 : i32, i32
  }
  func.func @transform_1(%arg0: i32, %arg1: i32) -> (i32, i32) {
    %c0_i32 = arith.constant 0 : i32
    %c0_i32_0 = arith.constant 0 : i32
    %c0_i32_1 = arith.constant 0 : i32
    return %c0_i32, %c0_i32_0 : i32, i32
  }
  func.func @transform_2(%arg0: i32, %arg1: i32) -> (i32, i32) {
    %c0_i32 = arith.constant 0 : i32
    %c0_i32_0 = arith.constant 0 : i32
    %c0_i32_1 = arith.constant 0 : i32
    return %c0_i32, %c0_i32_0 : i32, i32
  }
  func.func @transform_3(%arg0: i32, %arg1: i32) -> (i32, i32) {
    %c0_i32 = arith.constant 0 : i32
    %c0_i32_0 = arith.constant 0 : i32
    return %c0_i32, %arg1 : i32, i32
  }
  func.func @transform_4(%arg0: i32, %arg1: i32) -> (i32, i32) {
    %c0_i32 = arith.constant 0 : i32
    %c0_i32_0 = arith.constant 0 : i32
    return %c0_i32, %arg1 : i32, i32
  }
  func.func @transform_5(%arg0: i32, %arg1: i32) -> (i32, i32) {
    %c0_i32 = arith.constant 0 : i32
    return %arg0, %arg1 : i32, i32
  }
}

module attributes {stable_mosaic.version = 11 : i64} {
  func.func @_attention_kernel(%arg0: i32, %arg1: memref<1x32x96xbf16, #tpu.memory_space<vmem>>, %arg2: memref<1x32x32xbf16, #tpu.memory_space<vmem>>) attributes {dimension_semantics = [#tpu.dimension_semantics<parallel>], iteration_bounds = array<i64: 2>, scalar_prefetch = 0 : i64, scratch_operands = 0 : i64, tpu.core_type = #tpu.core_type<tc>, window_params = [{transform_indices = @transform_0, window_bounds = array<i64: 1, 32, 96>}, {transform_indices = @transform_1, window_bounds = array<i64: 1, 32, 32>}]} {
    %c0 = arith.constant 0 : index
    %c0_0 = arith.constant 0 : index
    %c0_1 = arith.constant 0 : index
    %0 = vector.load %arg1[%c0, %c0_0, %c0_1] : memref<1x32x96xbf16, #tpu.memory_space<vmem>>, vector<1x32x96xbf16>
    %1 = vector.shape_cast %0 : vector<1x32x96xbf16> to vector<32x96xbf16>
    %2 = tpu.iota {dimensions = array<i32: 1>} : vector<32x32xi32>
    %c17_i32 = arith.constant 17 : i32
    %3 = vector.broadcast %c17_i32 : i32 to vector<32x32xi32>
    %4 = arith.cmpi slt, %2, %3 : vector<32x32xi32>
    %5 = vector.extract_strided_slice %1 {offsets = [0, 0], sizes = [32, 8], strides = [1, 1]} : vector<32x96xbf16> to vector<32x8xbf16>
    %6 = vector.extract_strided_slice %1 {offsets = [0, 32], sizes = [32, 8], strides = [1, 1]} : vector<32x96xbf16> to vector<32x8xbf16>
    %7 = vector.extract_strided_slice %1 {offsets = [0, 64], sizes = [32, 8], strides = [1, 1]} : vector<32x96xbf16> to vector<32x8xbf16>
    %cst = arith.constant dense<0.000000e+00> : vector<32x32xf32>
    %8 = tpu.matmul %5, %6, %cst {dimension_numbers = #tpu.dot_dimension_numbers<[1], [1], [0], [0], [0, 0, 1, 0], [], []>} : vector<32x8xbf16>, vector<32x8xbf16>, vector<32x32xf32> -> vector<32x32xf32>
    %cst_2 = arith.constant -1.000000e+30 : f32
    %9 = vector.broadcast %cst_2 : f32 to vector<32x32xf32>
    %10 = arith.select %4, %8, %9 : vector<32x32xi1>, vector<32x32xf32>
    %cst_3 = arith.constant dense<0xFF800000> : vector<32xf32>
    %11 = vector.multi_reduction <maximumf>, %10, %cst_3 [1] : vector<32x32xf32> to vector<32xf32>
    %12 = vector.shape_cast %11 : vector<32xf32> to vector<32x1xf32>
    %13 = vector.broadcast %12 : vector<32x1xf32> to vector<32x32xf32>
    %14 = arith.subf %10, %13 : vector<32x32xf32>
    %15 = math.exp %14 : vector<32x32xf32>
    %cst_4 = arith.constant dense<0.000000e+00> : vector<32xf32>
    %16 = vector.multi_reduction <add>, %15, %cst_4 [1] : vector<32x32xf32> to vector<32xf32>
    %17 = vector.shape_cast %16 : vector<32xf32> to vector<32x1xf32>
    %18 = tpu.reciprocal %17 {approx = true} : vector<32x1xf32> -> vector<32x1xf32>
    %19 = vector.broadcast %18 : vector<32x1xf32> to vector<32x32xf32>
    %20 = arith.mulf %15, %19 : vector<32x32xf32>
    %21 = arith.truncf %20 : vector<32x32xf32> to vector<32x32xbf16>
    %cst_5 = arith.constant dense<0.000000e+00> : vector<32x8xf32>
    %22 = tpu.matmul %21, %7, %cst_5 {dimension_numbers = #tpu.dot_dimension_numbers<[1], [0], [0], [1], [0, 0, 1, 1], [], []>} : vector<32x32xbf16>, vector<32x8xbf16>, vector<32x8xf32> -> vector<32x8xf32>
    %23 = arith.truncf %22 : vector<32x8xf32> to vector<32x8xbf16>
    %c0_6 = arith.constant 0 : index
    %c0_7 = arith.constant 0 : index
    %c0_8 = arith.constant 0 : index
    %24 = vector.load %arg2[%c0_6, %c0_7, %c0_8] : memref<1x32x32xbf16, #tpu.memory_space<vmem>>, vector<1x32x8xbf16>
    %25 = vector.shape_cast %24 : vector<1x32x8xbf16> to vector<32x8xbf16>
    %26 = vector.shape_cast %23 : vector<32x8xbf16> to vector<1x32x8xbf16>
    tpu.vector_store %arg2[%c0_6, %c0_7, %c0_8], %26 {strides = array<i32>} : memref<1x32x32xbf16, #tpu.memory_space<vmem>>, vector<1x32x8xbf16>,
    %27 = vector.extract_strided_slice %1 {offsets = [0, 8], sizes = [32, 8], strides = [1, 1]} : vector<32x96xbf16> to vector<32x8xbf16>
    %28 = vector.extract_strided_slice %1 {offsets = [0, 40], sizes = [32, 8], strides = [1, 1]} : vector<32x96xbf16> to vector<32x8xbf16>
    %29 = vector.extract_strided_slice %1 {offsets = [0, 72], sizes = [32, 8], strides = [1, 1]} : vector<32x96xbf16> to vector<32x8xbf16>
    %cst_9 = arith.constant dense<0.000000e+00> : vector<32x32xf32>
    %30 = tpu.matmul %27, %28, %cst_9 {dimension_numbers = #tpu.dot_dimension_numbers<[1], [1], [0], [0], [0, 0, 1, 0], [], []>} : vector<32x8xbf16>, vector<32x8xbf16>, vector<32x32xf32> -> vector<32x32xf32>
    %cst_10 = arith.constant -1.000000e+30 : f32
    %31 = vector.broadcast %cst_10 : f32 to vector<32x32xf32>
    %32 = arith.select %4, %30, %31 : vector<32x32xi1>, vector<32x32xf32>
    %cst_11 = arith.constant dense<0xFF800000> : vector<32xf32>
    %33 = vector.multi_reduction <maximumf>, %32, %cst_11 [1] : vector<32x32xf32> to vector<32xf32>
    %34 = vector.shape_cast %33 : vector<32xf32> to vector<32x1xf32>
    %35 = vector.broadcast %34 : vector<32x1xf32> to vector<32x32xf32>
    %36 = arith.subf %32, %35 : vector<32x32xf32>
    %37 = math.exp %36 : vector<32x32xf32>
    %cst_12 = arith.constant dense<0.000000e+00> : vector<32xf32>
    %38 = vector.multi_reduction <add>, %37, %cst_12 [1] : vector<32x32xf32> to vector<32xf32>
    %39 = vector.shape_cast %38 : vector<32xf32> to vector<32x1xf32>
    %40 = tpu.reciprocal %39 {approx = true} : vector<32x1xf32> -> vector<32x1xf32>
    %41 = vector.broadcast %40 : vector<32x1xf32> to vector<32x32xf32>
    %42 = arith.mulf %37, %41 : vector<32x32xf32>
    %43 = arith.truncf %42 : vector<32x32xf32> to vector<32x32xbf16>
    %cst_13 = arith.constant dense<0.000000e+00> : vector<32x8xf32>
    %44 = tpu.matmul %43, %29, %cst_13 {dimension_numbers = #tpu.dot_dimension_numbers<[1], [0], [0], [1], [0, 0, 1, 1], [], []>} : vector<32x32xbf16>, vector<32x8xbf16>, vector<32x8xf32> -> vector<32x8xf32>
    %45 = arith.truncf %44 : vector<32x8xf32> to vector<32x8xbf16>
    %c0_14 = arith.constant 0 : index
    %c0_15 = arith.constant 0 : index
    %c8 = arith.constant 8 : index
    %46 = vector.load %arg2[%c0_14, %c0_15, %c8] : memref<1x32x32xbf16, #tpu.memory_space<vmem>>, vector<1x32x8xbf16>
    %47 = vector.shape_cast %46 : vector<1x32x8xbf16> to vector<32x8xbf16>
    %48 = vector.shape_cast %45 : vector<32x8xbf16> to vector<1x32x8xbf16>
    tpu.vector_store %arg2[%c0_14, %c0_15, %c8], %48 {strides = array<i32>} : memref<1x32x32xbf16, #tpu.memory_space<vmem>>, vector<1x32x8xbf16>,
    %49 = vector.extract_strided_slice %1 {offsets = [0, 16], sizes = [32, 8], strides = [1, 1]} : vector<32x96xbf16> to vector<32x8xbf16>
    %50 = vector.extract_strided_slice %1 {offsets = [0, 48], sizes = [32, 8], strides = [1, 1]} : vector<32x96xbf16> to vector<32x8xbf16>
    %51 = vector.extract_strided_slice %1 {offsets = [0, 80], sizes = [32, 8], strides = [1, 1]} : vector<32x96xbf16> to vector<32x8xbf16>
    %cst_16 = arith.constant dense<0.000000e+00> : vector<32x32xf32>
    %52 = tpu.matmul %49, %50, %cst_16 {dimension_numbers = #tpu.dot_dimension_numbers<[1], [1], [0], [0], [0, 0, 1, 0], [], []>} : vector<32x8xbf16>, vector<32x8xbf16>, vector<32x32xf32> -> vector<32x32xf32>
    %cst_17 = arith.constant -1.000000e+30 : f32
    %53 = vector.broadcast %cst_17 : f32 to vector<32x32xf32>
    %54 = arith.select %4, %52, %53 : vector<32x32xi1>, vector<32x32xf32>
    %cst_18 = arith.constant dense<0xFF800000> : vector<32xf32>
    %55 = vector.multi_reduction <maximumf>, %54, %cst_18 [1] : vector<32x32xf32> to vector<32xf32>
    %56 = vector.shape_cast %55 : vector<32xf32> to vector<32x1xf32>
    %57 = vector.broadcast %56 : vector<32x1xf32> to vector<32x32xf32>
    %58 = arith.subf %54, %57 : vector<32x32xf32>
    %59 = math.exp %58 : vector<32x32xf32>
    %cst_19 = arith.constant dense<0.000000e+00> : vector<32xf32>
    %60 = vector.multi_reduction <add>, %59, %cst_19 [1] : vector<32x32xf32> to vector<32xf32>
    %61 = vector.shape_cast %60 : vector<32xf32> to vector<32x1xf32>
    %62 = tpu.reciprocal %61 {approx = true} : vector<32x1xf32> -> vector<32x1xf32>
    %63 = vector.broadcast %62 : vector<32x1xf32> to vector<32x32xf32>
    %64 = arith.mulf %59, %63 : vector<32x32xf32>
    %65 = arith.truncf %64 : vector<32x32xf32> to vector<32x32xbf16>
    %cst_20 = arith.constant dense<0.000000e+00> : vector<32x8xf32>
    %66 = tpu.matmul %65, %51, %cst_20 {dimension_numbers = #tpu.dot_dimension_numbers<[1], [0], [0], [1], [0, 0, 1, 1], [], []>} : vector<32x32xbf16>, vector<32x8xbf16>, vector<32x8xf32> -> vector<32x8xf32>
    %67 = arith.truncf %66 : vector<32x8xf32> to vector<32x8xbf16>
    %c0_21 = arith.constant 0 : index
    %c0_22 = arith.constant 0 : index
    %c16 = arith.constant 16 : index
    %68 = vector.load %arg2[%c0_21, %c0_22, %c16] : memref<1x32x32xbf16, #tpu.memory_space<vmem>>, vector<1x32x8xbf16>
    %69 = vector.shape_cast %68 : vector<1x32x8xbf16> to vector<32x8xbf16>
    %70 = vector.shape_cast %67 : vector<32x8xbf16> to vector<1x32x8xbf16>
    tpu.vector_store %arg2[%c0_21, %c0_22, %c16], %70 {strides = array<i32>} : memref<1x32x32xbf16, #tpu.memory_space<vmem>>, vector<1x32x8xbf16>,
    %71 = vector.extract_strided_slice %1 {offsets = [0, 24], sizes = [32, 8], strides = [1, 1]} : vector<32x96xbf16> to vector<32x8xbf16>
    %72 = vector.extract_strided_slice %1 {offsets = [0, 56], sizes = [32, 8], strides = [1, 1]} : vector<32x96xbf16> to vector<32x8xbf16>
    %73 = vector.extract_strided_slice %1 {offsets = [0, 88], sizes = [32, 8], strides = [1, 1]} : vector<32x96xbf16> to vector<32x8xbf16>
    %cst_23 = arith.constant dense<0.000000e+00> : vector<32x32xf32>
    %74 = tpu.matmul %71, %72, %cst_23 {dimension_numbers = #tpu.dot_dimension_numbers<[1], [1], [0], [0], [0, 0, 1, 0], [], []>} : vector<32x8xbf16>, vector<32x8xbf16>, vector<32x32xf32> -> vector<32x32xf32>
    %cst_24 = arith.constant -1.000000e+30 : f32
    %75 = vector.broadcast %cst_24 : f32 to vector<32x32xf32>
    %76 = arith.select %4, %74, %75 : vector<32x32xi1>, vector<32x32xf32>
    %cst_25 = arith.constant dense<0xFF800000> : vector<32xf32>
    %77 = vector.multi_reduction <maximumf>, %76, %cst_25 [1] : vector<32x32xf32> to vector<32xf32>
    %78 = vector.shape_cast %77 : vector<32xf32> to vector<32x1xf32>
    %79 = vector.broadcast %78 : vector<32x1xf32> to vector<32x32xf32>
    %80 = arith.subf %76, %79 : vector<32x32xf32>
    %81 = math.exp %80 : vector<32x32xf32>
    %cst_26 = arith.constant dense<0.000000e+00> : vector<32xf32>
    %82 = vector.multi_reduction <add>, %81, %cst_26 [1] : vector<32x32xf32> to vector<32xf32>
    %83 = vector.shape_cast %82 : vector<32xf32> to vector<32x1xf32>
    %84 = tpu.reciprocal %83 {approx = true} : vector<32x1xf32> -> vector<32x1xf32>
    %85 = vector.broadcast %84 : vector<32x1xf32> to vector<32x32xf32>
    %86 = arith.mulf %81, %85 : vector<32x32xf32>
    %87 = arith.truncf %86 : vector<32x32xf32> to vector<32x32xbf16>
    %cst_27 = arith.constant dense<0.000000e+00> : vector<32x8xf32>
    %88 = tpu.matmul %87, %73, %cst_27 {dimension_numbers = #tpu.dot_dimension_numbers<[1], [0], [0], [1], [0, 0, 1, 1], [], []>} : vector<32x32xbf16>, vector<32x8xbf16>, vector<32x8xf32> -> vector<32x8xf32>
    %89 = arith.truncf %88 : vector<32x8xf32> to vector<32x8xbf16>
    %c0_28 = arith.constant 0 : index
    %c0_29 = arith.constant 0 : index
    %c24 = arith.constant 24 : index
    %90 = vector.load %arg2[%c0_28, %c0_29, %c24] : memref<1x32x32xbf16, #tpu.memory_space<vmem>>, vector<1x32x8xbf16>
    %91 = vector.shape_cast %90 : vector<1x32x8xbf16> to vector<32x8xbf16>
    %92 = vector.shape_cast %89 : vector<32x8xbf16> to vector<1x32x8xbf16>
    tpu.vector_store %arg2[%c0_28, %c0_29, %c24], %92 {strides = array<i32>} : memref<1x32x32xbf16, #tpu.memory_space<vmem>>, vector<1x32x8xbf16>,
    return
  }
  func.func @transform_0(%arg0: i32) -> (i32, i32, i32) {
    %c0_i32 = arith.constant 0 : i32
    %c0_i32_0 = arith.constant 0 : i32
    %c0_i32_1 = arith.constant 0 : i32
    return %arg0, %c0_i32, %c0_i32_0 : i32, i32, i32
  }
  func.func @transform_1(%arg0: i32) -> (i32, i32, i32) {
    %c0_i32 = arith.constant 0 : i32
    %c0_i32_0 = arith.constant 0 : i32
    %c0_i32_1 = arith.constant 0 : i32
    return %arg0, %c0_i32, %c0_i32_0 : i32, i32, i32
  }
}

module attributes {stable_mosaic.version = 11 : i64} {
  func.func @_ln_linear_kernel(%arg0: i32, %arg1: i32, %arg2: memref<64x32xbf16, #tpu.memory_space<vmem>>, %arg3: memref<1x32xf32, #tpu.memory_space<vmem>>, %arg4: memref<1x32xf32, #tpu.memory_space<vmem>>, %arg5: memref<32x128xbf16, #tpu.memory_space<vmem>>, %arg6: memref<1x128xf32, #tpu.memory_space<vmem>>, %arg7: memref<64x128xbf16, #tpu.memory_space<vmem>>, %arg8: memref<64x32xbf16, #tpu.memory_space<vmem>>) attributes {dimension_semantics = [#tpu.dimension_semantics<parallel>, #tpu.dimension_semantics<arbitrary>], iteration_bounds = array<i64: 1, 1>, scalar_prefetch = 0 : i64, scratch_operands = 1 : i64, tpu.core_type = #tpu.core_type<tc>, window_params = [{transform_indices = @transform_0, window_bounds = array<i64: 64, 32>}, {pipeline_mode = #tpu.pipeline_mode<synchronous>, transform_indices = @transform_1, window_bounds = array<i64: 1, 32>}, {pipeline_mode = #tpu.pipeline_mode<synchronous>, transform_indices = @transform_2, window_bounds = array<i64: 1, 32>}, {transform_indices = @transform_3, window_bounds = array<i64: 32, 128>}, {transform_indices = @transform_4, window_bounds = array<i64: 1, 128>}, {transform_indices = @transform_5, window_bounds = array<i64: 64, 128>}]} {
    %c0_i32 = arith.constant 0 : i32
    %0 = arith.cmpi eq, %arg1, %c0_i32 : i32
    %1 = arith.extui %0 : i1 to i32
    %c0_i32_0 = arith.constant 0 : i32
    %2 = arith.cmpi ne, %1, %c0_i32_0 : i32
    scf.if %2 {
      %c0_11 = arith.constant 0 : index
      %c0_12 = arith.constant 0 : index
      %19 = vector.load %arg2[%c0_11, %c0_12] : memref<64x32xbf16, #tpu.memory_space<vmem>>, vector<64x32xbf16>
      %20 = arith.extf %19 : vector<64x32xbf16> to vector<64x32xf32>
      %cst_13 = arith.constant dense<0.000000e+00> : vector<64xf32>
      %21 = vector.multi_reduction <add>, %20, %cst_13 [1] : vector<64x32xf32> to vector<64xf32>
      %22 = vector.shape_cast %21 : vector<64xf32> to vector<64x1xf32>
      %cst_14 = arith.constant 3.200000e+01 : f32
      %23 = vector.broadcast %cst_14 : f32 to vector<64x1xf32>
      %24 = arith.divf %22, %23 : vector<64x1xf32>
      %25 = vector.broadcast %24 : vector<64x1xf32> to vector<64x32xf32>
      %26 = arith.subf %20, %25 : vector<64x32xf32>
      %27 = arith.mulf %26, %26 : vector<64x32xf32>
      %cst_15 = arith.constant dense<0.000000e+00> : vector<64xf32>
      %28 = vector.multi_reduction <add>, %27, %cst_15 [1] : vector<64x32xf32> to vector<64xf32>
      %29 = vector.shape_cast %28 : vector<64xf32> to vector<64x1xf32>
      %cst_16 = arith.constant 3.200000e+01 : f32
      %30 = vector.broadcast %cst_16 : f32 to vector<64x1xf32>
      %31 = arith.divf %29, %30 : vector<64x1xf32>
      %32 = vector.broadcast %24 : vector<64x1xf32> to vector<64x32xf32>
      %33 = arith.subf %20, %32 : vector<64x32xf32>
      %cst_17 = arith.constant 9.99999974E-6 : f32
      %34 = vector.broadcast %cst_17 : f32 to vector<64x1xf32>
      %35 = arith.addf %31, %34 : vector<64x1xf32>
      %36 = math.rsqrt %35 : vector<64x1xf32>
      %37 = vector.broadcast %36 : vector<64x1xf32> to vector<64x32xf32>
      %38 = arith.mulf %33, %37 : vector<64x32xf32>
      %c0_18 = arith.constant 0 : index
      %c0_19 = arith.constant 0 : index
      %39 = vector.load %arg3[%c0_18, %c0_19] : memref<1x32xf32, #tpu.memory_space<vmem>>, vector<1x32xf32>
      %40 = vector.broadcast %39 : vector<1x32xf32> to vector<64x32xf32>
      %41 = arith.mulf %38, %40 : vector<64x32xf32>
      %c0_20 = arith.constant 0 : index
      %c0_21 = arith.constant 0 : index
      %42 = vector.load %arg4[%c0_20, %c0_21] : memref<1x32xf32, #tpu.memory_space<vmem>>, vector<1x32xf32>
      %43 = vector.broadcast %42 : vector<1x32xf32> to vector<64x32xf32>
      %44 = arith.addf %41, %43 : vector<64x32xf32>
      %45 = arith.truncf %44 : vector<64x32xf32> to vector<64x32xbf16>
      %c0_22 = arith.constant 0 : index
      %c0_23 = arith.constant 0 : index
      %46 = vector.load %arg8[%c0_22, %c0_23] : memref<64x32xbf16, #tpu.memory_space<vmem>>, vector<64x32xbf16>
      tpu.vector_store %arg8[%c0_22, %c0_23], %45 {strides = array<i32>} : memref<64x32xbf16, #tpu.memory_space<vmem>>, vector<64x32xbf16>,
    } else {
    }
    %c0 = arith.constant 0 : index
    %c0_1 = arith.constant 0 : index
    %3 = vector.load %arg8[%c0, %c0_1] : memref<64x32xbf16, #tpu.memory_space<vmem>>, vector<64x32xbf16>
    %c0_2 = arith.constant 0 : index
    %c0_3 = arith.constant 0 : index
    %4 = vector.load %arg5[%c0_2, %c0_3] : memref<32x128xbf16, #tpu.memory_space<vmem>>, vector<32x128xbf16>
    %cst = arith.constant dense<0.000000e+00> : vector<64x128xf32>
    %5 = tpu.matmul %3, %4, %cst {dimension_numbers = #tpu.dot_dimension_numbers<[1], [0], [0], [1], [0, 0, 1, 1], [], []>} : vector<64x32xbf16>, vector<32x128xbf16>, vector<64x128xf32> -> vector<64x128xf32>
    %c0_4 = arith.constant 0 : index
    %c0_5 = arith.constant 0 : index
    %6 = vector.load %arg6[%c0_4, %c0_5] : memref<1x128xf32, #tpu.memory_space<vmem>>, vector<1x128xf32>
    %7 = vector.broadcast %6 : vector<1x128xf32> to vector<64x128xf32>
    %8 = arith.addf %5, %7 : vector<64x128xf32>
    %cst_6 = arith.constant 5.000000e-01 : f32
    %9 = vector.broadcast %cst_6 : f32 to vector<64x128xf32>
    %10 = arith.mulf %9, %8 : vector<64x128xf32>
    %cst_7 = arith.constant 0.707106769 : f32
    %11 = vector.broadcast %cst_7 : f32 to vector<64x128xf32>
    %12 = arith.mulf %8, %11 : vector<64x128xf32>
    %13 = math.erf %12 : vector<64x128xf32>
    %cst_8 = arith.constant 1.000000e+00 : f32
    %14 = vector.broadcast %cst_8 : f32 to vector<64x128xf32>
    %15 = arith.addf %14, %13 : vector<64x128xf32>
    %16 = arith.mulf %10, %15 : vector<64x128xf32>
    %17 = arith.truncf %16 : vector<64x128xf32> to vector<64x128xbf16>
    %c0_9 = arith.constant 0 : index
    %c0_10 = arith.constant 0 : index
    %18 = vector.load %arg7[%c0_9, %c0_10] : memref<64x128xbf16, #tpu.memory_space<vmem>>, vector<64x128xbf16>
    tpu.vector_store %arg7[%c0_9, %c0_10], %17 {strides = array<i32>} : memref<64x128xbf16, #tpu.memory_space<vmem>>, vector<64x128xbf16>,
    return
  }
  func.func @transform_0(%arg0: i32, %arg1: i32) -> (i32, i32) {
    %c0_i32 = arith.constant 0 : i32
    %c0_i32_0 = arith.constant 0 : i32
    return %arg0, %c0_i32 : i32, i32
  }
  func.func @transform_1(%arg0: i32, %arg1: i32) -> (i32, i32) {
    %c0_i32 = arith.constant 0 : i32
    %c0_i32_0 = arith.constant 0 : i32
    %c0_i32_1 = arith.constant 0 : i32
    return %c0_i32, %c0_i32_0 : i32, i32
  }
  func.func @transform_2(%arg0: i32, %arg1: i32) -> (i32, i32) {
    %c0_i32 = arith.constant 0 : i32
    %c0_i32_0 = arith.constant 0 : i32
    %c0_i32_1 = arith.constant 0 : i32
    return %c0_i32, %c0_i32_0 : i32, i32
  }
  func.func @transform_3(%arg0: i32, %arg1: i32) -> (i32, i32) {
    %c0_i32 = arith.constant 0 : i32
    %c0_i32_0 = arith.constant 0 : i32
    return %c0_i32, %arg1 : i32, i32
  }
  func.func @transform_4(%arg0: i32, %arg1: i32) -> (i32, i32) {
    %c0_i32 = arith.constant 0 : i32
    %c0_i32_0 = arith.constant 0 : i32
    return %c0_i32, %arg1 : i32, i32
  }
  func.func @transform_5(%arg0: i32, %arg1: i32) -> (i32, i32) {
    %c0_i32 = arith.constant 0 : i32
    return %arg0, %arg1 : i32, i32
  }
}

module attributes {stable_mosaic.version = 11 : i64} {
  func.func @_linear_kernel(%arg0: i32, %arg1: i32, %arg2: i32, %arg3: memref<64x128xbf16, #tpu.memory_space<vmem>>, %arg4: memref<128x128xbf16, #tpu.memory_space<vmem>>, %arg5: memref<1x128xf32, #tpu.memory_space<vmem>>, %arg6: memref<64x128xbf16, #tpu.memory_space<vmem>>, %arg7: memref<64x128xbf16, #tpu.memory_space<vmem>>, %arg8: memref<64x128xf32, #tpu.memory_space<vmem>>) attributes {dimension_semantics = [#tpu.dimension_semantics<parallel>, #tpu.dimension_semantics<parallel>, #tpu.dimension_semantics<arbitrary>], iteration_bounds = array<i64: 1, 1, 1>, scalar_prefetch = 0 : i64, scratch_operands = 1 : i64, tpu.core_type = #tpu.core_type<tc>, window_params = [{transform_indices = @transform_0, window_bounds = array<i64: 64, 128>}, {transform_indices = @transform_1, window_bounds = array<i64: 128, 128>}, {transform_indices = @transform_2, window_bounds = array<i64: 1, 128>}, {transform_indices = @transform_3, window_bounds = array<i64: 64, 128>}, {transform_indices = @transform_4, window_bounds = array<i64: 64, 128>}]} {
    %c0_i32 = arith.constant 0 : i32
    %0 = arith.cmpi eq, %arg2, %c0_i32 : i32
    %1 = arith.extui %0 : i1 to i32
    %c0_i32_0 = arith.constant 0 : i32
    %2 = arith.cmpi ne, %1, %c0_i32_0 : i32
    scf.if %2 {
      %c0_10 = arith.constant 0 : index
      %c0_11 = arith.constant 0 : index
      %12 = vector.load %arg5[%c0_10, %c0_11] : memref<1x128xf32, #tpu.memory_space<vmem>>, vector<1x128xf32>
      %13 = vector.shape_cast %12 : vector<1x128xf32> to vector<1x128xf32>
      %14 = vector.broadcast %13 : vector<1x128xf32> to vector<64x128xf32>
      %c0_12 = arith.constant 0 : index
      %c0_13 = arith.constant 0 : index
      %15 = vector.load %arg8[%c0_12, %c0_13] : memref<64x128xf32, #tpu.memory_space<vmem>>, vector<64x128xf32>
      tpu.vector_store %arg8[%c0_12, %c0_13], %14 {strides = array<i32>} : memref<64x128xf32, #tpu.memory_space<vmem>>, vector<64x128xf32>,
    } else {
    }
    %c0 = arith.constant 0 : index
    %c0_1 = arith.constant 0 : index
    %3 = vector.load %arg8[%c0, %c0_1] : memref<64x128xf32, #tpu.memory_space<vmem>>, vector<64x128xf32>
    %c0_2 = arith.constant 0 : index
    %c0_3 = arith.constant 0 : index
    %4 = vector.load %arg3[%c0_2, %c0_3] : memref<64x128xbf16, #tpu.memory_space<vmem>>, vector<64x128xbf16>
    %c0_4 = arith.constant 0 : index
    %c0_5 = arith.constant 0 : index
    %5 = vector.load %arg4[%c0_4, %c0_5] : memref<128x128xbf16, #tpu.memory_space<vmem>>, vector<128x128xbf16>
    %cst = arith.constant dense<0.000000e+00> : vector<64x128xf32>
    %6 = tpu.matmul %4, %5, %cst {dimension_numbers = #tpu.dot_dimension_numbers<[1], [0], [0], [1], [0, 0, 1, 1], [], []>} : vector<64x128xbf16>, vector<128x128xbf16>, vector<64x128xf32> -> vector<64x128xf32>
    %7 = arith.addf %3, %6 : vector<64x128xf32>
    %c0_6 = arith.constant 0 : index
    %c0_7 = arith.constant 0 : index
    %8 = vector.load %arg8[%c0_6, %c0_7] : memref<64x128xf32, #tpu.memory_space<vmem>>, vector<64x128xf32>
    tpu.vector_store %arg8[%c0_6, %c0_7], %7 {strides = array<i32>} : memref<64x128xf32, #tpu.memory_space<vmem>>, vector<64x128xf32>,
    %c0_i32_8 = arith.constant 0 : i32
    %9 = arith.cmpi eq, %arg2, %c0_i32_8 : i32
    %10 = arith.extui %9 : i1 to i32
    %c0_i32_9 = arith.constant 0 : i32
    %11 = arith.cmpi ne, %10, %c0_i32_9 : i32
    scf.if %11 {
      %c0_10 = arith.constant 0 : index
      %c0_11 = arith.constant 0 : index
      %12 = vector.load %arg8[%c0_10, %c0_11] : memref<64x128xf32, #tpu.memory_space<vmem>>, vector<64x128xf32>
      %c0_12 = arith.constant 0 : index
      %c0_13 = arith.constant 0 : index
      %13 = vector.load %arg6[%c0_12, %c0_13] : memref<64x128xbf16, #tpu.memory_space<vmem>>, vector<64x128xbf16>
      %14 = arith.extf %13 : vector<64x128xbf16> to vector<64x128xf32>
      %15 = arith.addf %12, %14 : vector<64x128xf32>
      %16 = arith.truncf %15 : vector<64x128xf32> to vector<64x128xbf16>
      %c0_14 = arith.constant 0 : index
      %c0_15 = arith.constant 0 : index
      %17 = vector.load %arg7[%c0_14, %c0_15] : memref<64x128xbf16, #tpu.memory_space<vmem>>, vector<64x128xbf16>
      tpu.vector_store %arg7[%c0_14, %c0_15], %16 {strides = array<i32>} : memref<64x128xbf16, #tpu.memory_space<vmem>>, vector<64x128xbf16>,
    } else {
    }
    return
  }
  func.func @transform_0(%arg0: i32, %arg1: i32, %arg2: i32) -> (i32, i32) {
    %c0_i32 = arith.constant 0 : i32
    return %arg0, %arg2 : i32, i32
  }
  func.func @transform_1(%arg0: i32, %arg1: i32, %arg2: i32) -> (i32, i32) {
    %c0_i32 = arith.constant 0 : i32
    return %arg2, %arg1 : i32, i32
  }
  func.func @transform_2(%arg0: i32, %arg1: i32, %arg2: i32) -> (i32, i32) {
    %c0_i32 = arith.constant 0 : i32
    %c0_i32_0 = arith.constant 0 : i32
    return %c0_i32, %arg1 : i32, i32
  }
  func.func @transform_3(%arg0: i32, %arg1: i32, %arg2: i32) -> (i32, i32) {
    %c0_i32 = arith.constant 0 : i32
    return %arg0, %arg1 : i32, i32
  }
  func.func @transform_4(%arg0: i32, %arg1: i32, %arg2: i32) -> (i32, i32) {
    %c0_i32 = arith.constant 0 : i32
    return %arg0, %arg1 : i32, i32
  }
}

module attributes {stable_mosaic.version = 11 : i64} {
  func.func @_ln_linear_kernel(%arg0: i32, %arg1: i32, %arg2: memref<16x32xbf16, #tpu.memory_space<vmem>>, %arg3: memref<1x32xf32, #tpu.memory_space<vmem>>, %arg4: memref<1x32xf32, #tpu.memory_space<vmem>>, %arg5: memref<32x128xbf16, #tpu.memory_space<vmem>>, %arg6: memref<1x128xf32, #tpu.memory_space<vmem>>, %arg7: memref<16x128xf32, #tpu.memory_space<vmem>>, %arg8: memref<16x32xbf16, #tpu.memory_space<vmem>>) attributes {dimension_semantics = [#tpu.dimension_semantics<parallel>, #tpu.dimension_semantics<arbitrary>], iteration_bounds = array<i64: 1, 1>, scalar_prefetch = 0 : i64, scratch_operands = 1 : i64, tpu.core_type = #tpu.core_type<tc>, window_params = [{transform_indices = @transform_0, window_bounds = array<i64: 16, 32>}, {pipeline_mode = #tpu.pipeline_mode<synchronous>, transform_indices = @transform_1, window_bounds = array<i64: 1, 32>}, {pipeline_mode = #tpu.pipeline_mode<synchronous>, transform_indices = @transform_2, window_bounds = array<i64: 1, 32>}, {transform_indices = @transform_3, window_bounds = array<i64: 32, 128>}, {transform_indices = @transform_4, window_bounds = array<i64: 1, 128>}, {transform_indices = @transform_5, window_bounds = array<i64: 16, 128>}]} {
    %c0_i32 = arith.constant 0 : i32
    %0 = arith.cmpi eq, %arg1, %c0_i32 : i32
    %1 = arith.extui %0 : i1 to i32
    %c0_i32_0 = arith.constant 0 : i32
    %2 = arith.cmpi ne, %1, %c0_i32_0 : i32
    scf.if %2 {
      %c0_8 = arith.constant 0 : index
      %c0_9 = arith.constant 0 : index
      %10 = vector.load %arg2[%c0_8, %c0_9] : memref<16x32xbf16, #tpu.memory_space<vmem>>, vector<16x32xbf16>
      %11 = arith.extf %10 : vector<16x32xbf16> to vector<16x32xf32>
      %cst_10 = arith.constant dense<0.000000e+00> : vector<16xf32>
      %12 = vector.multi_reduction <add>, %11, %cst_10 [1] : vector<16x32xf32> to vector<16xf32>
      %13 = vector.shape_cast %12 : vector<16xf32> to vector<16x1xf32>
      %cst_11 = arith.constant 3.200000e+01 : f32
      %14 = vector.broadcast %cst_11 : f32 to vector<16x1xf32>
      %15 = arith.divf %13, %14 : vector<16x1xf32>
      %16 = vector.broadcast %15 : vector<16x1xf32> to vector<16x32xf32>
      %17 = arith.subf %11, %16 : vector<16x32xf32>
      %18 = arith.mulf %17, %17 : vector<16x32xf32>
      %cst_12 = arith.constant dense<0.000000e+00> : vector<16xf32>
      %19 = vector.multi_reduction <add>, %18, %cst_12 [1] : vector<16x32xf32> to vector<16xf32>
      %20 = vector.shape_cast %19 : vector<16xf32> to vector<16x1xf32>
      %cst_13 = arith.constant 3.200000e+01 : f32
      %21 = vector.broadcast %cst_13 : f32 to vector<16x1xf32>
      %22 = arith.divf %20, %21 : vector<16x1xf32>
      %23 = vector.broadcast %15 : vector<16x1xf32> to vector<16x32xf32>
      %24 = arith.subf %11, %23 : vector<16x32xf32>
      %cst_14 = arith.constant 9.99999974E-6 : f32
      %25 = vector.broadcast %cst_14 : f32 to vector<16x1xf32>
      %26 = arith.addf %22, %25 : vector<16x1xf32>
      %27 = math.rsqrt %26 : vector<16x1xf32>
      %28 = vector.broadcast %27 : vector<16x1xf32> to vector<16x32xf32>
      %29 = arith.mulf %24, %28 : vector<16x32xf32>
      %c0_15 = arith.constant 0 : index
      %c0_16 = arith.constant 0 : index
      %30 = vector.load %arg3[%c0_15, %c0_16] : memref<1x32xf32, #tpu.memory_space<vmem>>, vector<1x32xf32>
      %31 = vector.broadcast %30 : vector<1x32xf32> to vector<16x32xf32>
      %32 = arith.mulf %29, %31 : vector<16x32xf32>
      %c0_17 = arith.constant 0 : index
      %c0_18 = arith.constant 0 : index
      %33 = vector.load %arg4[%c0_17, %c0_18] : memref<1x32xf32, #tpu.memory_space<vmem>>, vector<1x32xf32>
      %34 = vector.broadcast %33 : vector<1x32xf32> to vector<16x32xf32>
      %35 = arith.addf %32, %34 : vector<16x32xf32>
      %36 = arith.truncf %35 : vector<16x32xf32> to vector<16x32xbf16>
      %c0_19 = arith.constant 0 : index
      %c0_20 = arith.constant 0 : index
      %37 = vector.load %arg8[%c0_19, %c0_20] : memref<16x32xbf16, #tpu.memory_space<vmem>>, vector<16x32xbf16>
      tpu.vector_store %arg8[%c0_19, %c0_20], %36 {strides = array<i32>} : memref<16x32xbf16, #tpu.memory_space<vmem>>, vector<16x32xbf16>,
    } else {
    }
    %c0 = arith.constant 0 : index
    %c0_1 = arith.constant 0 : index
    %3 = vector.load %arg8[%c0, %c0_1] : memref<16x32xbf16, #tpu.memory_space<vmem>>, vector<16x32xbf16>
    %c0_2 = arith.constant 0 : index
    %c0_3 = arith.constant 0 : index
    %4 = vector.load %arg5[%c0_2, %c0_3] : memref<32x128xbf16, #tpu.memory_space<vmem>>, vector<32x128xbf16>
    %cst = arith.constant dense<0.000000e+00> : vector<16x128xf32>
    %5 = tpu.matmul %3, %4, %cst {dimension_numbers = #tpu.dot_dimension_numbers<[1], [0], [0], [1], [0, 0, 1, 1], [], []>} : vector<16x32xbf16>, vector<32x128xbf16>, vector<16x128xf32> -> vector<16x128xf32>
    %c0_4 = arith.constant 0 : index
    %c0_5 = arith.constant 0 : index
    %6 = vector.load %arg6[%c0_4, %c0_5] : memref<1x128xf32, #tpu.memory_space<vmem>>, vector<1x128xf32>
    %7 = vector.broadcast %6 : vector<1x128xf32> to vector<16x128xf32>
    %8 = arith.addf %5, %7 : vector<16x128xf32>
    %c0_6 = arith.constant 0 : index
    %c0_7 = arith.constant 0 : index
    %9 = vector.load %arg7[%c0_6, %c0_7] : memref<16x128xf32, #tpu.memory_space<vmem>>, vector<16x128xf32>
    tpu.vector_store %arg7[%c0_6, %c0_7], %8 {strides = array<i32>} : memref<16x128xf32, #tpu.memory_space<vmem>>, vector<16x128xf32>,
    return
  }
  func.func @transform_0(%arg0: i32, %arg1: i32) -> (i32, i32) {
    %c0_i32 = arith.constant 0 : i32
    %c0_i32_0 = arith.constant 0 : i32
    return %arg0, %c0_i32 : i32, i32
  }
  func.func @transform_1(%arg0: i32, %arg1: i32) -> (i32, i32) {
    %c0_i32 = arith.constant 0 : i32
    %c0_i32_0 = arith.constant 0 : i32
    %c0_i32_1 = arith.constant 0 : i32
    return %c0_i32, %c0_i32_0 : i32, i32
  }
  func.func @transform_2(%arg0: i32, %arg1: i32) -> (i32, i32) {
    %c0_i32 = arith.constant 0 : i32
    %c0_i32_0 = arith.constant 0 : i32
    %c0_i32_1 = arith.constant 0 : i32
    return %c0_i32, %c0_i32_0 : i32, i32
  }
  func.func @transform_3(%arg0: i32, %arg1: i32) -> (i32, i32) {
    %c0_i32 = arith.constant 0 : i32
    %c0_i32_0 = arith.constant 0 : i32
    return %c0_i32, %arg1 : i32, i32
  }
  func.func @transform_4(%arg0: i32, %arg1: i32) -> (i32, i32) {
    %c0_i32 = arith.constant 0 : i32
    %c0_i32_0 = arith.constant 0 : i32
    return %c0_i32, %arg1 : i32, i32
  }
  func.func @transform_5(%arg0: i32, %arg1: i32) -> (i32, i32) {
    %c0_i32 = arith.constant 0 : i32
    return %arg0, %arg1 : i32, i32
  }
}

</mosaic_0001>

<llo_original>
// kernel: vit_forward.13
$region0: #{vit_forward.13}
  #allocation0 [shape = 'u32[]', space=smem, size = 0x4, offset = 0x4, fixed_abs, tag = 'smem constant byte address 0x4 - core index']
  #allocation1 [shape = 'u32[144,128]{1,0:T(1,128)}', space=vmem, size = 0x12000, scoped, tag = 'internal scratch']
  #allocation2 [shape = 'bf16[64,32]{1,0:T(16,128)(2,1)}', space=vmem, size = 0x4000, scoped, tag = 'scratch operand']
  %s0 = inlined_call_operand.vmem [shape: bf16[64,32], index: 0, kind: input, shape index: {}]
  %s1 = inlined_call_operand.vmem [shape: f32[1,32], index: 1, kind: input, shape index: {}]
  %s2 = inlined_call_operand.vmem [shape: f32[1,32], index: 2, kind: input, shape index: {}]
  %s3 = inlined_call_operand.vmem [shape: bf16[32,128], index: 3, kind: input, shape index: {}]
  %s4 = inlined_call_operand.vmem [shape: f32[1,128], index: 4, kind: input, shape index: {}]
  %s5 = inlined_call_operand.vmem [shape: bf16[64,128], index: 5, kind: output, shape index: {}]
  %s6 = sld [smem:[#allocation0]]
  $region34: #{vit_forward.13} parent=0
    _
  %s8 = ssub.s32 1, %s6
  %s9 = scalar_select 0, %s8, %s6
  // Predicated region
  $region2: #{vit_forward.13} parent=0 // pred_check
    _
  $region3: #{vit_forward.13} parent=0 // pred_check_branch
    %11 = sbr.rel (0) target = $region5
  $region4: #{vit_forward.13} parent=0 // pred_region
    _
  $region5: #{vit_forward.13} parent=0 // pred_fallthru
    _
  // Predicated region
  $region6: #{vit_forward.13} parent=0 // pred_check
    _
  $region7: #{vit_forward.13} parent=0 // pred_check_branch
    %13 = sbr.rel (0) target = $region9
  $region8: #{vit_forward.13} parent=0 // pred_region
    _
  $region9: #{vit_forward.13} parent=0 // pred_fallthru
    _
  // Predicated region
  $region10: #{vit_forward.13} parent=0 // pred_check
    _
  $region11: #{vit_forward.13} parent=0 // pred_check_branch
    %15 = sbr.rel (0) target = $region13
  $region12: #{vit_forward.13} parent=0 // pred_region
    _
  $region13: #{vit_forward.13} parent=0 // pred_fallthru
    _
  // Predicated region
  $region14: #{vit_forward.13} parent=0 // pred_check
    _
  $region15: #{vit_forward.13} parent=0 // pred_check_branch
    %17 = sbr.rel (0) target = $region17
  $region16: #{vit_forward.13} parent=0 // pred_region
    _
  $region17: #{vit_forward.13} parent=0 // pred_fallthru
    _
  // Predicated region
  $region18: #{vit_forward.13} parent=0 // pred_check
    _
  $region19: #{vit_forward.13} parent=0 // pred_check_branch
    %19 = sbr.rel (0) target = $region21
  $region20: #{vit_forward.13} parent=0 // pred_region
    _
  $region21: #{vit_forward.13} parent=0 // pred_fallthru
    _
  %p21 = scmp.eq.s32.totalorder 0, 0
  // Predicated region
  $region22: #{vit_forward.13} parent=0 // pred_check
    %p22 = pneg %p21
  $region23: #{vit_forward.13} parent=0 // pred_check_branch
    %24 = sbr.rel (%p22) target = $region25
  $region24: #{vit_forward.13} parent=0 // pred_region
    %v25 = vld [vmem:[%s0] sm:$0xf]
    %v26 = vld [vmem:[%s0 + $0x4] sm:$0xf]
    %v27 = vld [vmem:[%s0 + $0x8] sm:$0xf]
    %v28 = vld [vmem:[%s0 + $0xc] sm:$0xf]
    %v29 = vld [vmem:[%s0 + $0x10] sm:$0xf]
    %v30 = vld [vmem:[%s0 + $0x14] sm:$0xf]
    %v31 = vld [vmem:[%s0 + $0x18] sm:$0xf]
    %v32 = vld [vmem:[%s0 + $0x1c] sm:$0xf]
    %v33 = vunpack.c.l.bf16 %v25
    %v34 = vunpack.c.l.bf16 %v26
    %v35 = vunpack.c.l.bf16 %v27
    %v36 = vunpack.c.l.bf16 %v28
    %v37 = vunpack.c.l.bf16 %v29
    %v38 = vunpack.c.l.bf16 %v30
    %v39 = vunpack.c.l.bf16 %v31
    %v40 = vunpack.c.l.bf16 %v32
    %vm41 = vcmask 261120
    %v42 = vsel %vm41, %v33, 0.0
    %43 = vadd.xlane.f32.xlu0 %v42
    %v44 = vpop.xlane.xlu0 %43
    %v45 = vsel %vm41, %v34, 0.0
    %46 = vadd.xlane.f32.xlu0 %v45
    %v47 = vpop.xlane.xlu0 %46
    %v48 = vsel %vm41, %v35, 0.0
    %49 = vadd.xlane.f32.xlu0 %v48
    %v50 = vpop.xlane.xlu0 %49
    %v51 = vsel %vm41, %v36, 0.0
    %52 = vadd.xlane.f32.xlu0 %v51
    %v53 = vpop.xlane.xlu0 %52
    %v54 = vsel %vm41, %v37, 0.0
    %55 = vadd.xlane.f32.xlu0 %v54
    %v56 = vpop.xlane.xlu0 %55
    %v57 = vsel %vm41, %v38, 0.0
    %58 = vadd.xlane.f32.xlu0 %v57
    %v59 = vpop.xlane.xlu0 %58
    %v60 = vsel %vm41, %v39, 0.0
    %61 = vadd.xlane.f32.xlu0 %v60
    %v62 = vpop.xlane.xlu0 %61
    %v63 = vsel %vm41, %v40, 0.0
    %64 = vadd.xlane.f32.xlu0 %v63
    %v65 = vpop.xlane.xlu0 %64
    %v66 = vrcp.pop 32.0
    %v67 = vmul.f32 %v44, %v66
    %v68 = vmul.f32 %v47, %v66
    %v69 = vmul.f32 %v50, %v66
    %v70 = vmul.f32 %v53, %v66
    %v71 = vmul.f32 %v56, %v66
    %v72 = vmul.f32 %v59, %v66
    %v73 = vmul.f32 %v62, %v66
    %v74 = vmul.f32 %v65, %v66
    %v75 = vsub.f32 %v33, %v67
    %v76 = vsub.f32 %v34, %v68
    %v77 = vsub.f32 %v35, %v69
    %v78 = vsub.f32 %v36, %v70
    %v79 = vsub.f32 %v37, %v71
    %v80 = vsub.f32 %v38, %v72
    %v81 = vsub.f32 %v39, %v73
    %v82 = vsub.f32 %v40, %v74
    %v83 = vmul.f32 %v75, %v75
    %v84 = vmul.f32 %v76, %v76
    %v85 = vmul.f32 %v77, %v77
    %v86 = vmul.f32 %v78, %v78
    %v87 = vmul.f32 %v79, %v79
    %v88 = vmul.f32 %v80, %v80
    %v89 = vmul.f32 %v81, %v81
    %v90 = vmul.f32 %v82, %v82
    %v91 = vsel %vm41, %v83, 0.0
    %92 = vadd.xlane.f32.xlu0 %v91
    %v93 = vpop.xlane.xlu0 %92
    %v94 = vsel %vm41, %v84, 0.0
    %95 = vadd.xlane.f32.xlu0 %v94
    %v96 = vpop.xlane.xlu0 %95
    %v97 = vsel %vm41, %v85, 0.0
    %98 = vadd.xlane.f32.xlu0 %v97
    %v99 = vpop.xlane.xlu0 %98
    %v100 = vsel %vm41, %v86, 0.0
    %101 = vadd.xlane.f32.xlu0 %v100
    %v102 = vpop.xlane.xlu0 %101
    %v103 = vsel %vm41, %v87, 0.0
    %104 = vadd.xlane.f32.xlu0 %v103
    %v105 = vpop.xlane.xlu0 %104
    %v106 = vsel %vm41, %v88, 0.0
    %107 = vadd.xlane.f32.xlu0 %v106
    %v108 = vpop.xlane.xlu0 %107
    %v109 = vsel %vm41, %v89, 0.0
    %110 = vadd.xlane.f32.xlu0 %v109
    %v111 = vpop.xlane.xlu0 %110
    %v112 = vsel %vm41, %v90, 0.0
    %113 = vadd.xlane.f32.xlu0 %v112
    %v114 = vpop.xlane.xlu0 %113
    %v115 = vmul.f32 %v93, %v66
    %v116 = vmul.f32 %v96, %v66
    %v117 = vmul.f32 %v99, %v66
    %v118 = vmul.f32 %v102, %v66
    %v119 = vmul.f32 %v105, %v66
    %v120 = vmul.f32 %v108, %v66
    %v121 = vmul.f32 %v111, %v66
    %v122 = vmul.f32 %v114, %v66
    %v123 = vadd.f32 %v115, 1e-05
    %v124 = vadd.f32 %v116, 1e-05
    %v125 = vadd.f32 %v117, 1e-05
    %v126 = vadd.f32 %v118, 1e-05
    %v127 = vadd.f32 %v119, 1e-05
    %v128 = vadd.f32 %v120, 1e-05
    %v129 = vadd.f32 %v121, 1e-05
    %v130 = vadd.f32 %v122, 1e-05
    %v131 = vrsqrt.pop %v123
    %v132 = vrsqrt.pop %v124
    %v133 = vrsqrt.pop %v125
    %v134 = vrsqrt.pop %v126
    %v135 = vrsqrt.pop %v127
    %v136 = vrsqrt.pop %v128
    %v137 = vrsqrt.pop %v129
    %v138 = vrsqrt.pop %v130
    %v139 = vmul.f32 %v75, %v131
    %v140 = vmul.f32 %v76, %v132
    %v141 = vmul.f32 %v77, %v133
    %v142 = vmul.f32 %v78, %v134
    %v143 = vmul.f32 %v79, %v135
    %v144 = vmul.f32 %v80, %v136
    %v145 = vmul.f32 %v81, %v137
    %v146 = vmul.f32 %v82, %v138
    %v147 = vld [vmem:[%s1] sm:$0x1]
    %v149 = vlaneseq
    %v150 = vshrl.u32 %v149, 7
    %v151 = vsub.s32 0, %v150
    %v152 = vrot.slane %v147, %v151
    %v154 = vmul.f32 %v139, %v152
    %v155 = vmul.f32 %v140, %v152
    %v156 = vmul.f32 %v141, %v152
    %v157 = vmul.f32 %v142, %v152
    %v158 = vmul.f32 %v143, %v152
    %v159 = vmul.f32 %v144, %v152
    %v160 = vmul.f32 %v145, %v152
    %v161 = vmul.f32 %v146, %v152
    %v162 = vld [vmem:[%s2] sm:$0x1]
    %v164 = vlaneseq
    %v165 = vshrl.u32 %v164, 7
    %v166 = vsub.s32 0, %v165
    %v167 = vrot.slane %v162, %v166
    %v169 = vadd.f32 %v154, %v167
    %v170 = vadd.f32 %v155, %v167
    %v171 = vadd.f32 %v156, %v167
    %v172 = vadd.f32 %v157, %v167
    %v173 = vadd.f32 %v158, %v167
    %v174 = vadd.f32 %v159, %v167
    %v175 = vadd.f32 %v160, %v167
    %v176 = vadd.f32 %v161, %v167
    %v177 = vpack.c.bf16 %v170, %v169
    %v178 = vpack.c.bf16 %v172, %v171
    %v179 = vpack.c.bf16 %v174, %v173
    %v180 = vpack.c.bf16 %v176, %v175
    %181 = vst.msk [vmem:[#allocation2] sm:$0xff] %vm41, %v177
    %182 = vst.msk [vmem:[#allocation2 + $0x8] sm:$0xff] %vm41, %v178
    %183 = vst.msk [vmem:[#allocation2 + $0x10] sm:$0xff] %vm41, %v179
    %184 = vst.msk [vmem:[#allocation2 + $0x18] sm:$0xff] %vm41, %v180
  $region25: #{vit_forward.13} parent=0 // pred_fallthru
    _
  %v185 = vld [vmem:[#allocation2] sm:$0xff]
  %v186 = vld [vmem:[#allocation2 + $0x8] sm:$0xff]
  %v187 = vld [vmem:[#allocation2 + $0x10] sm:$0xff]
  %v188 = vld [vmem:[#allocation2 + $0x18] sm:$0xff]
  %v189 = vld [vmem:[%s3] sm:$0xf]
  %v190 = vld [vmem:[%s3 + $0x4] sm:$0xf]
  %v191 = vld [vmem:[%s3 + $0x8] sm:$0xf]
  %v192 = vld [vmem:[%s3 + $0xc] sm:$0xf]
  %v193 = vld [vmem:[%s4] sm:$0x1]
  %v195 = vlaneseq
  %v196 = vshrl.u32 %v195, 7
  %v197 = vsub.s32 0, %v196
  %v198 = vrot.slane %v193, %v197
  %v204 = vunpack.c.l.b16 %v189
  %v205 = vunpack.c.l.b16 %v190
  %v206 = vunpack.c.l.b16 %v191
  %v207 = vunpack.c.l.b16 %v192
  %v208 = vpack.c.b16 %v205, %v204
  %v209 = vpack.c.b16 %v207, %v206
  %vm212 = vcmask 261120
  %v214 = vsel %vm212, %v185, 0
  %v217 = vsel %vm212, %v186, 0
  %v220 = vsel %vm212, %v187, 0
  %v223 = vsel %vm212, %v188, 0
  %225 = vmatprep.subr.bf16.mxu0 0
  %226 = vmatpush1.bf16.msra.mxu0 %v208
  %227 = vmatprep.subr.bf16.mxu0 0
  %228 = vmatpush1.bf16.msra.mxu0 %v209
  %229 = vmatprep.subr.bf16.mxu0 0
  %230 = vmatpush1.bf16.msra.mxu0 0
  %231 = vmatprep.subr.bf16.mxu0 0
  %232 = vmatpush1.bf16.msra.mxu0 0
  %233 = vmatprep.subr.bf16.mxu0 0
  %234 = vmatpush1.bf16.msra.mxu0 0
  %235 = vmatprep.subr.bf16.mxu0 0
  %236 = vmatpush1.bf16.msra.mxu0 0
  %237 = vmatprep.subr.bf16.mxu0 0
  %238 = vmatpush1.bf16.msra.mxu0 0
  %239 = vmatprep.subr.bf16.mxu0 0
  %240 = vmatpush1.bf16.msra.mxu0 0
  %241 = vmatprep.subr.bf16.mxu0 0
  %242 = vmatpush1.bf16.msra.mxu0 0
  %243 = vmatprep.subr.bf16.mxu0 0
  %244 = vmatpush1.bf16.msra.mxu0 0
  %245 = vmatprep.subr.bf16.mxu0 0
  %246 = vmatpush1.bf16.msra.mxu0 0
  %247 = vmatprep.subr.bf16.mxu0 0
  %248 = vmatpush1.bf16.msra.mxu0 0
  %249 = vmatprep.subr.bf16.mxu0 0
  %250 = vmatpush1.bf16.msra.mxu0 0
  %251 = vmatprep.subr.bf16.mxu0 0
  %252 = vmatpush1.bf16.msra.mxu0 0
  %253 = vmatprep.subr.bf16.mxu0 0
  %254 = vmatpush1.bf16.msra.mxu0 0
  %255 = vmatprep.subr.bf16.mxu0 0
  %256 = vmatpush1.bf16.msra.mxu0 0
  %257 = vmatprep.mubr.bf16.mxu0 0
  %258 = vmatmul.mubr.bf16.gmra.mrb[0].mxu0 %v214
  %v259 = vpop.f32.mrb[0].mxu0
  %v260 = vadd.f32 %v198, %v259
  %v261 = vpop.f32.mrb[0].mxu0
  %v262 = vpop.f32.mrb[0].mxu0
  %v263 = vadd.f32 %v198, %v262
  %v264 = vpop.f32.mrb[0].mxu0
  %265 = vmatprep.mubr.bf16.mxu0 0
  %266 = vmatmul.mubr.bf16.gmra.mrb[0].mxu0 %v217
  %v267 = vpop.f32.mrb[0].mxu0
  %v268 = vadd.f32 %v198, %v267
  %v269 = vpop.f32.mrb[0].mxu0
  %v270 = vpop.f32.mrb[0].mxu0
  %v271 = vadd.f32 %v198, %v270
  %v272 = vpop.f32.mrb[0].mxu0
  %273 = vmatprep.mubr.bf16.mxu0 0
  %274 = vmatmul.mubr.bf16.gmra.mrb[0].mxu0 %v220
  %v275 = vpop.f32.mrb[0].mxu0
  %v276 = vadd.f32 %v198, %v275
  %v277 = vpop.f32.mrb[0].mxu0
  %v278 = vpop.f32.mrb[0].mxu0
  %v279 = vadd.f32 %v198, %v278
  %v280 = vpop.f32.mrb[0].mxu0
  %281 = vmatprep.mubr.bf16.mxu0 0
  %282 = vmatmul.mubr.bf16.gmra.mrb[0].mxu0 %v223
  %v283 = vpop.f32.mrb[0].mxu0
  %v284 = vadd.f32 %v198, %v283
  %v285 = vpop.f32.mrb[0].mxu0
  %v286 = vpop.f32.mrb[0].mxu0
  %v287 = vadd.f32 %v198, %v286
  %v288 = vpop.f32.mrb[0].mxu0
  %289 = vdwg.mxu0
  %v290 = vpack.c.bf16 %v263, %v260
  %v291 = vpack.c.bf16 %v271, %v268
  %v292 = vpack.c.bf16 %v279, %v276
  %v293 = vpack.c.bf16 %v287, %v284
  %v298 = vunpack.c.l.b16 %v290
  %v299 = vunpack.c.h.b16 %v290
  %v300 = vunpack.c.l.b16 %v291
  %v301 = vunpack.c.h.b16 %v291
  %v302 = vunpack.c.l.b16 %v292
  %v303 = vunpack.c.h.b16 %v292
  %v304 = vunpack.c.l.b16 %v293
  %v305 = vunpack.c.h.b16 %v293
  %v306 = vpack.c.b16 %v298, %v298
  %v307 = vpack.c.b16 %v299, %v299
  %v308 = vpack.c.b16 %v300, %v300
  %v309 = vpack.c.b16 %v301, %v301
  %v310 = vpack.c.b16 %v302, %v302
  %v311 = vpack.c.b16 %v303, %v303
  %v312 = vpack.c.b16 %v304, %v304
  %v313 = vpack.c.b16 %v305, %v305
  %322 = vst [vmem:[%s5] sm:$0xf] %v306
  %323 = vst [vmem:[%s5 + $0x4] sm:$0xf] %v307
  %324 = vst [vmem:[%s5 + $0x8] sm:$0xf] %v308
  %325 = vst [vmem:[%s5 + $0xc] sm:$0xf] %v309
  %326 = vst [vmem:[%s5 + $0x10] sm:$0xf] %v310
  %327 = vst [vmem:[%s5 + $0x14] sm:$0xf] %v311
  %328 = vst [vmem:[%s5 + $0x18] sm:$0xf] %v312
  %329 = vst [vmem:[%s5 + $0x1c] sm:$0xf] %v313
  // Predicated region
  $region26: #{vit_forward.13} parent=0 // pred_check
    _
  $region27: #{vit_forward.13} parent=0 // pred_check_branch
    %331 = sbr.rel (0) target = $region29
  $region28: #{vit_forward.13} parent=0 // pred_region
    _
  $region29: #{vit_forward.13} parent=0 // pred_fallthru
    _
  // Predicated region
  $region30: #{vit_forward.13} parent=0 // pred_check
    _
  $region31: #{vit_forward.13} parent=0 // pred_check_branch
    %333 = sbr.rel (0) target = $region33
  $region32: #{vit_forward.13} parent=0 // pred_region
    _
  $region33: #{vit_forward.13} parent=0 // pred_fallthru
    _

// kernel: vit_forward.12
$region0: #{vit_forward.12}
  #allocation0 [shape = 'u32[]', space=smem, size = 0x4, offset = 0x4, fixed_abs, tag = 'smem constant byte address 0x4 - core index']
  #allocation1 [shape = 'u32[144,128]{1,0:T(1,128)}', space=vmem, size = 0x12000, scoped, tag = 'internal scratch']
  #allocation2 [shape = 'f32[32,128]{1,0:T(8,128)}', space=vmem, size = 0x4000, scoped, tag = 'scratch operand']
  %s0 = inlined_call_operand.vmem [shape: bf16[32,128], index: 0, kind: input, shape index: {}]
  %s1 = inlined_call_operand.vmem [shape: bf16[128,128], index: 1, kind: input, shape index: {}]
  %s2 = inlined_call_operand.vmem [shape: f32[1,128], index: 2, kind: input, shape index: {}]
  %s3 = inlined_call_operand.vmem [shape: bf16[32,128], index: 3, kind: output, shape index: {}]
  %s4 = sld [smem:[#allocation0]]
  $region30: #{vit_forward.12} parent=0
    _
  %s6 = ssub.s32 1, %s4
  %s7 = scalar_select 0, %s6, %s4
  // Predicated region
  $region2: #{vit_forward.12} parent=0 // pred_check
    _
  $region3: #{vit_forward.12} parent=0 // pred_check_branch
    %9 = sbr.rel (0) target = $region5
  $region4: #{vit_forward.12} parent=0 // pred_region
    _
  $region5: #{vit_forward.12} parent=0 // pred_fallthru
    _
  // Predicated region
  $region6: #{vit_forward.12} parent=0 // pred_check
    _
  $region7: #{vit_forward.12} parent=0 // pred_check_branch
    %11 = sbr.rel (0) target = $region9
  $region8: #{vit_forward.12} parent=0 // pred_region
    _
  $region9: #{vit_forward.12} parent=0 // pred_fallthru
    _
  // Predicated region
  $region10: #{vit_forward.12} parent=0 // pred_check
    _
  $region11: #{vit_forward.12} parent=0 // pred_check_branch
    %13 = sbr.rel (0) target = $region13
  $region12: #{vit_forward.12} parent=0 // pred_region
    _
  $region13: #{vit_forward.12} parent=0 // pred_fallthru
    _
  %p15 = scmp.eq.s32.totalorder 0, 0
  // Predicated region
  $region14: #{vit_forward.12} parent=0 // pred_check
    %p16 = pneg %p15
  $region15: #{vit_forward.12} parent=0 // pred_check_branch
    %18 = sbr.rel (%p16) target = $region17
  $region16: #{vit_forward.12} parent=0 // pred_region
    %v19 = vld [vmem:[%s2] sm:$0x1]
    %v21 = vlaneseq
    %v22 = vshrl.u32 %v21, 7
    %v23 = vsub.s32 0, %v22
    %v24 = vrot.slane %v19, %v23
    %26 = vst [vmem:[#allocation2] sm:$0xff] %v24
    %27 = vst [vmem:[#allocation2 + $0x8] sm:$0xff] %v24
    %28 = vst [vmem:[#allocation2 + $0x10] sm:$0xff] %v24
    %29 = vst [vmem:[#allocation2 + $0x18] sm:$0xff] %v24
  $region17: #{vit_forward.12} parent=0 // pred_fallthru
    _
  %v30 = vld [vmem:[#allocation2] sm:$0xff]
  %v31 = vld [vmem:[#allocation2 + $0x8] sm:$0xff]
  %v32 = vld [vmem:[#allocation2 + $0x10] sm:$0xff]
  %v33 = vld [vmem:[#allocation2 + $0x18] sm:$0xff]
  %v34 = vld [vmem:[%s0] sm:$0xf]
  %v35 = vld [vmem:[%s0 + $0x4] sm:$0xf]
  %v36 = vld [vmem:[%s0 + $0x8] sm:$0xf]
  %v37 = vld [vmem:[%s0 + $0xc] sm:$0xf]
  %v38 = vld [vmem:[%s1] sm:$0xf]
  %v39 = vld [vmem:[%s1 + $0x4] sm:$0xf]
  %v40 = vld [vmem:[%s1 + $0x8] sm:$0xf]
  %v41 = vld [vmem:[%s1 + $0xc] sm:$0xf]
  %v42 = vld [vmem:[%s1 + $0x10] sm:$0xf]
  %v43 = vld [vmem:[%s1 + $0x14] sm:$0xf]
  %v44 = vld [vmem:[%s1 + $0x18] sm:$0xf]
  %v45 = vld [vmem:[%s1 + $0x1c] sm:$0xf]
  %v46 = vld [vmem:[%s1 + $0x20] sm:$0xf]
  %v47 = vld [vmem:[%s1 + $0x24] sm:$0xf]
  %v48 = vld [vmem:[%s1 + $0x28] sm:$0xf]
  %v49 = vld [vmem:[%s1 + $0x2c] sm:$0xf]
  %v50 = vld [vmem:[%s1 + $0x30] sm:$0xf]
  %v51 = vld [vmem:[%s1 + $0x34] sm:$0xf]
  %v52 = vld [vmem:[%s1 + $0x38] sm:$0xf]
  %v53 = vld [vmem:[%s1 + $0x3c] sm:$0xf]
  %v58 = vunpack.c.l.b16 %v34
  %v59 = vunpack.c.l.b16 %v35
  %v60 = vunpack.c.l.b16 %v36
  %v61 = vunpack.c.l.b16 %v37
  %v62 = vpack.c.b16 %v59, %v58
  %v63 = vpack.c.b16 %v61, %v60
  %v82 = vunpack.c.l.b16 %v38
  %v83 = vunpack.c.l.b16 %v39
  %v84 = vunpack.c.l.b16 %v40
  %v85 = vunpack.c.l.b16 %v41
  %v86 = vunpack.c.l.b16 %v42
  %v87 = vunpack.c.l.b16 %v43
  %v88 = vunpack.c.l.b16 %v44
  %v89 = vunpack.c.l.b16 %v45
  %v90 = vunpack.c.l.b16 %v46
  %v91 = vunpack.c.l.b16 %v47
  %v92 = vunpack.c.l.b16 %v48
  %v93 = vunpack.c.l.b16 %v49
  %v94 = vunpack.c.l.b16 %v50
  %v95 = vunpack.c.l.b16 %v51
  %v96 = vunpack.c.l.b16 %v52
  %v97 = vunpack.c.l.b16 %v53
  %v98 = vpack.c.b16 %v83, %v82
  %v99 = vpack.c.b16 %v85, %v84
  %v100 = vpack.c.b16 %v87, %v86
  %v101 = vpack.c.b16 %v89, %v88
  %v102 = vpack.c.b16 %v91, %v90
  %v103 = vpack.c.b16 %v93, %v92
  %v104 = vpack.c.b16 %v95, %v94
  %v105 = vpack.c.b16 %v97, %v96
  %114 = vmatprep.subr.bf16.mxu0 0
  %115 = vmatpush1.bf16.msra.mxu0 %v98
  %116 = vmatprep.subr.bf16.mxu0 0
  %117 = vmatpush1.bf16.msra.mxu0 %v99
  %118 = vmatprep.subr.bf16.mxu0 0
  %119 = vmatpush1.bf16.msra.mxu0 %v100
  %120 = vmatprep.subr.bf16.mxu0 0
  %121 = vmatpush1.bf16.msra.mxu0 %v101
  %122 = vmatprep.subr.bf16.mxu0 0
  %123 = vmatpush1.bf16.msra.mxu0 %v102
  %124 = vmatprep.subr.bf16.mxu0 0
  %125 = vmatpush1.bf16.msra.mxu0 %v103
  %126 = vmatprep.subr.bf16.mxu0 0
  %127 = vmatpush1.bf16.msra.mxu0 %v104
  %128 = vmatprep.subr.bf16.mxu0 0
  %129 = vmatpush1.bf16.msra.mxu0 %v105
  %130 = vmatprep.subr.bf16.mxu0 0
  %131 = vmatpush1.bf16.msra.mxu0 0
  %132 = vmatprep.subr.bf16.mxu0 0
  %133 = vmatpush1.bf16.msra.mxu0 0
  %134 = vmatprep.subr.bf16.mxu0 0
  %135 = vmatpush1.bf16.msra.mxu0 0
  %136 = vmatprep.subr.bf16.mxu0 0
  %137 = vmatpush1.bf16.msra.mxu0 0
  %138 = vmatprep.subr.bf16.mxu0 0
  %139 = vmatpush1.bf16.msra.mxu0 0
  %140 = vmatprep.subr.bf16.mxu0 0
  %141 = vmatpush1.bf16.msra.mxu0 0
  %142 = vmatprep.subr.bf16.mxu0 0
  %143 = vmatpush1.bf16.msra.mxu0 0
  %144 = vmatprep.subr.bf16.mxu0 0
  %145 = vmatpush1.bf16.msra.mxu0 0
  %146 = vmatprep.mubr.bf16.mxu0 0
  %147 = vmatmul.mubr.bf16.gmra.mrb[0].mxu0 %v62
  %v148 = vpop.f32.mrb[0].mxu0
  %v149 = vadd.f32 0.0, %v148
  %v150 = vpop.f32.mrb[0].mxu0
  %v151 = vpop.f32.mrb[0].mxu0
  %v152 = vadd.f32 0.0, %v151
  %v153 = vpop.f32.mrb[0].mxu0
  %154 = vmatprep.mubr.bf16.mxu0 0
  %155 = vmatmul.mubr.bf16.gmra.mrb[0].mxu0 %v63
  %v156 = vpop.f32.mrb[0].mxu0
  %v157 = vadd.f32 0.0, %v156
  %v158 = vpop.f32.mrb[0].mxu0
  %v159 = vpop.f32.mrb[0].mxu0
  %v160 = vadd.f32 0.0, %v159
  %v161 = vpop.f32.mrb[0].mxu0
  %162 = vdwg.mxu0
  %v163 = vadd.f32 %v30, %v149
  %v164 = vadd.f32 %v31, %v152
  %v165 = vadd.f32 %v32, %v157
  %v166 = vadd.f32 %v33, %v160
  %167 = vst [vmem:[#allocation2] sm:$0xff] %v163
  %168 = vst [vmem:[#allocation2 + $0x8] sm:$0xff] %v164
  %169 = vst [vmem:[#allocation2 + $0x10] sm:$0xff] %v165
  %170 = vst [vmem:[#allocation2 + $0x18] sm:$0xff] %v166
  // Predicated region
  $region18: #{vit_forward.12} parent=0 // pred_check
    %p171 = pneg %p15
  $region19: #{vit_forward.12} parent=0 // pred_check_branch
    %173 = sbr.rel (%p171) target = $region21
  $region20: #{vit_forward.12} parent=0 // pred_region
    %v174 = vld [vmem:[#allocation2] sm:$0xff]
    %v175 = vld [vmem:[#allocation2 + $0x8] sm:$0xff]
    %v176 = vld [vmem:[#allocation2 + $0x10] sm:$0xff]
    %v177 = vld [vmem:[#allocation2 + $0x18] sm:$0xff]
    %v178 = vpack.c.bf16 %v175, %v174
    %v179 = vpack.c.bf16 %v177, %v176
    %v182 = vunpack.c.l.b16 %v178
    %v183 = vunpack.c.h.b16 %v178
    %v184 = vunpack.c.l.b16 %v179
    %v185 = vunpack.c.h.b16 %v179
    %v186 = vpack.c.b16 %v182, %v182
    %v187 = vpack.c.b16 %v183, %v183
    %v188 = vpack.c.b16 %v184, %v184
    %v189 = vpack.c.b16 %v185, %v185
    %194 = vst [vmem:[%s3] sm:$0xf] %v186
    %195 = vst [vmem:[%s3 + $0x4] sm:$0xf] %v187
    %196 = vst [vmem:[%s3 + $0x8] sm:$0xf] %v188
    %197 = vst [vmem:[%s3 + $0xc] sm:$0xf] %v189
  $region21: #{vit_forward.12} parent=0 // pred_fallthru
    _
  // Predicated region
  $region22: #{vit_forward.12} parent=0 // pred_check
    _
  $region23: #{vit_forward.12} parent=0 // pred_check_branch
    %199 = sbr.rel (0) target = $region25
  $region24: #{vit_forward.12} parent=0 // pred_region
    _
  $region25: #{vit_forward.12} parent=0 // pred_fallthru
    _
  // Predicated region
  $region26: #{vit_forward.12} parent=0 // pred_check
    _
  $region27: #{vit_forward.12} parent=0 // pred_check_branch
    %201 = sbr.rel (0) target = $region29
  $region28: #{vit_forward.12} parent=0 // pred_region
    _
  $region29: #{vit_forward.12} parent=0 // pred_fallthru
    _

// kernel: vit_forward.14
$region0: #{vit_forward.14}
  #allocation0 [shape = 'u32[]', space=smem, size = 0x4, offset = 0x4, fixed_abs, tag = 'smem constant byte address 0x4 - core index']
  #allocation1 [shape = 'u32[144,128]{1,0:T(1,128)}', space=vmem, size = 0x12000, scoped, tag = 'internal scratch']
  %s0 = inlined_call_operand.vmem [shape: bf16[2,32,96], index: 0, kind: input, shape index: {}]
  %s1 = inlined_call_operand.vmem [shape: bf16[2,32,32], index: 1, kind: output, shape index: {}]
  %s2 = sld [smem:[#allocation0]]
  $region37: #{vit_forward.14} parent=0
    _
  %s4 = ssub.s32 1, %s2
  %s5 = scalar_select 0, %s4, %s2
  loop: start=0, step=1, limit=4
  $region2: #{vit_forward.14} parent=0 // loop_pre_header
    _
  $region3: #{vit_forward.14} parent=0 // loop_header
    %s7 = sphi 0, %s11
    %p8 = scmp.ge.s32.totalorder %s7, 4
    %s17 = sphi 0, %s19
    %s20 = sphi 0, %s17
    %s21 = sphi 0, %s20
    %s37 = sphi 0, %s21
    %s43 = sphi 0, %s45
    %s46 = sphi 0, %s43
    %s47 = sphi 0, %s46
    %s63 = sphi 0, %s47
  $region4: #{vit_forward.14} parent=0 // loop_header_branch
    %10 = sbr.rel (%p8) target = $region8
  $region5: #{vit_forward.14} parent=0 // loop_body
    %s12 = ssub.s32 %s7, 1
    %s13 = ssub.s32 %s7, 2
    %s14 = sadd.s32 %s7, 1
    %s15 = ssub.s32 %s7, %s14
    %p16 = scmp.eq.s32.totalorder %s15, 0
    %s18 = sadd.s32 %s17, 1
    %s19 = scalar_select %p16, %s17, %s18
    %p22 = pneg %p16
    %p23 = scmp.eq.s32.totalorder %s7, 1
    %p24 = por %p22, %p23
    %p25 = scmp.ne.s32.totalorder %s17, %s20
    %p26 = scmp.eq.s32.totalorder %s7, 0
    %p27 = por %p25, %p26
    %p28 = scmp.ne.s32.totalorder %s17, %s20
    %p29 = scmp.eq.s32.totalorder %s12, 1
    %p30 = por %p28, %p29
    %p31 = scmp.ne.s32.totalorder %s20, %s21
    %p32 = scmp.eq.s32.totalorder %s12, 0
    %p33 = por %p31, %p32
    %p34 = scmp.ne.s32.totalorder %s20, %s21
    %p35 = scmp.eq.s32.totalorder %s13, 1
    %p36 = por %p34, %p35
    %p38 = scmp.ne.s32.totalorder %s21, %s37
    %p39 = scmp.eq.s32.totalorder %s13, 0
    %p40 = por %p38, %p39
    %s41 = ssub.s32 %s7, %s14
    %p42 = scmp.eq.s32.totalorder %s41, 0
    %s44 = sadd.s32 %s43, 1
    %s45 = scalar_select %p42, %s43, %s44
    %p48 = pneg %p42
    %p49 = scmp.eq.s32.totalorder %s7, 1
    %p50 = por %p48, %p49
    %p51 = scmp.ne.s32.totalorder %s43, %s46
    %p52 = scmp.eq.s32.totalorder %s7, 0
    %p53 = por %p51, %p52
    %p54 = scmp.ne.s32.totalorder %s43, %s46
    %p55 = scmp.eq.s32.totalorder %s12, 1
    %p56 = por %p54, %p55
    %p57 = scmp.ne.s32.totalorder %s46, %s47
    %p58 = scmp.eq.s32.totalorder %s12, 0
    %p59 = por %p57, %p58
    %p60 = scmp.ne.s32.totalorder %s46, %s47
    %p61 = scmp.eq.s32.totalorder %s13, 1
    %p62 = por %p60, %p61
    %p64 = scmp.ne.s32.totalorder %s47, %s63
    %p65 = scmp.eq.s32.totalorder %s13, 0
    %p66 = por %p64, %p65
    %p67 = scmp.le.s32.totalorder 1, %s7
    %p68 = scmp.lt.s32.totalorder %s7, 3
    %p69 = pnand %p67, %p68
    %p70 = pneg %p69
    // Predicated region
    $region9: #{vit_forward.14} parent=5 // pred_check
      _
    $region10: #{vit_forward.14} parent=5 // pred_check_branch
      %72 = sbr.rel (%p69) target = $region12
    $region11: #{vit_forward.14} parent=5 // pred_region
      %s73 = ssub.s32 %s7, 1
    $region12: #{vit_forward.14} parent=5 // pred_fallthru
      _
    %p74 = scmp.lt.s32.totalorder %s7, 2
    // Predicated region
    $region13: #{vit_forward.14} parent=5 // pred_check
      %p75 = pneg %p74
    $region14: #{vit_forward.14} parent=5 // pred_check_branch
      %77 = sbr.rel (%p75) target = $region16
    $region15: #{vit_forward.14} parent=5 // pred_region
      // Predicated region
      $region17: #{vit_forward.14} parent=15 // pred_check
        %p78 = pneg %p27
      $region18: #{vit_forward.14} parent=15 // pred_check_branch
        %80 = sbr.rel (%p78) target = $region20
      $region19: #{vit_forward.14} parent=15 // pred_region
        %p81 = scmp.lt.s32.totalorder %s7, 1
        %s82 = scalar_select %p81, %s7, 1
        %s83 = smul.addr %s82, 4
        %s84 = smul.addr %s83, 4
        %s85 = scalar_lea.vmem %s0, %s84
      $region20: #{vit_forward.14} parent=15 // pred_fallthru
        _
    $region16: #{vit_forward.14} parent=5 // pred_fallthru
      _
    %p86 = scmp.le.s32.totalorder 1, %s7
    %p87 = scmp.lt.s32.totalorder %s7, 3
    %p88 = pnand %p86, %p87
    %p89 = pneg %p88
    // Predicated region
    $region21: #{vit_forward.14} parent=5 // pred_check
      _
    $region22: #{vit_forward.14} parent=5 // pred_check_branch
      %91 = sbr.rel (%p88) target = $region24
    $region23: #{vit_forward.14} parent=5 // pred_region
      %s92 = ssub.s32 %s7, 1
      %p93 = scmp.lt.s32.totalorder %s12, 1
      %s94 = scalar_select %p93, %s12, 1
      %s95 = smul.addr %s94, 4
      %s96 = smul.addr %s95, 4
      %s97 = scalar_lea.vmem %s0, %s96
      %p98 = pneg %p33
      %p99 = pneg %p30
      %p100 = pneg %p59
      %p101 = pneg %p56
      %p102 = scmp.lt.s32.totalorder %s12, 1
      %s103 = scalar_select %p102, %s12, 1
      %s104 = smul.addr %s103, 4
      %s105 = smul.addr %s104, 4
      %s106 = scalar_lea.vmem %s1, %s105
      %p107 = scmp.lt.s32.totalorder %s12, 1
      %s108 = scalar_select %p107, %s12, 1
      %s109 = smul.addr %s108, 4
      %s110 = smul.addr %s109, 4
      %s111 = scalar_lea.vmem %s0, %s110
      %p112 = scmp.lt.s32.totalorder %s12, 1
      %s113 = scalar_select %p112, %s12, 1
      %s114 = smul.addr %s113, 4
      %s115 = smul.addr %s114, 4
      %s116 = scalar_lea.vmem %s1, %s115
      %v118 = vld [vmem:[%s111] sm:$0xf]
      %v119 = vld [vmem:[%s111 + $0x4] sm:$0xf]
      %v120 = vld [vmem:[%s111 + $0x8] sm:$0xf]
      %v121 = vld [vmem:[%s111 + $0xc] sm:$0xf]
      %v122 = vlaneseq
      %v123 = vand.u32 %v122, 127
      %vm124 = vcmp.lt.s32.totalorder %v123, 17
      %v129 = vunpack.c.l.b16 %v118
      %v130 = vunpack.c.l.b16 %v119
      %v131 = vunpack.c.l.b16 %v120
      %v132 = vunpack.c.l.b16 %v121
      %v133 = vpack.c.b16 %v130, %v129
      %v134 = vpack.c.b16 %v132, %v131
      %135 = vrot.lane.b32.xlu0 %v133, 96
      %v136 = vpop.permute.xlu0 %135
      %137 = vrot.lane.b32.xlu0 %v134, 96
      %v138 = vpop.permute.xlu0 %137
      %vm139 = vcmask 64512
      %v141 = vsel %vm139, %v133, 0
      %v144 = vsel %vm139, %v134, 0
      %v147 = vsel %vm139, %v136, 0
      %v150 = vsel %vm139, %v138, 0
      %152 = vmatprep.subr.bf16.mxu0 0
      %153 = vmatpush1.bf16.xpose.msra.mxu0 %v147
      %154 = vmatprep.subr.bf16.mxu0 0
      %155 = vmatpush1.bf16.xpose.msra.mxu0 %v150
      %156 = vmatprep.subr.bf16.mxu0 0
      %157 = vmatpush1.bf16.xpose.msra.mxu0 0
      %158 = vmatprep.subr.bf16.mxu0 0
      %159 = vmatpush1.bf16.xpose.msra.mxu0 0
      %160 = vmatprep.subr.bf16.mxu0 0
      %161 = vmatpush1.bf16.xpose.msra.mxu0 0
      %162 = vmatprep.subr.bf16.mxu0 0
      %163 = vmatpush1.bf16.xpose.msra.mxu0 0
      %164 = vmatprep.subr.bf16.mxu0 0
      %165 = vmatpush1.bf16.xpose.msra.mxu0 0
      %166 = vmatprep.subr.bf16.mxu0 0
      %167 = vmatpush1.bf16.xpose.msra.mxu0 0
      %168 = vmatprep.subr.bf16.mxu0 0
      %169 = vmatpush1.bf16.xpose.msra.mxu0 0
      %170 = vmatprep.subr.bf16.mxu0 0
      %171 = vmatpush1.bf16.xpose.msra.mxu0 0
      %172 = vmatprep.subr.bf16.mxu0 0
      %173 = vmatpush1.bf16.xpose.msra.mxu0 0
      %174 = vmatprep.subr.bf16.mxu0 0
      %175 = vmatpush1.bf16.xpose.msra.mxu0 0
      %176 = vmatprep.subr.bf16.mxu0 0
      %177 = vmatpush1.bf16.xpose.msra.mxu0 0
      %178 = vmatprep.subr.bf16.mxu0 0
      %179 = vmatpush1.bf16.xpose.msra.mxu0 0
      %180 = vmatprep.subr.bf16.mxu0 0
      %181 = vmatpush1.bf16.xpose.msra.mxu0 0
      %182 = vmatprep.subr.bf16.mxu0 0
      %183 = vmatpush1.bf16.xpose.msra.mxu0 0
      %184 = vmatprep.mubr.bf16.mxu0 0
      %185 = vmatmul.mubr.bf16.gmra.mrb[0].mxu0 %v141
      %v186 = vpop.f32.mrb[0].mxu0
      %v187 = vadd.f32 0.0, %v186
      %v188 = vpop.f32.mrb[0].mxu0
      %v189 = vpop.f32.mrb[0].mxu0
      %v190 = vadd.f32 0.0, %v189
      %v191 = vpop.f32.mrb[0].mxu0
      %192 = vmatprep.mubr.bf16.mxu0 0
      %193 = vmatmul.mubr.bf16.gmra.mrb[0].mxu0 %v144
      %v194 = vpop.f32.mrb[0].mxu0
      %v195 = vadd.f32 0.0, %v194
      %v196 = vpop.f32.mrb[0].mxu0
      %v197 = vpop.f32.mrb[0].mxu0
      %v198 = vadd.f32 0.0, %v197
      %v199 = vpop.f32.mrb[0].mxu0
      %200 = vdwg.mxu0
      %v201 = vsel %vm124, %v187, -1e+30
      %v202 = vsel %vm124, %v190, -1e+30
      %v203 = vsel %vm124, %v195, -1e+30
      %v204 = vsel %vm124, %v198, -1e+30
      %vm205 = vcmask 261120
      %v206 = vsel %vm205, %v201, -inf
      %207 = vmax.xlane.f32.xlu0 %v206
      %v208 = vpop.xlane.xlu0 %207
      %v209 = vsel %vm205, %v202, -inf
      %210 = vmax.xlane.f32.xlu0 %v209
      %v211 = vpop.xlane.xlu0 %210
      %v212 = vsel %vm205, %v203, -inf
      %213 = vmax.xlane.f32.xlu0 %v212
      %v214 = vpop.xlane.xlu0 %213
      %v215 = vsel %vm205, %v204, -inf
      %216 = vmax.xlane.f32.xlu0 %v215
      %v217 = vpop.xlane.xlu0 %216
      %v218 = vsub.f32 %v201, %v208
      %v219 = vsub.f32 %v202, %v211
      %v220 = vsub.f32 %v203, %v214
      %v221 = vsub.f32 %v204, %v217
      %v222 = vmul.f32 %v218, 1.442695
      %v223 = vpow.pop %v222
      %v224 = vmul.f32 %v219, 1.442695
      %v225 = vpow.pop %v224
      %v226 = vmul.f32 %v220, 1.442695
      %v227 = vpow.pop %v226
      %v228 = vmul.f32 %v221, 1.442695
      %v229 = vpow.pop %v228
      %v230 = vsel %vm205, %v223, 0.0
      %231 = vadd.xlane.f32.xlu0 %v230
      %v232 = vpop.xlane.xlu0 %231
      %v233 = vsel %vm205, %v225, 0.0
      %234 = vadd.xlane.f32.xlu0 %v233
      %v235 = vpop.xlane.xlu0 %234
      %v236 = vsel %vm205, %v227, 0.0
      %237 = vadd.xlane.f32.xlu0 %v236
      %v238 = vpop.xlane.xlu0 %237
      %v239 = vsel %vm205, %v229, 0.0
      %240 = vadd.xlane.f32.xlu0 %v239
      %v241 = vpop.xlane.xlu0 %240
      %v242 = vrcp.pop %v232
      %v243 = vrcp.pop %v235
      %v244 = vrcp.pop %v238
      %v245 = vrcp.pop %v241
      %v246 = vmul.f32 %v223, %v242
      %v247 = vmul.f32 %v225, %v243
      %v248 = vmul.f32 %v227, %v244
      %v249 = vmul.f32 %v229, %v245
      %v250 = vpack.c.bf16 %v247, %v246
      %v251 = vpack.c.bf16 %v249, %v248
      %252 = vrot.lane.b32.xlu0 %v133, 64
      %v253 = vpop.permute.xlu0 %252
      %254 = vrot.lane.b32.xlu0 %v134, 64
      %v255 = vpop.permute.xlu0 %254
      %v259 = vsel %vm205, %v250, 0
      %v262 = vsel %vm205, %v251, 0
      %264 = vmatprep.subr.bf16.mxu0 0
      %265 = vmatpush1.bf16.msra.mxu0 %v253
      %266 = vmatprep.subr.bf16.mxu0 0
      %267 = vmatpush1.bf16.msra.mxu0 %v255
      %268 = vmatprep.subr.bf16.mxu0 0
      %269 = vmatpush1.bf16.msra.mxu0 0
      %270 = vmatprep.subr.bf16.mxu0 0
      %271 = vmatpush1.bf16.msra.mxu0 0
      %272 = vmatprep.subr.bf16.mxu0 0
      %273 = vmatpush1.bf16.msra.mxu0 0
      %274 = vmatprep.subr.bf16.mxu0 0
      %275 = vmatpush1.bf16.msra.mxu0 0
      %276 = vmatprep.subr.bf16.mxu0 0
      %277 = vmatpush1.bf16.msra.mxu0 0
      %278 = vmatprep.subr.bf16.mxu0 0
      %279 = vmatpush1.bf16.msra.mxu0 0
      %280 = vmatprep.subr.bf16.mxu0 0
      %281 = vmatpush1.bf16.msra.mxu0 0
      %282 = vmatprep.subr.bf16.mxu0 0
      %283 = vmatpush1.bf16.msra.mxu0 0
      %284 = vmatprep.subr.bf16.mxu0 0
      %285 = vmatpush1.bf16.msra.mxu0 0
      %286 = vmatprep.subr.bf16.mxu0 0
      %287 = vmatpush1.bf16.msra.mxu0 0
      %288 = vmatprep.subr.bf16.mxu0 0
      %289 = vmatpush1.bf16.msra.mxu0 0
      %290 = vmatprep.subr.bf16.mxu0 0
      %291 = vmatpush1.bf16.msra.mxu0 0
      %292 = vmatprep.subr.bf16.mxu0 0
      %293 = vmatpush1.bf16.msra.mxu0 0
      %294 = vmatprep.subr.bf16.mxu0 0
      %295 = vmatpush1.bf16.msra.mxu0 0
      %296 = vmatprep.mubr.bf16.mxu0 0
      %297 = vmatmul.mubr.bf16.gmra.mrb[0].mxu0 %v259
      %v298 = vpop.f32.mrb[0].mxu0
      %v299 = vadd.f32 0.0, %v298
      %v300 = vpop.f32.mrb[0].mxu0
      %v301 = vpop.f32.mrb[0].mxu0
      %v302 = vadd.f32 0.0, %v301
      %v303 = vpop.f32.mrb[0].mxu0
      %304 = vmatprep.mubr.bf16.mxu0 0
      %305 = vmatmul.mubr.bf16.gmra.mrb[0].mxu0 %v262
      %v306 = vpop.f32.mrb[0].mxu0
      %v307 = vadd.f32 0.0, %v306
      %v308 = vpop.f32.mrb[0].mxu0
      %v309 = vpop.f32.mrb[0].mxu0
      %v310 = vadd.f32 0.0, %v309
      %v311 = vpop.f32.mrb[0].mxu0
      %312 = vdwg.mxu0
      %v313 = vpack.c.bf16 %v302, %v299
      %v314 = vpack.c.bf16 %v310, %v307
      %v317 = vunpack.c.l.b16 %v313
      %v318 = vunpack.c.h.b16 %v313
      %v319 = vunpack.c.l.b16 %v314
      %v320 = vunpack.c.h.b16 %v314
      %v321 = vpack.c.b16 %v317, %v317
      %v322 = vpack.c.b16 %v318, %v318
      %v323 = vpack.c.b16 %v319, %v319
      %v324 = vpack.c.b16 %v320, %v320
      %vm329 = vcmask 60416
      %330 = vst.msk [vmem:[%s116] sm:$0xf] %vm329, %v321
      %331 = vst.msk [vmem:[%s116 + $0x4] sm:$0xf] %vm329, %v322
      %332 = vst.msk [vmem:[%s116 + $0x8] sm:$0xf] %vm329, %v323
      %333 = vst.msk [vmem:[%s116 + $0xc] sm:$0xf] %vm329, %v324
      %334 = vrot.lane.b32.xlu0 %v133, 120
      %v335 = vpop.permute.xlu0 %334
      %336 = vrot.lane.b32.xlu0 %v134, 120
      %v337 = vpop.permute.xlu0 %336
      %338 = vrot.lane.b32.xlu0 %v133, 88
      %v339 = vpop.permute.xlu0 %338
      %340 = vrot.lane.b32.xlu0 %v134, 88
      %v341 = vpop.permute.xlu0 %340
      %v343 = vsel %vm139, %v335, 0
      %v346 = vsel %vm139, %v337, 0
      %v349 = vsel %vm139, %v339, 0
      %v352 = vsel %vm139, %v341, 0
      %354 = vmatprep.subr.bf16.mxu0 0
      %355 = vmatpush1.bf16.xpose.msra.mxu0 %v349
      %356 = vmatprep.subr.bf16.mxu0 0
      %357 = vmatpush1.bf16.xpose.msra.mxu0 %v352
      %358 = vmatprep.subr.bf16.mxu0 0
      %359 = vmatpush1.bf16.xpose.msra.mxu0 0
      %360 = vmatprep.subr.bf16.mxu0 0
      %361 = vmatpush1.bf16.xpose.msra.mxu0 0
      %362 = vmatprep.subr.bf16.mxu0 0
      %363 = vmatpush1.bf16.xpose.msra.mxu0 0
      %364 = vmatprep.subr.bf16.mxu0 0
      %365 = vmatpush1.bf16.xpose.msra.mxu0 0
      %366 = vmatprep.subr.bf16.mxu0 0
      %367 = vmatpush1.bf16.xpose.msra.mxu0 0
      %368 = vmatprep.subr.bf16.mxu0 0
      %369 = vmatpush1.bf16.xpose.msra.mxu0 0
      %370 = vmatprep.subr.bf16.mxu0 0
      %371 = vmatpush1.bf16.xpose.msra.mxu0 0
      %372 = vmatprep.subr.bf16.mxu0 0
      %373 = vmatpush1.bf16.xpose.msra.mxu0 0
      %374 = vmatprep.subr.bf16.mxu0 0
      %375 = vmatpush1.bf16.xpose.msra.mxu0 0
      %376 = vmatprep.subr.bf16.mxu0 0
      %377 = vmatpush1.bf16.xpose.msra.mxu0 0
      %378 = vmatprep.subr.bf16.mxu0 0
      %379 = vmatpush1.bf16.xpose.msra.mxu0 0
      %380 = vmatprep.subr.bf16.mxu0 0
      %381 = vmatpush1.bf16.xpose.msra.mxu0 0
      %382 = vmatprep.subr.bf16.mxu0 0
      %383 = vmatpush1.bf16.xpose.msra.mxu0 0
      %384 = vmatprep.subr.bf16.mxu0 0
      %385 = vmatpush1.bf16.xpose.msra.mxu0 0
      %386 = vmatprep.mubr.bf16.mxu0 0
      %387 = vmatmul.mubr.bf16.gmra.mrb[0].mxu0 %v343
      %v388 = vpop.f32.mrb[0].mxu0
      %v389 = vadd.f32 0.0, %v388
      %v390 = vpop.f32.mrb[0].mxu0
      %v391 = vpop.f32.mrb[0].mxu0
      %v392 = vadd.f32 0.0, %v391
      %v393 = vpop.f32.mrb[0].mxu0
      %394 = vmatprep.mubr.bf16.mxu0 0
      %395 = vmatmul.mubr.bf16.gmra.mrb[0].mxu0 %v346
      %v396 = vpop.f32.mrb[0].mxu0
      %v397 = vadd.f32 0.0, %v396
      %v398 = vpop.f32.mrb[0].mxu0
      %v399 = vpop.f32.mrb[0].mxu0
      %v400 = vadd.f32 0.0, %v399
      %v401 = vpop.f32.mrb[0].mxu0
      %402 = vdwg.mxu0
      %v403 = vsel %vm124, %v389, -1e+30
      %v404 = vsel %vm124, %v392, -1e+30
      %v405 = vsel %vm124, %v397, -1e+30
      %v406 = vsel %vm124, %v400, -1e+30
      %v407 = vsel %vm205, %v403, -inf
      %408 = vmax.xlane.f32.xlu0 %v407
      %v409 = vpop.xlane.xlu0 %408
      %v410 = vsel %vm205, %v404, -inf
      %411 = vmax.xlane.f32.xlu0 %v410
      %v412 = vpop.xlane.xlu0 %411
      %v413 = vsel %vm205, %v405, -inf
      %414 = vmax.xlane.f32.xlu0 %v413
      %v415 = vpop.xlane.xlu0 %414
      %v416 = vsel %vm205, %v406, -inf
      %417 = vmax.xlane.f32.xlu0 %v416
      %v418 = vpop.xlane.xlu0 %417
      %v419 = vsub.f32 %v403, %v409
      %v420 = vsub.f32 %v404, %v412
      %v421 = vsub.f32 %v405, %v415
      %v422 = vsub.f32 %v406, %v418
      %v423 = vmul.f32 %v419, 1.442695
      %v424 = vpow.pop %v423
      %v425 = vmul.f32 %v420, 1.442695
      %v426 = vpow.pop %v425
      %v427 = vmul.f32 %v421, 1.442695
      %v428 = vpow.pop %v427
      %v429 = vmul.f32 %v422, 1.442695
      %v430 = vpow.pop %v429
      %v431 = vsel %vm205, %v424, 0.0
      %432 = vadd.xlane.f32.xlu0 %v431
      %v433 = vpop.xlane.xlu0 %432
      %v434 = vsel %vm205, %v426, 0.0
      %435 = vadd.xlane.f32.xlu0 %v434
      %v436 = vpop.xlane.xlu0 %435
      %v437 = vsel %vm205, %v428, 0.0
      %438 = vadd.xlane.f32.xlu0 %v437
      %v439 = vpop.xlane.xlu0 %438
      %v440 = vsel %vm205, %v430, 0.0
      %441 = vadd.xlane.f32.xlu0 %v440
      %v442 = vpop.xlane.xlu0 %441
      %v443 = vrcp.pop %v433
      %v444 = vrcp.pop %v436
      %v445 = vrcp.pop %v439
      %v446 = vrcp.pop %v442
      %v447 = vmul.f32 %v424, %v443
      %v448 = vmul.f32 %v426, %v444
      %v449 = vmul.f32 %v428, %v445
      %v450 = vmul.f32 %v430, %v446
      %v451 = vpack.c.bf16 %v448, %v447
      %v452 = vpack.c.bf16 %v450, %v449
      %453 = vrot.lane.b32.xlu0 %v133, 56
      %v454 = vpop.permute.xlu0 %453
      %455 = vrot.lane.b32.xlu0 %v134, 56
      %v456 = vpop.permute.xlu0 %455
      %v460 = vsel %vm205, %v451, 0
      %v463 = vsel %vm205, %v452, 0
      %465 = vmatprep.subr.bf16.mxu0 0
      %466 = vmatpush1.bf16.msra.mxu0 %v454
      %467 = vmatprep.subr.bf16.mxu0 0
      %468 = vmatpush1.bf16.msra.mxu0 %v456
      %469 = vmatprep.subr.bf16.mxu0 0
      %470 = vmatpush1.bf16.msra.mxu0 0
      %471 = vmatprep.subr.bf16.mxu0 0
      %472 = vmatpush1.bf16.msra.mxu0 0
      %473 = vmatprep.subr.bf16.mxu0 0
      %474 = vmatpush1.bf16.msra.mxu0 0
      %475 = vmatprep.subr.bf16.mxu0 0
      %476 = vmatpush1.bf16.msra.mxu0 0
      %477 = vmatprep.subr.bf16.mxu0 0
      %478 = vmatpush1.bf16.msra.mxu0 0
      %479 = vmatprep.subr.bf16.mxu0 0
      %480 = vmatpush1.bf16.msra.mxu0 0
      %481 = vmatprep.subr.bf16.mxu0 0
      %482 = vmatpush1.bf16.msra.mxu0 0
      %483 = vmatprep.subr.bf16.mxu0 0
      %484 = vmatpush1.bf16.msra.mxu0 0
      %485 = vmatprep.subr.bf16.mxu0 0
      %486 = vmatpush1.bf16.msra.mxu0 0
      %487 = vmatprep.subr.bf16.mxu0 0
      %488 = vmatpush1.bf16.msra.mxu0 0
      %489 = vmatprep.subr.bf16.mxu0 0
      %490 = vmatpush1.bf16.msra.mxu0 0
      %491 = vmatprep.subr.bf16.mxu0 0
      %492 = vmatpush1.bf16.msra.mxu0 0
      %493 = vmatprep.subr.bf16.mxu0 0
      %494 = vmatpush1.bf16.msra.mxu0 0
      %495 = vmatprep.subr.bf16.mxu0 0
      %496 = vmatpush1.bf16.msra.mxu0 0
      %497 = vmatprep.mubr.bf16.mxu0 0
      %498 = vmatmul.mubr.bf16.gmra.mrb[0].mxu0 %v460
      %v499 = vpop.f32.mrb[0].mxu0
      %v500 = vadd.f32 0.0, %v499
      %v501 = vpop.f32.mrb[0].mxu0
      %v502 = vpop.f32.mrb[0].mxu0
      %v503 = vadd.f32 0.0, %v502
      %v504 = vpop.f32.mrb[0].mxu0
      %505 = vmatprep.mubr.bf16.mxu0 0
      %506 = vmatmul.mubr.bf16.gmra.mrb[0].mxu0 %v463
      %v507 = vpop.f32.mrb[0].mxu0
      %v508 = vadd.f32 0.0, %v507
      %v509 = vpop.f32.mrb[0].mxu0
      %v510 = vpop.f32.mrb[0].mxu0
      %v511 = vadd.f32 0.0, %v510
      %v512 = vpop.f32.mrb[0].mxu0
      %513 = vdwg.mxu0
      %v514 = vpack.c.bf16 %v503, %v500
      %v515 = vpack.c.bf16 %v511, %v508
      %v518 = vunpack.c.l.b16 %v514
      %v519 = vunpack.c.h.b16 %v514
      %v520 = vunpack.c.l.b16 %v515
      %v521 = vunpack.c.h.b16 %v515
      %v522 = vpack.c.b16 %v518, %v518
      %v523 = vpack.c.b16 %v519, %v519
      %v524 = vpack.c.b16 %v520, %v520
      %v525 = vpack.c.b16 %v521, %v521
      %526 = vrot.lane.b32.xlu0 %v522, 8
      %v527 = vpop.permute.xlu0 %526
      %528 = vrot.lane.b32.xlu0 %v523, 8
      %v529 = vpop.permute.xlu0 %528
      %530 = vrot.lane.b32.xlu0 %v524, 8
      %v531 = vpop.permute.xlu0 %530
      %532 = vrot.lane.b32.xlu0 %v525, 8
      %v533 = vpop.permute.xlu0 %532
      %vm538 = vcmask 126016
      %539 = vst.msk [vmem:[%s116] sm:$0xf] %vm538, %v527
      %540 = vst.msk [vmem:[%s116 + $0x4] sm:$0xf] %vm538, %v529
      %541 = vst.msk [vmem:[%s116 + $0x8] sm:$0xf] %vm538, %v531
      %542 = vst.msk [vmem:[%s116 + $0xc] sm:$0xf] %vm538, %v533
      %543 = vrot.lane.b32.xlu0 %v133, 112
      %v544 = vpop.permute.xlu0 %543
      %545 = vrot.lane.b32.xlu0 %v134, 112
      %v546 = vpop.permute.xlu0 %545
      %547 = vrot.lane.b32.xlu0 %v133, 80
      %v548 = vpop.permute.xlu0 %547
      %549 = vrot.lane.b32.xlu0 %v134, 80
      %v550 = vpop.permute.xlu0 %549
      %v552 = vsel %vm139, %v544, 0
      %v555 = vsel %vm139, %v546, 0
      %v558 = vsel %vm139, %v548, 0
      %v561 = vsel %vm139, %v550, 0
      %563 = vmatprep.subr.bf16.mxu0 0
      %564 = vmatpush1.bf16.xpose.msra.mxu0 %v558
      %565 = vmatprep.subr.bf16.mxu0 0
      %566 = vmatpush1.bf16.xpose.msra.mxu0 %v561
      %567 = vmatprep.subr.bf16.mxu0 0
      %568 = vmatpush1.bf16.xpose.msra.mxu0 0
      %569 = vmatprep.subr.bf16.mxu0 0
      %570 = vmatpush1.bf16.xpose.msra.mxu0 0
      %571 = vmatprep.subr.bf16.mxu0 0
      %572 = vmatpush1.bf16.xpose.msra.mxu0 0
      %573 = vmatprep.subr.bf16.mxu0 0
      %574 = vmatpush1.bf16.xpose.msra.mxu0 0
      %575 = vmatprep.subr.bf16.mxu0 0
      %576 = vmatpush1.bf16.xpose.msra.mxu0 0
      %577 = vmatprep.subr.bf16.mxu0 0
      %578 = vmatpush1.bf16.xpose.msra.mxu0 0
      %579 = vmatprep.subr.bf16.mxu0 0
      %580 = vmatpush1.bf16.xpose.msra.mxu0 0
      %581 = vmatprep.subr.bf16.mxu0 0
      %582 = vmatpush1.bf16.xpose.msra.mxu0 0
      %583 = vmatprep.subr.bf16.mxu0 0
      %584 = vmatpush1.bf16.xpose.msra.mxu0 0
      %585 = vmatprep.subr.bf16.mxu0 0
      %586 = vmatpush1.bf16.xpose.msra.mxu0 0
      %587 = vmatprep.subr.bf16.mxu0 0
      %588 = vmatpush1.bf16.xpose.msra.mxu0 0
      %589 = vmatprep.subr.bf16.mxu0 0
      %590 = vmatpush1.bf16.xpose.msra.mxu0 0
      %591 = vmatprep.subr.bf16.mxu0 0
      %592 = vmatpush1.bf16.xpose.msra.mxu0 0
      %593 = vmatprep.subr.bf16.mxu0 0
      %594 = vmatpush1.bf16.xpose.msra.mxu0 0
      %595 = vmatprep.mubr.bf16.mxu0 0
      %596 = vmatmul.mubr.bf16.gmra.mrb[0].mxu0 %v552
      %v597 = vpop.f32.mrb[0].mxu0
      %v598 = vadd.f32 0.0, %v597
      %v599 = vpop.f32.mrb[0].mxu0
      %v600 = vpop.f32.mrb[0].mxu0
      %v601 = vadd.f32 0.0, %v600
      %v602 = vpop.f32.mrb[0].mxu0
      %603 = vmatprep.mubr.bf16.mxu0 0
      %604 = vmatmul.mubr.bf16.gmra.mrb[0].mxu0 %v555
      %v605 = vpop.f32.mrb[0].mxu0
      %v606 = vadd.f32 0.0, %v605
      %v607 = vpop.f32.mrb[0].mxu0
      %v608 = vpop.f32.mrb[0].mxu0
      %v609 = vadd.f32 0.0, %v608
      %v610 = vpop.f32.mrb[0].mxu0
      %611 = vdwg.mxu0
      %v612 = vsel %vm124, %v598, -1e+30
      %v613 = vsel %vm124, %v601, -1e+30
      %v614 = vsel %vm124, %v606, -1e+30
      %v615 = vsel %vm124, %v609, -1e+30
      %v616 = vsel %vm205, %v612, -inf
      %617 = vmax.xlane.f32.xlu0 %v616
      %v618 = vpop.xlane.xlu0 %617
      %v619 = vsel %vm205, %v613, -inf
      %620 = vmax.xlane.f32.xlu0 %v619
      %v621 = vpop.xlane.xlu0 %620
      %v622 = vsel %vm205, %v614, -inf
      %623 = vmax.xlane.f32.xlu0 %v622
      %v624 = vpop.xlane.xlu0 %623
      %v625 = vsel %vm205, %v615, -inf
      %626 = vmax.xlane.f32.xlu0 %v625
      %v627 = vpop.xlane.xlu0 %626
      %v628 = vsub.f32 %v612, %v618
      %v629 = vsub.f32 %v613, %v621
      %v630 = vsub.f32 %v614, %v624
      %v631 = vsub.f32 %v615, %v627
      %v632 = vmul.f32 %v628, 1.442695
      %v633 = vpow.pop %v632
      %v634 = vmul.f32 %v629, 1.442695
      %v635 = vpow.pop %v634
      %v636 = vmul.f32 %v630, 1.442695
      %v637 = vpow.pop %v636
      %v638 = vmul.f32 %v631, 1.442695
      %v639 = vpow.pop %v638
      %v640 = vsel %vm205, %v633, 0.0
      %641 = vadd.xlane.f32.xlu0 %v640
      %v642 = vpop.xlane.xlu0 %641
      %v643 = vsel %vm205, %v635, 0.0
      %644 = vadd.xlane.f32.xlu0 %v643
      %v645 = vpop.xlane.xlu0 %644
      %v646 = vsel %vm205, %v637, 0.0
      %647 = vadd.xlane.f32.xlu0 %v646
      %v648 = vpop.xlane.xlu0 %647
      %v649 = vsel %vm205, %v639, 0.0
      %650 = vadd.xlane.f32.xlu0 %v649
      %v651 = vpop.xlane.xlu0 %650
      %v652 = vrcp.pop %v642
      %v653 = vrcp.pop %v645
      %v654 = vrcp.pop %v648
      %v655 = vrcp.pop %v651
      %v656 = vmul.f32 %v633, %v652
      %v657 = vmul.f32 %v635, %v653
      %v658 = vmul.f32 %v637, %v654
      %v659 = vmul.f32 %v639, %v655
      %v660 = vpack.c.bf16 %v657, %v656
      %v661 = vpack.c.bf16 %v659, %v658
      %662 = vrot.lane.b32.xlu0 %v133, 48
      %v663 = vpop.permute.xlu0 %662
      %664 = vrot.lane.b32.xlu0 %v134, 48
      %v665 = vpop.permute.xlu0 %664
      %v669 = vsel %vm205, %v660, 0
      %v672 = vsel %vm205, %v661, 0
      %674 = vmatprep.subr.bf16.mxu0 0
      %675 = vmatpush1.bf16.msra.mxu0 %v663
      %676 = vmatprep.subr.bf16.mxu0 0
      %677 = vmatpush1.bf16.msra.mxu0 %v665
      %678 = vmatprep.subr.bf16.mxu0 0
      %679 = vmatpush1.bf16.msra.mxu0 0
      %680 = vmatprep.subr.bf16.mxu0 0
      %681 = vmatpush1.bf16.msra.mxu0 0
      %682 = vmatprep.subr.bf16.mxu0 0
      %683 = vmatpush1.bf16.msra.mxu0 0
      %684 = vmatprep.subr.bf16.mxu0 0
      %685 = vmatpush1.bf16.msra.mxu0 0
      %686 = vmatprep.subr.bf16.mxu0 0
      %687 = vmatpush1.bf16.msra.mxu0 0
      %688 = vmatprep.subr.bf16.mxu0 0
      %689 = vmatpush1.bf16.msra.mxu0 0
      %690 = vmatprep.subr.bf16.mxu0 0
      %691 = vmatpush1.bf16.msra.mxu0 0
      %692 = vmatprep.subr.bf16.mxu0 0
      %693 = vmatpush1.bf16.msra.mxu0 0
      %694 = vmatprep.subr.bf16.mxu0 0
      %695 = vmatpush1.bf16.msra.mxu0 0
      %696 = vmatprep.subr.bf16.mxu0 0
      %697 = vmatpush1.bf16.msra.mxu0 0
      %698 = vmatprep.subr.bf16.mxu0 0
      %699 = vmatpush1.bf16.msra.mxu0 0
      %700 = vmatprep.subr.bf16.mxu0 0
      %701 = vmatpush1.bf16.msra.mxu0 0
      %702 = vmatprep.subr.bf16.mxu0 0
      %703 = vmatpush1.bf16.msra.mxu0 0
      %704 = vmatprep.subr.bf16.mxu0 0
      %705 = vmatpush1.bf16.msra.mxu0 0
      %706 = vmatprep.mubr.bf16.mxu0 0
      %707 = vmatmul.mubr.bf16.gmra.mrb[0].mxu0 %v669
      %v708 = vpop.f32.mrb[0].mxu0
      %v709 = vadd.f32 0.0, %v708
      %v710 = vpop.f32.mrb[0].mxu0
      %v711 = vpop.f32.mrb[0].mxu0
      %v712 = vadd.f32 0.0, %v711
      %v713 = vpop.f32.mrb[0].mxu0
      %714 = vmatprep.mubr.bf16.mxu0 0
      %715 = vmatmul.mubr.bf16.gmra.mrb[0].mxu0 %v672
      %v716 = vpop.f32.mrb[0].mxu0
      %v717 = vadd.f32 0.0, %v716
      %v718 = vpop.f32.mrb[0].mxu0
      %v719 = vpop.f32.mrb[0].mxu0
      %v720 = vadd.f32 0.0, %v719
      %v721 = vpop.f32.mrb[0].mxu0
      %722 = vdwg.mxu0
      %v723 = vpack.c.bf16 %v712, %v709
      %v724 = vpack.c.bf16 %v720, %v717
      %v727 = vunpack.c.l.b16 %v723
      %v728 = vunpack.c.h.b16 %v723
      %v729 = vunpack.c.l.b16 %v724
      %v730 = vunpack.c.h.b16 %v724
      %v731 = vpack.c.b16 %v727, %v727
      %v732 = vpack.c.b16 %v728, %v728
      %v733 = vpack.c.b16 %v729, %v729
      %v734 = vpack.c.b16 %v730, %v730
      %735 = vrot.lane.b32.xlu0 %v731, 16
      %v736 = vpop.permute.xlu0 %735
      %737 = vrot.lane.b32.xlu0 %v732, 16
      %v738 = vpop.permute.xlu0 %737
      %739 = vrot.lane.b32.xlu0 %v733, 16
      %v740 = vpop.permute.xlu0 %739
      %741 = vrot.lane.b32.xlu0 %v734, 16
      %v742 = vpop.permute.xlu0 %741
      %vm747 = vcmask 191616
      %748 = vst.msk [vmem:[%s116] sm:$0xf] %vm747, %v736
      %749 = vst.msk [vmem:[%s116 + $0x4] sm:$0xf] %vm747, %v738
      %750 = vst.msk [vmem:[%s116 + $0x8] sm:$0xf] %vm747, %v740
      %751 = vst.msk [vmem:[%s116 + $0xc] sm:$0xf] %vm747, %v742
      %752 = vrot.lane.b32.xlu0 %v133, 104
      %v753 = vpop.permute.xlu0 %752
      %754 = vrot.lane.b32.xlu0 %v134, 104
      %v755 = vpop.permute.xlu0 %754
      %756 = vrot.lane.b32.xlu0 %v133, 72
      %v757 = vpop.permute.xlu0 %756
      %758 = vrot.lane.b32.xlu0 %v134, 72
      %v759 = vpop.permute.xlu0 %758
      %v761 = vsel %vm139, %v753, 0
      %v764 = vsel %vm139, %v755, 0
      %v767 = vsel %vm139, %v757, 0
      %v770 = vsel %vm139, %v759, 0
      %772 = vmatprep.subr.bf16.mxu0 0
      %773 = vmatpush1.bf16.xpose.msra.mxu0 %v767
      %774 = vmatprep.subr.bf16.mxu0 0
      %775 = vmatpush1.bf16.xpose.msra.mxu0 %v770
      %776 = vmatprep.subr.bf16.mxu0 0
      %777 = vmatpush1.bf16.xpose.msra.mxu0 0
      %778 = vmatprep.subr.bf16.mxu0 0
      %779 = vmatpush1.bf16.xpose.msra.mxu0 0
      %780 = vmatprep.subr.bf16.mxu0 0
      %781 = vmatpush1.bf16.xpose.msra.mxu0 0
      %782 = vmatprep.subr.bf16.mxu0 0
      %783 = vmatpush1.bf16.xpose.msra.mxu0 0
      %784 = vmatprep.subr.bf16.mxu0 0
      %785 = vmatpush1.bf16.xpose.msra.mxu0 0
      %786 = vmatprep.subr.bf16.mxu0 0
      %787 = vmatpush1.bf16.xpose.msra.mxu0 0
      %788 = vmatprep.subr.bf16.mxu0 0
      %789 = vmatpush1.bf16.xpose.msra.mxu0 0
      %790 = vmatprep.subr.bf16.mxu0 0
      %791 = vmatpush1.bf16.xpose.msra.mxu0 0
      %792 = vmatprep.subr.bf16.mxu0 0
      %793 = vmatpush1.bf16.xpose.msra.mxu0 0
      %794 = vmatprep.subr.bf16.mxu0 0
      %795 = vmatpush1.bf16.xpose.msra.mxu0 0
      %796 = vmatprep.subr.bf16.mxu0 0
      %797 = vmatpush1.bf16.xpose.msra.mxu0 0
      %798 = vmatprep.subr.bf16.mxu0 0
      %799 = vmatpush1.bf16.xpose.msra.mxu0 0
      %800 = vmatprep.subr.bf16.mxu0 0
      %801 = vmatpush1.bf16.xpose.msra.mxu0 0
      %802 = vmatprep.subr.bf16.mxu0 0
      %803 = vmatpush1.bf16.xpose.msra.mxu0 0
      %804 = vmatprep.mubr.bf16.mxu0 0
      %805 = vmatmul.mubr.bf16.gmra.mrb[0].mxu0 %v761
      %v806 = vpop.f32.mrb[0].mxu0
      %v807 = vadd.f32 0.0, %v806
      %v808 = vpop.f32.mrb[0].mxu0
      %v809 = vpop.f32.mrb[0].mxu0
      %v810 = vadd.f32 0.0, %v809
      %v811 = vpop.f32.mrb[0].mxu0
      %812 = vmatprep.mubr.bf16.mxu0 0
      %813 = vmatmul.mubr.bf16.gmra.mrb[0].mxu0 %v764
      %v814 = vpop.f32.mrb[0].mxu0
      %v815 = vadd.f32 0.0, %v814
      %v816 = vpop.f32.mrb[0].mxu0
      %v817 = vpop.f32.mrb[0].mxu0
      %v818 = vadd.f32 0.0, %v817
      %v819 = vpop.f32.mrb[0].mxu0
      %820 = vdwg.mxu0
      %v821 = vsel %vm124, %v807, -1e+30
      %v822 = vsel %vm124, %v810, -1e+30
      %v823 = vsel %vm124, %v815, -1e+30
      %v824 = vsel %vm124, %v818, -1e+30
      %v825 = vsel %vm205, %v821, -inf
      %826 = vmax.xlane.f32.xlu0 %v825
      %v827 = vpop.xlane.xlu0 %826
      %v828 = vsel %vm205, %v822, -inf
      %829 = vmax.xlane.f32.xlu0 %v828
      %v830 = vpop.xlane.xlu0 %829
      %v831 = vsel %vm205, %v823, -inf
      %832 = vmax.xlane.f32.xlu0 %v831
      %v833 = vpop.xlane.xlu0 %832
      %v834 = vsel %vm205, %v824, -inf
      %835 = vmax.xlane.f32.xlu0 %v834
      %v836 = vpop.xlane.xlu0 %835
      %v837 = vsub.f32 %v821, %v827
      %v838 = vsub.f32 %v822, %v830
      %v839 = vsub.f32 %v823, %v833
      %v840 = vsub.f32 %v824, %v836
      %v841 = vmul.f32 %v837, 1.442695
      %v842 = vpow.pop %v841
      %v843 = vmul.f32 %v838, 1.442695
      %v844 = vpow.pop %v843
      %v845 = vmul.f32 %v839, 1.442695
      %v846 = vpow.pop %v845
      %v847 = vmul.f32 %v840, 1.442695
      %v848 = vpow.pop %v847
      %v849 = vsel %vm205, %v842, 0.0
      %850 = vadd.xlane.f32.xlu0 %v849
      %v851 = vpop.xlane.xlu0 %850
      %v852 = vsel %vm205, %v844, 0.0
      %853 = vadd.xlane.f32.xlu0 %v852
      %v854 = vpop.xlane.xlu0 %853
      %v855 = vsel %vm205, %v846, 0.0
      %856 = vadd.xlane.f32.xlu0 %v855
      %v857 = vpop.xlane.xlu0 %856
      %v858 = vsel %vm205, %v848, 0.0
      %859 = vadd.xlane.f32.xlu0 %v858
      %v860 = vpop.xlane.xlu0 %859
      %v861 = vrcp.pop %v851
      %v862 = vrcp.pop %v854
      %v863 = vrcp.pop %v857
      %v864 = vrcp.pop %v860
      %v865 = vmul.f32 %v842, %v861
      %v866 = vmul.f32 %v844, %v862
      %v867 = vmul.f32 %v846, %v863
      %v868 = vmul.f32 %v848, %v864
      %v869 = vpack.c.bf16 %v866, %v865
      %v870 = vpack.c.bf16 %v868, %v867
      %871 = vrot.lane.b32.xlu0 %v133, 40
      %v872 = vpop.permute.xlu0 %871
      %873 = vrot.lane.b32.xlu0 %v134, 40
      %v874 = vpop.permute.xlu0 %873
      %v878 = vsel %vm205, %v869, 0
      %v881 = vsel %vm205, %v870, 0
      %883 = vmatprep.subr.bf16.mxu0 0
      %884 = vmatpush1.bf16.msra.mxu0 %v872
      %885 = vmatprep.subr.bf16.mxu0 0
      %886 = vmatpush1.bf16.msra.mxu0 %v874
      %887 = vmatprep.subr.bf16.mxu0 0
      %888 = vmatpush1.bf16.msra.mxu0 0
      %889 = vmatprep.subr.bf16.mxu0 0
      %890 = vmatpush1.bf16.msra.mxu0 0
      %891 = vmatprep.subr.bf16.mxu0 0
      %892 = vmatpush1.bf16.msra.mxu0 0
      %893 = vmatprep.subr.bf16.mxu0 0
      %894 = vmatpush1.bf16.msra.mxu0 0
      %895 = vmatprep.subr.bf16.mxu0 0
      %896 = vmatpush1.bf16.msra.mxu0 0
      %897 = vmatprep.subr.bf16.mxu0 0
      %898 = vmatpush1.bf16.msra.mxu0 0
      %899 = vmatprep.subr.bf16.mxu0 0
      %900 = vmatpush1.bf16.msra.mxu0 0
      %901 = vmatprep.subr.bf16.mxu0 0
      %902 = vmatpush1.bf16.msra.mxu0 0
      %903 = vmatprep.subr.bf16.mxu0 0
      %904 = vmatpush1.bf16.msra.mxu0 0
      %905 = vmatprep.subr.bf16.mxu0 0
      %906 = vmatpush1.bf16.msra.mxu0 0
      %907 = vmatprep.subr.bf16.mxu0 0
      %908 = vmatpush1.bf16.msra.mxu0 0
      %909 = vmatprep.subr.bf16.mxu0 0
      %910 = vmatpush1.bf16.msra.mxu0 0
      %911 = vmatprep.subr.bf16.mxu0 0
      %912 = vmatpush1.bf16.msra.mxu0 0
      %913 = vmatprep.subr.bf16.mxu0 0
      %914 = vmatpush1.bf16.msra.mxu0 0
      %915 = vmatprep.mubr.bf16.mxu0 0
      %916 = vmatmul.mubr.bf16.gmra.mrb[0].mxu0 %v878
      %v917 = vpop.f32.mrb[0].mxu0
      %v918 = vadd.f32 0.0, %v917
      %v919 = vpop.f32.mrb[0].mxu0
      %v920 = vpop.f32.mrb[0].mxu0
      %v921 = vadd.f32 0.0, %v920
      %v922 = vpop.f32.mrb[0].mxu0
      %923 = vmatprep.mubr.bf16.mxu0 0
      %924 = vmatmul.mubr.bf16.gmra.mrb[0].mxu0 %v881
      %v925 = vpop.f32.mrb[0].mxu0
      %v926 = vadd.f32 0.0, %v925
      %v927 = vpop.f32.mrb[0].mxu0
      %v928 = vpop.f32.mrb[0].mxu0
      %v929 = vadd.f32 0.0, %v928
      %v930 = vpop.f32.mrb[0].mxu0
      %931 = vdwg.mxu0
      %v932 = vpack.c.bf16 %v921, %v918
      %v933 = vpack.c.bf16 %v929, %v926
      %v936 = vunpack.c.l.b16 %v932
      %v937 = vunpack.c.h.b16 %v932
      %v938 = vunpack.c.l.b16 %v933
      %v939 = vunpack.c.h.b16 %v933
      %v940 = vpack.c.b16 %v936, %v936
      %v941 = vpack.c.b16 %v937, %v937
      %v942 = vpack.c.b16 %v938, %v938
      %v943 = vpack.c.b16 %v939, %v939
      %944 = vrot.lane.b32.xlu0 %v940, 24
      %v945 = vpop.permute.xlu0 %944
      %946 = vrot.lane.b32.xlu0 %v941, 24
      %v947 = vpop.permute.xlu0 %946
      %948 = vrot.lane.b32.xlu0 %v942, 24
      %v949 = vpop.permute.xlu0 %948
      %950 = vrot.lane.b32.xlu0 %v943, 24
      %v951 = vpop.permute.xlu0 %950
      %vm956 = vcmask 257216
      %957 = vst.msk [vmem:[%s116] sm:$0xf] %vm956, %v945
      %958 = vst.msk [vmem:[%s116 + $0x4] sm:$0xf] %vm956, %v947
      %959 = vst.msk [vmem:[%s116 + $0x8] sm:$0xf] %vm956, %v949
      %960 = vst.msk [vmem:[%s116 + $0xc] sm:$0xf] %vm956, %v951
      %p961 = scmp.lt.s32.totalorder %s12, 1
      %s962 = scalar_select %p961, %s12, 1
      %s963 = smul.addr %s962, 4
      %s964 = smul.addr %s963, 4
      %s965 = scalar_lea.vmem %s1, %s964
      // Predicated region
      $region25: #{vit_forward.14} parent=23 // pred_check
        %p966 = pneg %p56
      $region26: #{vit_forward.14} parent=23 // pred_check_branch
        %968 = sbr.rel (%p966) target = $region28
      $region27: #{vit_forward.14} parent=23 // pred_region
        _
      $region28: #{vit_forward.14} parent=23 // pred_fallthru
        _
    $region24: #{vit_forward.14} parent=5 // pred_fallthru
      _
    %p969 = scmp.le.s32.totalorder 2, %s7
    // Predicated region
    $region29: #{vit_forward.14} parent=5 // pred_check
      %p970 = pneg %p969
    $region30: #{vit_forward.14} parent=5 // pred_check_branch
      %972 = sbr.rel (%p970) target = $region32
    $region31: #{vit_forward.14} parent=5 // pred_region
      %s973 = ssub.s32 %s7, 2
      // Predicated region
      $region33: #{vit_forward.14} parent=31 // pred_check
        %p974 = pneg %p62
      $region34: #{vit_forward.14} parent=31 // pred_check_branch
        %976 = sbr.rel (%p974) target = $region36
      $region35: #{vit_forward.14} parent=31 // pred_region
        %p977 = scmp.lt.s32.totalorder %s13, 1
        %s978 = scalar_select %p977, %s13, 1
        %s979 = smul.addr %s978, 4
        %s980 = smul.addr %s979, 4
        %s981 = scalar_lea.vmem %s1, %s980
      $region36: #{vit_forward.14} parent=31 // pred_fallthru
        _
    $region32: #{vit_forward.14} parent=5 // pred_fallthru
      _
  $region6: #{vit_forward.14} parent=0 // loop_footer
    %s11 = sadd.s32 1, %s7
  $region7: #{vit_forward.14} parent=0 // loop_footer_branch
    %6 = sbr.rel target = $region3
  $region8: #{vit_forward.14} parent=0 // loop_exit
    _

// kernel: vit_forward.16
$region0: #{vit_forward.16}
  #allocation0 [shape = 'u32[]', space=smem, size = 0x4, offset = 0x4, fixed_abs, tag = 'smem constant byte address 0x4 - core index']
  #allocation1 [shape = 'u32[144,128]{1,0:T(1,128)}', space=vmem, size = 0x12000, scoped, tag = 'internal scratch']
  #allocation2 [shape = 'bf16[64,32]{1,0:T(16,128)(2,1)}', space=vmem, size = 0x4000, scoped, tag = 'scratch operand']
  %s0 = inlined_call_operand.vmem [shape: bf16[64,32], index: 0, kind: input, shape index: {}]
  %s1 = inlined_call_operand.vmem [shape: f32[1,32], index: 1, kind: input, shape index: {}]
  %s2 = inlined_call_operand.vmem [shape: f32[1,32], index: 2, kind: input, shape index: {}]
  %s3 = inlined_call_operand.vmem [shape: bf16[32,128], index: 3, kind: input, shape index: {}]
  %s4 = inlined_call_operand.vmem [shape: f32[1,128], index: 4, kind: input, shape index: {}]
  %s5 = inlined_call_operand.vmem [shape: bf16[64,128], index: 5, kind: output, shape index: {}]
  %s6 = sld [smem:[#allocation0]]
  $region34: #{vit_forward.16} parent=0
    _
  %s8 = ssub.s32 1, %s6
  %s9 = scalar_select 0, %s8, %s6
  // Predicated region
  $region2: #{vit_forward.16} parent=0 // pred_check
    _
  $region3: #{vit_forward.16} parent=0 // pred_check_branch
    %11 = sbr.rel (0) target = $region5
  $region4: #{vit_forward.16} parent=0 // pred_region
    _
  $region5: #{vit_forward.16} parent=0 // pred_fallthru
    _
  // Predicated region
  $region6: #{vit_forward.16} parent=0 // pred_check
    _
  $region7: #{vit_forward.16} parent=0 // pred_check_branch
    %13 = sbr.rel (0) target = $region9
  $region8: #{vit_forward.16} parent=0 // pred_region
    _
  $region9: #{vit_forward.16} parent=0 // pred_fallthru
    _
  // Predicated region
  $region10: #{vit_forward.16} parent=0 // pred_check
    _
  $region11: #{vit_forward.16} parent=0 // pred_check_branch
    %15 = sbr.rel (0) target = $region13
  $region12: #{vit_forward.16} parent=0 // pred_region
    _
  $region13: #{vit_forward.16} parent=0 // pred_fallthru
    _
  // Predicated region
  $region14: #{vit_forward.16} parent=0 // pred_check
    _
  $region15: #{vit_forward.16} parent=0 // pred_check_branch
    %17 = sbr.rel (0) target = $region17
  $region16: #{vit_forward.16} parent=0 // pred_region
    _
  $region17: #{vit_forward.16} parent=0 // pred_fallthru
    _
  // Predicated region
  $region18: #{vit_forward.16} parent=0 // pred_check
    _
  $region19: #{vit_forward.16} parent=0 // pred_check_branch
    %19 = sbr.rel (0) target = $region21
  $region20: #{vit_forward.16} parent=0 // pred_region
    _
  $region21: #{vit_forward.16} parent=0 // pred_fallthru
    _
  %p21 = scmp.eq.s32.totalorder 0, 0
  // Predicated region
  $region22: #{vit_forward.16} parent=0 // pred_check
    %p22 = pneg %p21
  $region23: #{vit_forward.16} parent=0 // pred_check_branch
    %24 = sbr.rel (%p22) target = $region25
  $region24: #{vit_forward.16} parent=0 // pred_region
    %v25 = vld [vmem:[%s0] sm:$0xf]
    %v26 = vld [vmem:[%s0 + $0x4] sm:$0xf]
    %v27 = vld [vmem:[%s0 + $0x8] sm:$0xf]
    %v28 = vld [vmem:[%s0 + $0xc] sm:$0xf]
    %v29 = vld [vmem:[%s0 + $0x10] sm:$0xf]
    %v30 = vld [vmem:[%s0 + $0x14] sm:$0xf]
    %v31 = vld [vmem:[%s0 + $0x18] sm:$0xf]
    %v32 = vld [vmem:[%s0 + $0x1c] sm:$0xf]
    %v33 = vunpack.c.l.bf16 %v25
    %v34 = vunpack.c.l.bf16 %v26
    %v35 = vunpack.c.l.bf16 %v27
    %v36 = vunpack.c.l.bf16 %v28
    %v37 = vunpack.c.l.bf16 %v29
    %v38 = vunpack.c.l.bf16 %v30
    %v39 = vunpack.c.l.bf16 %v31
    %v40 = vunpack.c.l.bf16 %v32
    %vm41 = vcmask 261120
    %v42 = vsel %vm41, %v33, 0.0
    %43 = vadd.xlane.f32.xlu0 %v42
    %v44 = vpop.xlane.xlu0 %43
    %v45 = vsel %vm41, %v34, 0.0
    %46 = vadd.xlane.f32.xlu0 %v45
    %v47 = vpop.xlane.xlu0 %46
    %v48 = vsel %vm41, %v35, 0.0
    %49 = vadd.xlane.f32.xlu0 %v48
    %v50 = vpop.xlane.xlu0 %49
    %v51 = vsel %vm41, %v36, 0.0
    %52 = vadd.xlane.f32.xlu0 %v51
    %v53 = vpop.xlane.xlu0 %52
    %v54 = vsel %vm41, %v37, 0.0
    %55 = vadd.xlane.f32.xlu0 %v54
    %v56 = vpop.xlane.xlu0 %55
    %v57 = vsel %vm41, %v38, 0.0
    %58 = vadd.xlane.f32.xlu0 %v57
    %v59 = vpop.xlane.xlu0 %58
    %v60 = vsel %vm41, %v39, 0.0
    %61 = vadd.xlane.f32.xlu0 %v60
    %v62 = vpop.xlane.xlu0 %61
    %v63 = vsel %vm41, %v40, 0.0
    %64 = vadd.xlane.f32.xlu0 %v63
    %v65 = vpop.xlane.xlu0 %64
    %v66 = vrcp.pop 32.0
    %v67 = vmul.f32 %v44, %v66
    %v68 = vmul.f32 %v47, %v66
    %v69 = vmul.f32 %v50, %v66
    %v70 = vmul.f32 %v53, %v66
    %v71 = vmul.f32 %v56, %v66
    %v72 = vmul.f32 %v59, %v66
    %v73 = vmul.f32 %v62, %v66
    %v74 = vmul.f32 %v65, %v66
    %v75 = vsub.f32 %v33, %v67
    %v76 = vsub.f32 %v34, %v68
    %v77 = vsub.f32 %v35, %v69
    %v78 = vsub.f32 %v36, %v70
    %v79 = vsub.f32 %v37, %v71
    %v80 = vsub.f32 %v38, %v72
    %v81 = vsub.f32 %v39, %v73
    %v82 = vsub.f32 %v40, %v74
    %v83 = vmul.f32 %v75, %v75
    %v84 = vmul.f32 %v76, %v76
    %v85 = vmul.f32 %v77, %v77
    %v86 = vmul.f32 %v78, %v78
    %v87 = vmul.f32 %v79, %v79
    %v88 = vmul.f32 %v80, %v80
    %v89 = vmul.f32 %v81, %v81
    %v90 = vmul.f32 %v82, %v82
    %v91 = vsel %vm41, %v83, 0.0
    %92 = vadd.xlane.f32.xlu0 %v91
    %v93 = vpop.xlane.xlu0 %92
    %v94 = vsel %vm41, %v84, 0.0
    %95 = vadd.xlane.f32.xlu0 %v94
    %v96 = vpop.xlane.xlu0 %95
    %v97 = vsel %vm41, %v85, 0.0
    %98 = vadd.xlane.f32.xlu0 %v97
    %v99 = vpop.xlane.xlu0 %98
    %v100 = vsel %vm41, %v86, 0.0
    %101 = vadd.xlane.f32.xlu0 %v100
    %v102 = vpop.xlane.xlu0 %101
    %v103 = vsel %vm41, %v87, 0.0
    %104 = vadd.xlane.f32.xlu0 %v103
    %v105 = vpop.xlane.xlu0 %104
    %v106 = vsel %vm41, %v88, 0.0
    %107 = vadd.xlane.f32.xlu0 %v106
    %v108 = vpop.xlane.xlu0 %107
    %v109 = vsel %vm41, %v89, 0.0
    %110 = vadd.xlane.f32.xlu0 %v109
    %v111 = vpop.xlane.xlu0 %110
    %v112 = vsel %vm41, %v90, 0.0
    %113 = vadd.xlane.f32.xlu0 %v112
    %v114 = vpop.xlane.xlu0 %113
    %v115 = vmul.f32 %v93, %v66
    %v116 = vmul.f32 %v96, %v66
    %v117 = vmul.f32 %v99, %v66
    %v118 = vmul.f32 %v102, %v66
    %v119 = vmul.f32 %v105, %v66
    %v120 = vmul.f32 %v108, %v66
    %v121 = vmul.f32 %v111, %v66
    %v122 = vmul.f32 %v114, %v66
    %v123 = vadd.f32 %v115, 1e-05
    %v124 = vadd.f32 %v116, 1e-05
    %v125 = vadd.f32 %v117, 1e-05
    %v126 = vadd.f32 %v118, 1e-05
    %v127 = vadd.f32 %v119, 1e-05
    %v128 = vadd.f32 %v120, 1e-05
    %v129 = vadd.f32 %v121, 1e-05
    %v130 = vadd.f32 %v122, 1e-05
    %v131 = vrsqrt.pop %v123
    %v132 = vrsqrt.pop %v124
    %v133 = vrsqrt.pop %v125
    %v134 = vrsqrt.pop %v126
    %v135 = vrsqrt.pop %v127
    %v136 = vrsqrt.pop %v128
    %v137 = vrsqrt.pop %v129
    %v138 = vrsqrt.pop %v130
    %v139 = vmul.f32 %v75, %v131
    %v140 = vmul.f32 %v76, %v132
    %v141 = vmul.f32 %v77, %v133
    %v142 = vmul.f32 %v78, %v134
    %v143 = vmul.f32 %v79, %v135
    %v144 = vmul.f32 %v80, %v136
    %v145 = vmul.f32 %v81, %v137
    %v146 = vmul.f32 %v82, %v138
    %v147 = vld [vmem:[%s1] sm:$0x1]
    %v149 = vlaneseq
    %v150 = vshrl.u32 %v149, 7
    %v151 = vsub.s32 0, %v150
    %v152 = vrot.slane %v147, %v151
    %v154 = vmul.f32 %v139, %v152
    %v155 = vmul.f32 %v140, %v152
    %v156 = vmul.f32 %v141, %v152
    %v157 = vmul.f32 %v142, %v152
    %v158 = vmul.f32 %v143, %v152
    %v159 = vmul.f32 %v144, %v152
    %v160 = vmul.f32 %v145, %v152
    %v161 = vmul.f32 %v146, %v152
    %v162 = vld [vmem:[%s2] sm:$0x1]
    %v164 = vlaneseq
    %v165 = vshrl.u32 %v164, 7
    %v166 = vsub.s32 0, %v165
    %v167 = vrot.slane %v162, %v166
    %v169 = vadd.f32 %v154, %v167
    %v170 = vadd.f32 %v155, %v167
    %v171 = vadd.f32 %v156, %v167
    %v172 = vadd.f32 %v157, %v167
    %v173 = vadd.f32 %v158, %v167
    %v174 = vadd.f32 %v159, %v167
    %v175 = vadd.f32 %v160, %v167
    %v176 = vadd.f32 %v161, %v167
    %v177 = vpack.c.bf16 %v170, %v169
    %v178 = vpack.c.bf16 %v172, %v171
    %v179 = vpack.c.bf16 %v174, %v173
    %v180 = vpack.c.bf16 %v176, %v175
    %181 = vst.msk [vmem:[#allocation2] sm:$0xff] %vm41, %v177
    %182 = vst.msk [vmem:[#allocation2 + $0x8] sm:$0xff] %vm41, %v178
    %183 = vst.msk [vmem:[#allocation2 + $0x10] sm:$0xff] %vm41, %v179
    %184 = vst.msk [vmem:[#allocation2 + $0x18] sm:$0xff] %vm41, %v180
  $region25: #{vit_forward.16} parent=0 // pred_fallthru
    _
  %v185 = vld [vmem:[#allocation2] sm:$0xff]
  %v186 = vld [vmem:[#allocation2 + $0x8] sm:$0xff]
  %v187 = vld [vmem:[#allocation2 + $0x10] sm:$0xff]
  %v188 = vld [vmem:[#allocation2 + $0x18] sm:$0xff]
  %v189 = vld [vmem:[%s3] sm:$0xf]
  %v190 = vld [vmem:[%s3 + $0x4] sm:$0xf]
  %v191 = vld [vmem:[%s3 + $0x8] sm:$0xf]
  %v192 = vld [vmem:[%s3 + $0xc] sm:$0xf]
  %v193 = vld [vmem:[%s4] sm:$0x1]
  %v195 = vlaneseq
  %v196 = vshrl.u32 %v195, 7
  %v197 = vsub.s32 0, %v196
  %v198 = vrot.slane %v193, %v197
  %v204 = vunpack.c.l.b16 %v189
  %v205 = vunpack.c.l.b16 %v190
  %v206 = vunpack.c.l.b16 %v191
  %v207 = vunpack.c.l.b16 %v192
  %v208 = vpack.c.b16 %v205, %v204
  %v209 = vpack.c.b16 %v207, %v206
  %vm212 = vcmask 261120
  %v214 = vsel %vm212, %v185, 0
  %v217 = vsel %vm212, %v186, 0
  %v220 = vsel %vm212, %v187, 0
  %v223 = vsel %vm212, %v188, 0
  %225 = vmatprep.subr.bf16.mxu0 0
  %226 = vmatpush1.bf16.msra.mxu0 %v208
  %227 = vmatprep.subr.bf16.mxu0 0
  %228 = vmatpush1.bf16.msra.mxu0 %v209
  %229 = vmatprep.subr.bf16.mxu0 0
  %230 = vmatpush1.bf16.msra.mxu0 0
  %231 = vmatprep.subr.bf16.mxu0 0
  %232 = vmatpush1.bf16.msra.mxu0 0
  %233 = vmatprep.subr.bf16.mxu0 0
  %234 = vmatpush1.bf16.msra.mxu0 0
  %235 = vmatprep.subr.bf16.mxu0 0
  %236 = vmatpush1.bf16.msra.mxu0 0
  %237 = vmatprep.subr.bf16.mxu0 0
  %238 = vmatpush1.bf16.msra.mxu0 0
  %239 = vmatprep.subr.bf16.mxu0 0
  %240 = vmatpush1.bf16.msra.mxu0 0
  %241 = vmatprep.subr.bf16.mxu0 0
  %242 = vmatpush1.bf16.msra.mxu0 0
  %243 = vmatprep.subr.bf16.mxu0 0
  %244 = vmatpush1.bf16.msra.mxu0 0
  %245 = vmatprep.subr.bf16.mxu0 0
  %246 = vmatpush1.bf16.msra.mxu0 0
  %247 = vmatprep.subr.bf16.mxu0 0
  %248 = vmatpush1.bf16.msra.mxu0 0
  %249 = vmatprep.subr.bf16.mxu0 0
  %250 = vmatpush1.bf16.msra.mxu0 0
  %251 = vmatprep.subr.bf16.mxu0 0
  %252 = vmatpush1.bf16.msra.mxu0 0
  %253 = vmatprep.subr.bf16.mxu0 0
  %254 = vmatpush1.bf16.msra.mxu0 0
  %255 = vmatprep.subr.bf16.mxu0 0
  %256 = vmatpush1.bf16.msra.mxu0 0
  %257 = vmatprep.mubr.bf16.mxu0 0
  %258 = vmatmul.mubr.bf16.gmra.mrb[0].mxu0 %v214
  %v259 = vpop.f32.mrb[0].mxu0
  %v260 = vadd.f32 %v198, %v259
  %v261 = vpop.f32.mrb[0].mxu0
  %v262 = vpop.f32.mrb[0].mxu0
  %v263 = vadd.f32 %v198, %v262
  %v264 = vpop.f32.mrb[0].mxu0
  %265 = vmatprep.mubr.bf16.mxu0 0
  %266 = vmatmul.mubr.bf16.gmra.mrb[0].mxu0 %v217
  %v267 = vpop.f32.mrb[0].mxu0
  %v268 = vadd.f32 %v198, %v267
  %v269 = vpop.f32.mrb[0].mxu0
  %v270 = vpop.f32.mrb[0].mxu0
  %v271 = vadd.f32 %v198, %v270
  %v272 = vpop.f32.mrb[0].mxu0
  %273 = vmatprep.mubr.bf16.mxu0 0
  %274 = vmatmul.mubr.bf16.gmra.mrb[0].mxu0 %v220
  %v275 = vpop.f32.mrb[0].mxu0
  %v276 = vadd.f32 %v198, %v275
  %v277 = vpop.f32.mrb[0].mxu0
  %v278 = vpop.f32.mrb[0].mxu0
  %v279 = vadd.f32 %v198, %v278
  %v280 = vpop.f32.mrb[0].mxu0
  %281 = vmatprep.mubr.bf16.mxu0 0
  %282 = vmatmul.mubr.bf16.gmra.mrb[0].mxu0 %v223
  %v283 = vpop.f32.mrb[0].mxu0
  %v284 = vadd.f32 %v198, %v283
  %v285 = vpop.f32.mrb[0].mxu0
  %v286 = vpop.f32.mrb[0].mxu0
  %v287 = vadd.f32 %v198, %v286
  %v288 = vpop.f32.mrb[0].mxu0
  %289 = vdwg.mxu0
  %v290 = vmul.f32 %v260, 0.5
  %v291 = vmul.f32 %v263, 0.5
  %v292 = vmul.f32 %v268, 0.5
  %v293 = vmul.f32 %v271, 0.5
  %v294 = vmul.f32 %v276, 0.5
  %v295 = vmul.f32 %v279, 0.5
  %v296 = vmul.f32 %v284, 0.5
  %v297 = vmul.f32 %v287, 0.5
  %v298 = vmul.f32 %v260, 0.70710677
  %v299 = vmul.f32 %v263, 0.70710677
  %v300 = vmul.f32 %v268, 0.70710677
  %v301 = vmul.f32 %v271, 0.70710677
  %v302 = vmul.f32 %v276, 0.70710677
  %v303 = vmul.f32 %v279, 0.70710677
  %v304 = vmul.f32 %v284, 0.70710677
  %v305 = vmul.f32 %v287, 0.70710677
  %v306 = verf.f32.pop %v298
  %v307 = verf.f32.pop %v299
  %v308 = verf.f32.pop %v300
  %v309 = verf.f32.pop %v301
  %v310 = verf.f32.pop %v302
  %v311 = verf.f32.pop %v303
  %v312 = verf.f32.pop %v304
  %v313 = verf.f32.pop %v305
  %v314 = vadd.f32 %v306, 1.0
  %v315 = vadd.f32 %v307, 1.0
  %v316 = vadd.f32 %v308, 1.0
  %v317 = vadd.f32 %v309, 1.0
  %v318 = vadd.f32 %v310, 1.0
  %v319 = vadd.f32 %v311, 1.0
  %v320 = vadd.f32 %v312, 1.0
  %v321 = vadd.f32 %v313, 1.0
  %v322 = vmul.f32 %v290, %v314
  %v323 = vmul.f32 %v291, %v315
  %v324 = vmul.f32 %v292, %v316
  %v325 = vmul.f32 %v293, %v317
  %v326 = vmul.f32 %v294, %v318
  %v327 = vmul.f32 %v295, %v319
  %v328 = vmul.f32 %v296, %v320
  %v329 = vmul.f32 %v297, %v321
  %v330 = vpack.c.bf16 %v323, %v322
  %v331 = vpack.c.bf16 %v325, %v324
  %v332 = vpack.c.bf16 %v327, %v326
  %v333 = vpack.c.bf16 %v329, %v328
  %v338 = vunpack.c.l.b16 %v330
  %v339 = vunpack.c.h.b16 %v330
  %v340 = vunpack.c.l.b16 %v331
  %v341 = vunpack.c.h.b16 %v331
  %v342 = vunpack.c.l.b16 %v332
  %v343 = vunpack.c.h.b16 %v332
  %v344 = vunpack.c.l.b16 %v333
  %v345 = vunpack.c.h.b16 %v333
  %v346 = vpack.c.b16 %v338, %v338
  %v347 = vpack.c.b16 %v339, %v339
  %v348 = vpack.c.b16 %v340, %v340
  %v349 = vpack.c.b16 %v341, %v341
  %v350 = vpack.c.b16 %v342, %v342
  %v351 = vpack.c.b16 %v343, %v343
  %v352 = vpack.c.b16 %v344, %v344
  %v353 = vpack.c.b16 %v345, %v345
  %362 = vst [vmem:[%s5] sm:$0xf] %v346
  %363 = vst [vmem:[%s5 + $0x4] sm:$0xf] %v347
  %364 = vst [vmem:[%s5 + $0x8] sm:$0xf] %v348
  %365 = vst [vmem:[%s5 + $0xc] sm:$0xf] %v349
  %366 = vst [vmem:[%s5 + $0x10] sm:$0xf] %v350
  %367 = vst [vmem:[%s5 + $0x14] sm:$0xf] %v351
  %368 = vst [vmem:[%s5 + $0x18] sm:$0xf] %v352
  %369 = vst [vmem:[%s5 + $0x1c] sm:$0xf] %v353
  // Predicated region
  $region26: #{vit_forward.16} parent=0 // pred_check
    _
  $region27: #{vit_forward.16} parent=0 // pred_check_branch
    %371 = sbr.rel (0) target = $region29
  $region28: #{vit_forward.16} parent=0 // pred_region
    _
  $region29: #{vit_forward.16} parent=0 // pred_fallthru
    _
  // Predicated region
  $region30: #{vit_forward.16} parent=0 // pred_check
    _
  $region31: #{vit_forward.16} parent=0 // pred_check_branch
    %373 = sbr.rel (0) target = $region33
  $region32: #{vit_forward.16} parent=0 // pred_region
    _
  $region33: #{vit_forward.16} parent=0 // pred_fallthru
    _

// kernel: vit_forward.15
$region0: #{vit_forward.15}
  #allocation0 [shape = 'u32[]', space=smem, size = 0x4, offset = 0x4, fixed_abs, tag = 'smem constant byte address 0x4 - core index']
  #allocation1 [shape = 'u32[144,128]{1,0:T(1,128)}', space=vmem, size = 0x12000, scoped, tag = 'internal scratch']
  #allocation2 [shape = 'f32[64,128]{1,0:T(8,128)}', space=vmem, size = 0x8000, scoped, tag = 'scratch operand']
  %s0 = inlined_call_operand.vmem [shape: bf16[64,128], index: 0, kind: input, shape index: {}]
  %s1 = inlined_call_operand.vmem [shape: bf16[128,128], index: 1, kind: input, shape index: {}]
  %s2 = inlined_call_operand.vmem [shape: f32[1,128], index: 2, kind: input, shape index: {}]
  %s3 = inlined_call_operand.vmem [shape: bf16[64,128], index: 3, kind: input, shape index: {}]
  %s4 = inlined_call_operand.vmem [shape: bf16[64,128], index: 4, kind: output, shape index: {}]
  %s5 = sld [smem:[#allocation0]]
  $region34: #{vit_forward.15} parent=0
    _
  %s7 = ssub.s32 1, %s5
  %s8 = scalar_select 0, %s7, %s5
  // Predicated region
  $region2: #{vit_forward.15} parent=0 // pred_check
    _
  $region3: #{vit_forward.15} parent=0 // pred_check_branch
    %10 = sbr.rel (0) target = $region5
  $region4: #{vit_forward.15} parent=0 // pred_region
    _
  $region5: #{vit_forward.15} parent=0 // pred_fallthru
    _
  // Predicated region
  $region6: #{vit_forward.15} parent=0 // pred_check
    _
  $region7: #{vit_forward.15} parent=0 // pred_check_branch
    %12 = sbr.rel (0) target = $region9
  $region8: #{vit_forward.15} parent=0 // pred_region
    _
  $region9: #{vit_forward.15} parent=0 // pred_fallthru
    _
  // Predicated region
  $region10: #{vit_forward.15} parent=0 // pred_check
    _
  $region11: #{vit_forward.15} parent=0 // pred_check_branch
    %14 = sbr.rel (0) target = $region13
  $region12: #{vit_forward.15} parent=0 // pred_region
    _
  $region13: #{vit_forward.15} parent=0 // pred_fallthru
    _
  // Predicated region
  $region14: #{vit_forward.15} parent=0 // pred_check
    _
  $region15: #{vit_forward.15} parent=0 // pred_check_branch
    %16 = sbr.rel (0) target = $region17
  $region16: #{vit_forward.15} parent=0 // pred_region
    _
  $region17: #{vit_forward.15} parent=0 // pred_fallthru
    _
  %p18 = scmp.eq.s32.totalorder 0, 0
  // Predicated region
  $region18: #{vit_forward.15} parent=0 // pred_check
    %p19 = pneg %p18
  $region19: #{vit_forward.15} parent=0 // pred_check_branch
    %21 = sbr.rel (%p19) target = $region21
  $region20: #{vit_forward.15} parent=0 // pred_region
    %v22 = vld [vmem:[%s2] sm:$0x1]
    %v24 = vlaneseq
    %v25 = vshrl.u32 %v24, 7
    %v26 = vsub.s32 0, %v25
    %v27 = vrot.slane %v22, %v26
    %29 = vst [vmem:[#allocation2] sm:$0xff] %v27
    %30 = vst [vmem:[#allocation2 + $0x8] sm:$0xff] %v27
    %31 = vst [vmem:[#allocation2 + $0x10] sm:$0xff] %v27
    %32 = vst [vmem:[#allocation2 + $0x18] sm:$0xff] %v27
    %33 = vst [vmem:[#allocation2 + $0x20] sm:$0xff] %v27
    %34 = vst [vmem:[#allocation2 + $0x28] sm:$0xff] %v27
    %35 = vst [vmem:[#allocation2 + $0x30] sm:$0xff] %v27
    %36 = vst [vmem:[#allocation2 + $0x38] sm:$0xff] %v27
  $region21: #{vit_forward.15} parent=0 // pred_fallthru
    _
  %v37 = vld [vmem:[#allocation2] sm:$0xff]
  %v38 = vld [vmem:[#allocation2 + $0x8] sm:$0xff]
  %v39 = vld [vmem:[#allocation2 + $0x10] sm:$0xff]
  %v40 = vld [vmem:[#allocation2 + $0x18] sm:$0xff]
  %v41 = vld [vmem:[#allocation2 + $0x20] sm:$0xff]
  %v42 = vld [vmem:[#allocation2 + $0x28] sm:$0xff]
  %v43 = vld [vmem:[#allocation2 + $0x30] sm:$0xff]
  %v44 = vld [vmem:[#allocation2 + $0x38] sm:$0xff]
  %v45 = vld [vmem:[%s0] sm:$0xf]
  %v46 = vld [vmem:[%s0 + $0x4] sm:$0xf]
  %v47 = vld [vmem:[%s0 + $0x8] sm:$0xf]
  %v48 = vld [vmem:[%s0 + $0xc] sm:$0xf]
  %v49 = vld [vmem:[%s0 + $0x10] sm:$0xf]
  %v50 = vld [vmem:[%s0 + $0x14] sm:$0xf]
  %v51 = vld [vmem:[%s0 + $0x18] sm:$0xf]
  %v52 = vld [vmem:[%s0 + $0x1c] sm:$0xf]
  %v53 = vld [vmem:[%s1] sm:$0xf]
  %v54 = vld [vmem:[%s1 + $0x4] sm:$0xf]
  %v55 = vld [vmem:[%s1 + $0x8] sm:$0xf]
  %v56 = vld [vmem:[%s1 + $0xc] sm:$0xf]
  %v57 = vld [vmem:[%s1 + $0x10] sm:$0xf]
  %v58 = vld [vmem:[%s1 + $0x14] sm:$0xf]
  %v59 = vld [vmem:[%s1 + $0x18] sm:$0xf]
  %v60 = vld [vmem:[%s1 + $0x1c] sm:$0xf]
  %v61 = vld [vmem:[%s1 + $0x20] sm:$0xf]
  %v62 = vld [vmem:[%s1 + $0x24] sm:$0xf]
  %v63 = vld [vmem:[%s1 + $0x28] sm:$0xf]
  %v64 = vld [vmem:[%s1 + $0x2c] sm:$0xf]
  %v65 = vld [vmem:[%s1 + $0x30] sm:$0xf]
  %v66 = vld [vmem:[%s1 + $0x34] sm:$0xf]
  %v67 = vld [vmem:[%s1 + $0x38] sm:$0xf]
  %v68 = vld [vmem:[%s1 + $0x3c] sm:$0xf]
  %v77 = vunpack.c.l.b16 %v45
  %v78 = vunpack.c.l.b16 %v46
  %v79 = vunpack.c.l.b16 %v47
  %v80 = vunpack.c.l.b16 %v48
  %v81 = vunpack.c.l.b16 %v49
  %v82 = vunpack.c.l.b16 %v50
  %v83 = vunpack.c.l.b16 %v51
  %v84 = vunpack.c.l.b16 %v52
  %v85 = vpack.c.b16 %v78, %v77
  %v86 = vpack.c.b16 %v80, %v79
  %v87 = vpack.c.b16 %v82, %v81
  %v88 = vpack.c.b16 %v84, %v83
  %v109 = vunpack.c.l.b16 %v53
  %v110 = vunpack.c.l.b16 %v54
  %v111 = vunpack.c.l.b16 %v55
  %v112 = vunpack.c.l.b16 %v56
  %v113 = vunpack.c.l.b16 %v57
  %v114 = vunpack.c.l.b16 %v58
  %v115 = vunpack.c.l.b16 %v59
  %v116 = vunpack.c.l.b16 %v60
  %v117 = vunpack.c.l.b16 %v61
  %v118 = vunpack.c.l.b16 %v62
  %v119 = vunpack.c.l.b16 %v63
  %v120 = vunpack.c.l.b16 %v64
  %v121 = vunpack.c.l.b16 %v65
  %v122 = vunpack.c.l.b16 %v66
  %v123 = vunpack.c.l.b16 %v67
  %v124 = vunpack.c.l.b16 %v68
  %v125 = vpack.c.b16 %v110, %v109
  %v126 = vpack.c.b16 %v112, %v111
  %v127 = vpack.c.b16 %v114, %v113
  %v128 = vpack.c.b16 %v116, %v115
  %v129 = vpack.c.b16 %v118, %v117
  %v130 = vpack.c.b16 %v120, %v119
  %v131 = vpack.c.b16 %v122, %v121
  %v132 = vpack.c.b16 %v124, %v123
  %141 = vmatprep.subr.bf16.mxu0 0
  %142 = vmatpush1.bf16.msra.mxu0 %v125
  %143 = vmatprep.subr.bf16.mxu0 0
  %144 = vmatpush1.bf16.msra.mxu0 %v126
  %145 = vmatprep.subr.bf16.mxu0 0
  %146 = vmatpush1.bf16.msra.mxu0 %v127
  %147 = vmatprep.subr.bf16.mxu0 0
  %148 = vmatpush1.bf16.msra.mxu0 %v128
  %149 = vmatprep.subr.bf16.mxu0 0
  %150 = vmatpush1.bf16.msra.mxu0 %v129
  %151 = vmatprep.subr.bf16.mxu0 0
  %152 = vmatpush1.bf16.msra.mxu0 %v130
  %153 = vmatprep.subr.bf16.mxu0 0
  %154 = vmatpush1.bf16.msra.mxu0 %v131
  %155 = vmatprep.subr.bf16.mxu0 0
  %156 = vmatpush1.bf16.msra.mxu0 %v132
  %157 = vmatprep.subr.bf16.mxu0 0
  %158 = vmatpush1.bf16.msra.mxu0 0
  %159 = vmatprep.subr.bf16.mxu0 0
  %160 = vmatpush1.bf16.msra.mxu0 0
  %161 = vmatprep.subr.bf16.mxu0 0
  %162 = vmatpush1.bf16.msra.mxu0 0
  %163 = vmatprep.subr.bf16.mxu0 0
  %164 = vmatpush1.bf16.msra.mxu0 0
  %165 = vmatprep.subr.bf16.mxu0 0
  %166 = vmatpush1.bf16.msra.mxu0 0
  %167 = vmatprep.subr.bf16.mxu0 0
  %168 = vmatpush1.bf16.msra.mxu0 0
  %169 = vmatprep.subr.bf16.mxu0 0
  %170 = vmatpush1.bf16.msra.mxu0 0
  %171 = vmatprep.subr.bf16.mxu0 0
  %172 = vmatpush1.bf16.msra.mxu0 0
  %173 = vmatprep.mubr.bf16.mxu0 0
  %174 = vmatmul.mubr.bf16.gmra.mrb[0].mxu0 %v85
  %v175 = vpop.f32.mrb[0].mxu0
  %v176 = vadd.f32 0.0, %v175
  %v177 = vpop.f32.mrb[0].mxu0
  %v178 = vpop.f32.mrb[0].mxu0
  %v179 = vadd.f32 0.0, %v178
  %v180 = vpop.f32.mrb[0].mxu0
  %181 = vmatprep.mubr.bf16.mxu0 0
  %182 = vmatmul.mubr.bf16.gmra.mrb[0].mxu0 %v86
  %v183 = vpop.f32.mrb[0].mxu0
  %v184 = vadd.f32 0.0, %v183
  %v185 = vpop.f32.mrb[0].mxu0
  %v186 = vpop.f32.mrb[0].mxu0
  %v187 = vadd.f32 0.0, %v186
  %v188 = vpop.f32.mrb[0].mxu0
  %189 = vmatprep.mubr.bf16.mxu0 0
  %190 = vmatmul.mubr.bf16.gmra.mrb[0].mxu0 %v87
  %v191 = vpop.f32.mrb[0].mxu0
  %v192 = vadd.f32 0.0, %v191
  %v193 = vpop.f32.mrb[0].mxu0
  %v194 = vpop.f32.mrb[0].mxu0
  %v195 = vadd.f32 0.0, %v194
  %v196 = vpop.f32.mrb[0].mxu0
  %197 = vmatprep.mubr.bf16.mxu0 0
  %198 = vmatmul.mubr.bf16.gmra.mrb[0].mxu0 %v88
  %v199 = vpop.f32.mrb[0].mxu0
  %v200 = vadd.f32 0.0, %v199
  %v201 = vpop.f32.mrb[0].mxu0
  %v202 = vpop.f32.mrb[0].mxu0
  %v203 = vadd.f32 0.0, %v202
  %v204 = vpop.f32.mrb[0].mxu0
  %205 = vdwg.mxu0
  %v206 = vadd.f32 %v37, %v176
  %v207 = vadd.f32 %v38, %v179
  %v208 = vadd.f32 %v39, %v184
  %v209 = vadd.f32 %v40, %v187
  %v210 = vadd.f32 %v41, %v192
  %v211 = vadd.f32 %v42, %v195
  %v212 = vadd.f32 %v43, %v200
  %v213 = vadd.f32 %v44, %v203
  %214 = vst [vmem:[#allocation2] sm:$0xff] %v206
  %215 = vst [vmem:[#allocation2 + $0x8] sm:$0xff] %v207
  %216 = vst [vmem:[#allocation2 + $0x10] sm:$0xff] %v208
  %217 = vst [vmem:[#allocation2 + $0x18] sm:$0xff] %v209
  %218 = vst [vmem:[#allocation2 + $0x20] sm:$0xff] %v210
  %219 = vst [vmem:[#allocation2 + $0x28] sm:$0xff] %v211
  %220 = vst [vmem:[#allocation2 + $0x30] sm:$0xff] %v212
  %221 = vst [vmem:[#allocation2 + $0x38] sm:$0xff] %v213
  // Predicated region
  $region22: #{vit_forward.15} parent=0 // pred_check
    %p222 = pneg %p18
  $region23: #{vit_forward.15} parent=0 // pred_check_branch
    %224 = sbr.rel (%p222) target = $region25
  $region24: #{vit_forward.15} parent=0 // pred_region
    %v225 = vld [vmem:[#allocation2] sm:$0xff]
    %v226 = vld [vmem:[#allocation2 + $0x8] sm:$0xff]
    %v227 = vld [vmem:[#allocation2 + $0x10] sm:$0xff]
    %v228 = vld [vmem:[#allocation2 + $0x18] sm:$0xff]
    %v229 = vld [vmem:[#allocation2 + $0x20] sm:$0xff]
    %v230 = vld [vmem:[#allocation2 + $0x28] sm:$0xff]
    %v231 = vld [vmem:[#allocation2 + $0x30] sm:$0xff]
    %v232 = vld [vmem:[#allocation2 + $0x38] sm:$0xff]
    %v233 = vld [vmem:[%s3] sm:$0xf]
    %v234 = vld [vmem:[%s3 + $0x4] sm:$0xf]
    %v235 = vld [vmem:[%s3 + $0x8] sm:$0xf]
    %v236 = vld [vmem:[%s3 + $0xc] sm:$0xf]
    %v237 = vld [vmem:[%s3 + $0x10] sm:$0xf]
    %v238 = vld [vmem:[%s3 + $0x14] sm:$0xf]
    %v239 = vld [vmem:[%s3 + $0x18] sm:$0xf]
    %v240 = vld [vmem:[%s3 + $0x1c] sm:$0xf]
    %v241 = vunpack.c.l.bf16 %v233
    %v242 = vunpack.c.l.bf16 %v234
    %v243 = vunpack.c.l.bf16 %v235
    %v244 = vunpack.c.l.bf16 %v236
    %v245 = vunpack.c.l.bf16 %v237
    %v246 = vunpack.c.l.bf16 %v238
    %v247 = vunpack.c.l.bf16 %v239
    %v248 = vunpack.c.l.bf16 %v240
    %v249 = vadd.f32 %v225, %v241
    %v250 = vadd.f32 %v226, %v242
    %v251 = vadd.f32 %v227, %v243
    %v252 = vadd.f32 %v228, %v244
    %v253 = vadd.f32 %v229, %v245
    %v254 = vadd.f32 %v230, %v246
    %v255 = vadd.f32 %v231, %v247
    %v256 = vadd.f32 %v232, %v248
    %v257 = vpack.c.bf16 %v250, %v249
    %v258 = vpack.c.bf16 %v252, %v251
    %v259 = vpack.c.bf16 %v254, %v253
    %v260 = vpack.c.bf16 %v256, %v255
    %v265 = vunpack.c.l.b16 %v257
    %v266 = vunpack.c.h.b16 %v257
    %v267 = vunpack.c.l.b16 %v258
    %v268 = vunpack.c.h.b16 %v258
    %v269 = vunpack.c.l.b16 %v259
    %v270 = vunpack.c.h.b16 %v259
    %v271 = vunpack.c.l.b16 %v260
    %v272 = vunpack.c.h.b16 %v260
    %v273 = vpack.c.b16 %v265, %v265
    %v274 = vpack.c.b16 %v266, %v266
    %v275 = vpack.c.b16 %v267, %v267
    %v276 = vpack.c.b16 %v268, %v268
    %v277 = vpack.c.b16 %v269, %v269
    %v278 = vpack.c.b16 %v270, %v270
    %v279 = vpack.c.b16 %v271, %v271
    %v280 = vpack.c.b16 %v272, %v272
    %289 = vst [vmem:[%s4] sm:$0xf] %v273
    %290 = vst [vmem:[%s4 + $0x4] sm:$0xf] %v274
    %291 = vst [vmem:[%s4 + $0x8] sm:$0xf] %v275
    %292 = vst [vmem:[%s4 + $0xc] sm:$0xf] %v276
    %293 = vst [vmem:[%s4 + $0x10] sm:$0xf] %v277
    %294 = vst [vmem:[%s4 + $0x14] sm:$0xf] %v278
    %295 = vst [vmem:[%s4 + $0x18] sm:$0xf] %v279
    %296 = vst [vmem:[%s4 + $0x1c] sm:$0xf] %v280
  $region25: #{vit_forward.15} parent=0 // pred_fallthru
    _
  // Predicated region
  $region26: #{vit_forward.15} parent=0 // pred_check
    _
  $region27: #{vit_forward.15} parent=0 // pred_check_branch
    %298 = sbr.rel (0) target = $region29
  $region28: #{vit_forward.15} parent=0 // pred_region
    _
  $region29: #{vit_forward.15} parent=0 // pred_fallthru
    _
  // Predicated region
  $region30: #{vit_forward.15} parent=0 // pred_check
    _
  $region31: #{vit_forward.15} parent=0 // pred_check_branch
    %300 = sbr.rel (0) target = $region33
  $region32: #{vit_forward.15} parent=0 // pred_region
    _
  $region33: #{vit_forward.15} parent=0 // pred_fallthru
    _

// kernel: vit_forward.23
$region0: #{vit_forward.23}
  #allocation0 [shape = 'u32[]', space=smem, size = 0x4, offset = 0x4, fixed_abs, tag = 'smem constant byte address 0x4 - core index']
  #allocation1 [shape = 'u32[144,128]{1,0:T(1,128)}', space=vmem, size = 0x12000, scoped, tag = 'internal scratch']
  #allocation2 [shape = 'bf16[16,32]{1,0:T(16,128)(2,1)}', space=vmem, size = 0x1000, scoped, tag = 'scratch operand']
  %s0 = inlined_call_operand.vmem [shape: bf16[16,32], index: 0, kind: input, shape index: {}]
  %s1 = inlined_call_operand.vmem [shape: f32[1,32], index: 1, kind: input, shape index: {}]
  %s2 = inlined_call_operand.vmem [shape: f32[1,32], index: 2, kind: input, shape index: {}]
  %s3 = inlined_call_operand.vmem [shape: bf16[32,128], index: 3, kind: input, shape index: {}]
  %s4 = inlined_call_operand.vmem [shape: f32[1,128], index: 4, kind: input, shape index: {}]
  %s5 = inlined_call_operand.vmem [shape: f32[16,128], index: 5, kind: output, shape index: {}]
  %s6 = sld [smem:[#allocation0]]
  $region34: #{vit_forward.23} parent=0
    _
  %s8 = ssub.s32 1, %s6
  %s9 = scalar_select 0, %s8, %s6
  // Predicated region
  $region2: #{vit_forward.23} parent=0 // pred_check
    _
  $region3: #{vit_forward.23} parent=0 // pred_check_branch
    %11 = sbr.rel (0) target = $region5
  $region4: #{vit_forward.23} parent=0 // pred_region
    _
  $region5: #{vit_forward.23} parent=0 // pred_fallthru
    _
  // Predicated region
  $region6: #{vit_forward.23} parent=0 // pred_check
    _
  $region7: #{vit_forward.23} parent=0 // pred_check_branch
    %13 = sbr.rel (0) target = $region9
  $region8: #{vit_forward.23} parent=0 // pred_region
    _
  $region9: #{vit_forward.23} parent=0 // pred_fallthru
    _
  // Predicated region
  $region10: #{vit_forward.23} parent=0 // pred_check
    _
  $region11: #{vit_forward.23} parent=0 // pred_check_branch
    %15 = sbr.rel (0) target = $region13
  $region12: #{vit_forward.23} parent=0 // pred_region
    _
  $region13: #{vit_forward.23} parent=0 // pred_fallthru
    _
  // Predicated region
  $region14: #{vit_forward.23} parent=0 // pred_check
    _
  $region15: #{vit_forward.23} parent=0 // pred_check_branch
    %17 = sbr.rel (0) target = $region17
  $region16: #{vit_forward.23} parent=0 // pred_region
    _
  $region17: #{vit_forward.23} parent=0 // pred_fallthru
    _
  // Predicated region
  $region18: #{vit_forward.23} parent=0 // pred_check
    _
  $region19: #{vit_forward.23} parent=0 // pred_check_branch
    %19 = sbr.rel (0) target = $region21
  $region20: #{vit_forward.23} parent=0 // pred_region
    _
  $region21: #{vit_forward.23} parent=0 // pred_fallthru
    _
  %p21 = scmp.eq.s32.totalorder 0, 0
  // Predicated region
  $region22: #{vit_forward.23} parent=0 // pred_check
    %p22 = pneg %p21
  $region23: #{vit_forward.23} parent=0 // pred_check_branch
    %24 = sbr.rel (%p22) target = $region25
  $region24: #{vit_forward.23} parent=0 // pred_region
    %v25 = vld [vmem:[%s0] sm:$0xf]
    %v26 = vld [vmem:[%s0 + $0x4] sm:$0xf]
    %v27 = vunpack.c.l.bf16 %v25
    %v28 = vunpack.c.l.bf16 %v26
    %vm29 = vcmask 261120
    %v30 = vsel %vm29, %v27, 0.0
    %31 = vadd.xlane.f32.xlu0 %v30
    %v32 = vpop.xlane.xlu0 %31
    %v33 = vsel %vm29, %v28, 0.0
    %34 = vadd.xlane.f32.xlu0 %v33
    %v35 = vpop.xlane.xlu0 %34
    %v36 = vrcp.pop 32.0
    %v37 = vmul.f32 %v32, %v36
    %v38 = vmul.f32 %v35, %v36
    %v39 = vsub.f32 %v27, %v37
    %v40 = vsub.f32 %v28, %v38
    %v41 = vmul.f32 %v39, %v39
    %v42 = vmul.f32 %v40, %v40
    %v43 = vsel %vm29, %v41, 0.0
    %44 = vadd.xlane.f32.xlu0 %v43
    %v45 = vpop.xlane.xlu0 %44
    %v46 = vsel %vm29, %v42, 0.0
    %47 = vadd.xlane.f32.xlu0 %v46
    %v48 = vpop.xlane.xlu0 %47
    %v49 = vmul.f32 %v45, %v36
    %v50 = vmul.f32 %v48, %v36
    %v51 = vadd.f32 %v49, 1e-05
    %v52 = vadd.f32 %v50, 1e-05
    %v53 = vrsqrt.pop %v51
    %v54 = vrsqrt.pop %v52
    %v55 = vmul.f32 %v39, %v53
    %v56 = vmul.f32 %v40, %v54
    %v57 = vld [vmem:[%s1] sm:$0x1]
    %v59 = vlaneseq
    %v60 = vshrl.u32 %v59, 7
    %v61 = vsub.s32 0, %v60
    %v62 = vrot.slane %v57, %v61
    %v64 = vmul.f32 %v55, %v62
    %v65 = vmul.f32 %v56, %v62
    %v66 = vld [vmem:[%s2] sm:$0x1]
    %v68 = vlaneseq
    %v69 = vshrl.u32 %v68, 7
    %v70 = vsub.s32 0, %v69
    %v71 = vrot.slane %v66, %v70
    %v73 = vadd.f32 %v64, %v71
    %v74 = vadd.f32 %v65, %v71
    %v75 = vpack.c.bf16 %v74, %v73
    %76 = vst.msk [vmem:[#allocation2] sm:$0xff] %vm29, %v75
  $region25: #{vit_forward.23} parent=0 // pred_fallthru
    _
  %v77 = vld [vmem:[#allocation2] sm:$0xff]
  %v78 = vld [vmem:[%s3] sm:$0xf]
  %v79 = vld [vmem:[%s3 + $0x4] sm:$0xf]
  %v80 = vld [vmem:[%s3 + $0x8] sm:$0xf]
  %v81 = vld [vmem:[%s3 + $0xc] sm:$0xf]
  %v82 = vld [vmem:[%s4] sm:$0x1]
  %v84 = vlaneseq
  %v85 = vshrl.u32 %v84, 7
  %v86 = vsub.s32 0, %v85
  %v87 = vrot.slane %v82, %v86
  %v93 = vunpack.c.l.b16 %v78
  %v94 = vunpack.c.l.b16 %v79
  %v95 = vunpack.c.l.b16 %v80
  %v96 = vunpack.c.l.b16 %v81
  %v97 = vpack.c.b16 %v94, %v93
  %v98 = vpack.c.b16 %v96, %v95
  %vm101 = vcmask 261120
  %v103 = vsel %vm101, %v77, 0
  %105 = vmatprep.subr.bf16.mxu0 0
  %106 = vmatpush1.bf16.msra.mxu0 %v97
  %107 = vmatprep.subr.bf16.mxu0 0
  %108 = vmatpush1.bf16.msra.mxu0 %v98
  %109 = vmatprep.subr.bf16.mxu0 0
  %110 = vmatpush1.bf16.msra.mxu0 0
  %111 = vmatprep.subr.bf16.mxu0 0
  %112 = vmatpush1.bf16.msra.mxu0 0
  %113 = vmatprep.subr.bf16.mxu0 0
  %114 = vmatpush1.bf16.msra.mxu0 0
  %115 = vmatprep.subr.bf16.mxu0 0
  %116 = vmatpush1.bf16.msra.mxu0 0
  %117 = vmatprep.subr.bf16.mxu0 0
  %118 = vmatpush1.bf16.msra.mxu0 0
  %119 = vmatprep.subr.bf16.mxu0 0
  %120 = vmatpush1.bf16.msra.mxu0 0
  %121 = vmatprep.subr.bf16.mxu0 0
  %122 = vmatpush1.bf16.msra.mxu0 0
  %123 = vmatprep.subr.bf16.mxu0 0
  %124 = vmatpush1.bf16.msra.mxu0 0
  %125 = vmatprep.subr.bf16.mxu0 0
  %126 = vmatpush1.bf16.msra.mxu0 0
  %127 = vmatprep.subr.bf16.mxu0 0
  %128 = vmatpush1.bf16.msra.mxu0 0
  %129 = vmatprep.subr.bf16.mxu0 0
  %130 = vmatpush1.bf16.msra.mxu0 0
  %131 = vmatprep.subr.bf16.mxu0 0
  %132 = vmatpush1.bf16.msra.mxu0 0
  %133 = vmatprep.subr.bf16.mxu0 0
  %134 = vmatpush1.bf16.msra.mxu0 0
  %135 = vmatprep.subr.bf16.mxu0 0
  %136 = vmatpush1.bf16.msra.mxu0 0
  %137 = vmatprep.mubr.bf16.mxu0 0
  %138 = vmatmul.mubr.bf16.gmra.mrb[0].mxu0 %v103
  %v139 = vpop.f32.mrb[0].mxu0
  %v140 = vadd.f32 %v87, %v139
  %v141 = vpop.f32.mrb[0].mxu0
  %v142 = vpop.f32.mrb[0].mxu0
  %v143 = vadd.f32 %v87, %v142
  %v144 = vpop.f32.mrb[0].mxu0
  %145 = vdwg.mxu0
  %146 = vst [vmem:[%s5] sm:$0xff] %v140
  %147 = vst [vmem:[%s5 + $0x8] sm:$0xff] %v143
  // Predicated region
  $region26: #{vit_forward.23} parent=0 // pred_check
    _
  $region27: #{vit_forward.23} parent=0 // pred_check_branch
    %149 = sbr.rel (0) target = $region29
  $region28: #{vit_forward.23} parent=0 // pred_region
    _
  $region29: #{vit_forward.23} parent=0 // pred_fallthru
    _
  // Predicated region
  $region30: #{vit_forward.23} parent=0 // pred_check
    _
  $region31: #{vit_forward.23} parent=0 // pred_check_branch
    %151 = sbr.rel (0) target = $region33
  $region32: #{vit_forward.23} parent=0 // pred_region
    _
  $region33: #{vit_forward.23} parent=0 // pred_fallthru
    _

</llo_original>
